<compile_context>
chip_gen: v6e
topology: v6e:2x2x1
jax: 0.10.0
libtpu: 0.0.40
codegen_flags: <defaults>
</compile_context>

<pallas_src>
import functools

import jax
import jax.numpy as jnp
import numpy as np
from jax import lax
from jax.experimental import pallas as pl
from jax.experimental.pallas import tpu as pltpu

BN_EPS = 1e-5  # nn.BatchNorm2d default eps


def _cnn_kernel(n_b, h2, w2, c2,
                x5_ref, a2_ref, b1r_ref, bm_ref, b2r_ref, gam_ref, bet_ref,
                prow_ref, wfc1_ref, bfc1_ref, wfc2_ref, bfc2_ref, out_ref):
    k2 = w2 * c2                       # lanes of the conv2 output rows
    m_samples = n_b * h2 * w2          # BatchNorm sample count per channel

    # ---- conv1 (+bias, ReLU): ONE MXU matmul, emitted directly in the
    # conv2-ready stacked row layout (N*H2, 3*W1*C1).  No in-kernel slices.
    h1 = jnp.dot(x5_ref[...], a2_ref[...], preferred_element_type=jnp.float32)
    h1 = jnp.maximum(h1 + b1r_ref[...], 0.0).astype(jnp.bfloat16)

    # ---- conv2 (+bias): ONE MXU matmul -> lane-dense (N*H2, W2*C2) rows.
    h2r = jnp.dot(h1, bm_ref[...], preferred_element_type=jnp.float32) + b2r_ref[...]

    # ---- BatchNorm2d (training-mode batch stats), fully lane-dense.
    # Per-channel sums: sublane reduce, then a log2(W2)-step circular roll
    # tree over lanes (XLU).  The circular rolls leave every lane l holding
    # the total for channel (l % C2), i.e. the tiled broadcast is free.
    s1 = jnp.sum(h2r, axis=0, keepdims=True)
    s2 = jnp.sum(h2r * h2r, axis=0, keepdims=True)
    sh = k2 // 2
    while sh >= c2:
        s1 = s1 + pltpu.roll(s1, shift=sh, axis=1)
        s2 = s2 + pltpu.roll(s2, shift=sh, axis=1)
        sh //= 2
    inv_m = 1.0 / m_samples
    mean = s1 * inv_m
    var = s2 * inv_m - mean * mean          # single-pass; fine in f32 here
    scale = gam_ref[...] * lax.rsqrt(var + BN_EPS)
    shift = bet_ref[...] - mean * scale
    h2n = jnp.maximum(h2r * scale + shift, 0.0).astype(jnp.bfloat16)

    # ---- adaptive_avg_pool2d(4,4): row (i) pooling via a tiny constant
    # matmul; column (j) pooling + torch flatten order are folded into the
    # fc1 weight, so fc1 runs with K = 4*W2*C2 instead of H2*W2*C2.
    prow = jnp.dot(prow_ref[...], h2n, preferred_element_type=jnp.float32)  # (N*4, K2)
    feat = prow.astype(jnp.bfloat16).reshape(n_b, 4 * k2)                   # (N, 2048)

    # ---- fc1 -> relu -> fc2
    f1 = jnp.dot(feat, wfc1_ref[...], preferred_element_type=jnp.float32)
    f1 = jnp.maximum(f1 + bfc1_ref[...], 0.0).astype(jnp.bfloat16)
    out = jnp.dot(f1, wfc2_ref[...], preferred_element_type=jnp.float32)
    out_ref[...] = (out + bfc2_ref[...]).astype(out_ref.dtype)


def prepare_params(params, image_hw):
    """One-time weight preprocessing (call once, cache the result).

    Builds the lowered/stacked conv weights, tiled bias / gamma / beta rows,
    and the pool-folded fc1 weight so the per-call path is only O(|x|).
    """
    (w1, b1, w2, b2, gamma, beta, wfc1, bfc1, wfc2, bfc2) = params
    H, W = image_hw
    C1 = w1.shape[0]
    C2 = w2.shape[0]
    HID, NC = wfc1.shape[0], wfc2.shape[0]
    H1, W1 = H - 2, W - 2
    H2, W2 = H1 - 2, W1 - 2
    K1, K2 = W1 * C1, W2 * C2
    assert H2 % 4 == 0 and W2 % 4 == 0
    PW = W2 // 4

    w1n = np.asarray(w1, np.float32)           # (C1, 1, 3, 3)
    w2n = np.asarray(w2, np.float32)           # (C2, C1, 3, 3)

    # conv1 weight, lowered + stacked over di so ONE matmul with the 5-row
    # shifted LHS yields conv1 output in conv2's stacked layout:
    #   A2[e*W + w, di*K1 + j*C1 + c] = w1[c, 0, e-di, w-j]
    A2 = np.zeros((5 * W, 3 * K1), np.float32)
    for di in range(3):
        for d1 in range(3):
            e = di + d1
            for j in range(W1):
                for dj in range(3):
                    A2[e * W + j + dj,
                       di * K1 + j * C1: di * K1 + (j + 1) * C1] = w1n[:, 0, d1, dj]
    b1r = np.tile(np.asarray(b1, np.float32), 3 * W1).reshape(1, 3 * K1)

    # conv2 weight, lowered + stacked over di:
    #   Bm[di*K1 + j1*C1 + ci, j*C2 + co] = w2[co, ci, di, j1-j]
    Bm = np.zeros((3 * K1, K2), np.float32)
    for di in range(3):
        for j in range(W2):
            for dj in range(3):
                j1 = j + dj
                Bm[di * K1 + j1 * C1: di * K1 + (j1 + 1) * C1,
                   j * C2: (j + 1) * C2] = w2n[:, :, di, dj].T
    b2r = np.tile(np.asarray(b2, np.float32), W2).reshape(1, K2)
    gam_r = np.tile(np.asarray(gamma, np.float32), W2).reshape(1, K2)
    bet_r = np.tile(np.asarray(beta, np.float32), W2).reshape(1, K2)

    # fc1 with column (j) pooling and torch flatten order folded in:
    #   wfc1_eff[oi*K2 + j*C2 + co, h] = wfc1[h, co*16 + oi*4 + j//PW] / PW
    wf = np.asarray(wfc1, np.float32).reshape(HID, C2, 4, 4)   # [h, co, oi, oj]
    wf = np.transpose(wf, (2, 3, 1, 0))                        # [oi, oj, co, h]
    wf = np.repeat(wf, PW, axis=1) / float(PW)                 # [oi, j, co, h]
    wfc1_eff = wf.reshape(4 * K2, HID)

    return (jnp.asarray(A2, jnp.bfloat16),
            jnp.asarray(b1r, jnp.float32),
            jnp.asarray(Bm, jnp.bfloat16),
            jnp.asarray(b2r, jnp.float32),
            jnp.asarray(gam_r, jnp.float32),
            jnp.asarray(bet_r, jnp.float32),
            jnp.asarray(wfc1_eff, jnp.bfloat16),
            jnp.asarray(np.asarray(bfc1, np.float32).reshape(1, HID), jnp.float32),
            jnp.asarray(np.asarray(wfc2, np.float32).T, jnp.bfloat16),
            jnp.asarray(np.asarray(bfc2, np.float32).reshape(1, NC), jnp.float32))


@jax.jit
def model_forward(x_nchw, prepped):
    """Jitted forward: tiny x-dependent prep + one Pallas call."""
    (A2, b1r, Bm, b2r, gam_r, bet_r, wfc1_eff, bfc1_r, wfc2_r, bfc2_r) = prepped
    N, _, H, W = x_nchw.shape
    H2, W2 = H - 4, W - 4
    K2 = b2r.shape[1]
    C2 = K2 // W2
    HID = wfc1_eff.shape[1]
    NC = wfc2_r.shape[1]
    PH = H2 // 4

    # conv1 LHS: 5 shifted copies of the image rows (x is only a few KB).
    x = x_nchw[:, 0, :, :]
    xs = jnp.concatenate([x[:, e:e + H2, :] for e in range(5)], axis=-1)
    lhs_x5 = xs.reshape(N * H2, 5 * W).astype(jnp.bfloat16)

    # Row-pooling matrix for the 4x4 adaptive pool (compile-time constant).
    prow_np = np.zeros((N * 4, N * H2), np.float32)
    for n in range(N):
        for oi in range(4):
            prow_np[n * 4 + oi, n * H2 + oi * PH: n * H2 + (oi + 1) * PH] = 1.0 / PH
    prow_m = jnp.asarray(prow_np, jnp.bfloat16)

    args = (lhs_x5, A2, b1r, Bm, b2r, gam_r, bet_r, prow_m,
            wfc1_eff, bfc1_r, wfc2_r, bfc2_r)

    flops = 2 * (lhs_x5.shape[0] * lhs_x5.shape[1] * A2.shape[1]
                 + (N * H2) * Bm.shape[0] * Bm.shape[1]
                 + prow_m.shape[0] * prow_m.shape[1] * K2
                 + N * wfc1_eff.shape[0] * HID
                 + N * HID * NC)
    bytes_acc = sum(int(np.prod(a.shape)) * a.dtype.itemsize for a in args) + N * NC * 4

    return pl.pallas_call(
        functools.partial(_cnn_kernel, N, H2, W2, C2),
        out_shape=jax.ShapeDtypeStruct((N, NC), jnp.float32),
        in_specs=[pl.BlockSpec(memory_space=pltpu.MemorySpace.VMEM)] * len(args),
        out_specs=pl.BlockSpec(memory_space=pltpu.MemorySpace.VMEM),
        cost_estimate=pl.CostEstimate(flops=int(flops), transcendentals=int(K2),
                                      bytes_accessed=int(bytes_acc)),
    )(*args)


def reference_forward(x_nchw, params):
    """Pure-JAX reference with PyTorch NCHW semantics (train-mode BN)."""
    (w1, b1, w2, b2, gamma, beta, wfc1, bfc1, wfc2, bfc2) = params
    dn = ('NCHW', 'OIHW', 'NCHW')
    h = lax.conv_general_dilated(x_nchw, w1, (1, 1), 'VALID', dimension_numbers=dn)
    h = jnp.maximum(h + b1.reshape(1, -1, 1, 1), 0.0)
    h = lax.conv_general_dilated(h, w2, (1, 1), 'VALID', dimension_numbers=dn)
    h = h + b2.reshape(1, -1, 1, 1)
    mean = h.mean(axis=(0, 2, 3), keepdims=True)
    var = ((h - mean) ** 2).mean(axis=(0, 2, 3), keepdims=True)
    h = (h - mean) / jnp.sqrt(var + BN_EPS) * gamma.reshape(1, -1, 1, 1) \
        + beta.reshape(1, -1, 1, 1)
    h = jnp.maximum(h, 0.0)
    N, C, H, W = h.shape
    h = h.reshape(N, C, 4, H // 4, 4, W // 4).mean(axis=(3, 5))   # adaptive pool
    feat = h.reshape(N, C * 16)                                   # torch flatten
    h = jnp.maximum(feat @ wfc1.T + bfc1, 0.0)
    return h @ wfc2.T + bfc2


if __name__ == "__main__":
    key = jax.random.PRNGKey(0)
    ks = jax.random.split(key, 12)

    N, NUM_CLASSES = 2, 10
    H = W = 20   # small "MNIST-like" image; conv->conv gives 16x16 (4x4-divisible)
    x = jax.random.normal(ks[0], (N, 1, H, W), jnp.float32)

    params = (
        0.1 * jax.random.normal(ks[1], (16, 1, 3, 3), jnp.float32),    # conv1 w (OIHW)
        0.1 * jax.random.normal(ks[2], (16,), jnp.float32),            # conv1 b
        0.1 * jax.random.normal(ks[3], (32, 16, 3, 3), jnp.float32),   # conv2 w (OIHW)
        0.1 * jax.random.normal(ks[4], (32,), jnp.float32),            # conv2 b
        1.0 + 0.1 * jax.random.normal(ks[5], (32,), jnp.float32),      # bn gamma
        0.1 * jax.random.normal(ks[6], (32,), jnp.float32),            # bn beta
        0.1 * jax.random.normal(ks[7], (32, 32 * 16), jnp.float32),    # fc1 w (out,in)
        0.1 * jax.random.normal(ks[8], (32,), jnp.float32),            # fc1 b
        0.1 * jax.random.normal(ks[9], (NUM_CLASSES, 32), jnp.float32),  # fc2 w
        0.1 * jax.random.normal(ks[10], (NUM_CLASSES,), jnp.float32),    # fc2 b
    )

    prepped = prepare_params(params, (H, W))     # one-time weight prep (hoisted)
    out = jax.block_until_ready(model_forward(x, prepped))
    ref = jax.block_until_ready(reference_forward(x, params))

    assert out.shape == (N, NUM_CLASSES), out.shape
    out_np, ref_np = np.asarray(out), np.asarray(ref)
    if not np.allclose(out_np, ref_np, rtol=1e-2, atol=1e-2):
        raise AssertionError(
            f"mismatch: max abs err = {np.max(np.abs(out_np - ref_np))}")
    print("KERNEL_OK")
</pallas_src>

<mosaic_0001>
module attributes {stable_mosaic.version = 11 : i64} {
  func.func @_cnn_kernel(%arg0: memref<32x100xbf16, #tpu.memory_space<vmem>>, %arg1: memref<100x864xbf16, #tpu.memory_space<vmem>>, %arg2: memref<1x864xf32, #tpu.memory_space<vmem>>, %arg3: memref<864x512xbf16, #tpu.memory_space<vmem>>, %arg4: memref<1x512xf32, #tpu.memory_space<vmem>>, %arg5: memref<1x512xf32, #tpu.memory_space<vmem>>, %arg6: memref<1x512xf32, #tpu.memory_space<vmem>>, %arg7: memref<8x32xbf16, #tpu.memory_space<vmem>>, %arg8: memref<2048x32xbf16, #tpu.memory_space<vmem>>, %arg9: memref<1x32xf32, #tpu.memory_space<vmem>>, %arg10: memref<32x10xbf16, #tpu.memory_space<vmem>>, %arg11: memref<1x10xf32, #tpu.memory_space<vmem>>, %arg12: memref<2x10xf32, #tpu.memory_space<vmem>>) attributes {dimension_semantics = [], scalar_prefetch = 0 : i64, scratch_operands = 0 : i64, tpu.core_type = #tpu.core_type<tc>} {
    %c0 = arith.constant 0 : index
    %c0_0 = arith.constant 0 : index
    %0 = vector.load %arg0[%c0, %c0_0] : memref<32x100xbf16, #tpu.memory_space<vmem>>, vector<32x100xbf16>
    %c0_1 = arith.constant 0 : index
    %c0_2 = arith.constant 0 : index
    %1 = vector.load %arg1[%c0_1, %c0_2] : memref<100x864xbf16, #tpu.memory_space<vmem>>, vector<100x864xbf16>
    %cst = arith.constant dense<0.000000e+00> : vector<32x864xf32>
    %2 = tpu.matmul %0, %1, %cst {dimension_numbers = #tpu.dot_dimension_numbers<[1], [0], [0], [1], [0, 0, 1, 1], [], []>} : vector<32x100xbf16>, vector<100x864xbf16>, vector<32x864xf32> -> vector<32x864xf32>
    %c0_3 = arith.constant 0 : index
    %c0_4 = arith.constant 0 : index
    %3 = vector.load %arg2[%c0_3, %c0_4] : memref<1x864xf32, #tpu.memory_space<vmem>>, vector<1x864xf32>
    %4 = vector.broadcast %3 : vector<1x864xf32> to vector<32x864xf32>
    %5 = arith.addf %2, %4 : vector<32x864xf32>
    %cst_5 = arith.constant 0.000000e+00 : f32
    %6 = vector.broadcast %cst_5 : f32 to vector<32x864xf32>
    %7 = arith.maximumf %5, %6 : vector<32x864xf32>
    %8 = arith.truncf %7 : vector<32x864xf32> to vector<32x864xbf16>
    %c0_6 = arith.constant 0 : index
    %c0_7 = arith.constant 0 : index
    %9 = vector.load %arg3[%c0_6, %c0_7] : memref<864x512xbf16, #tpu.memory_space<vmem>>, vector<864x512xbf16>
    %cst_8 = arith.constant dense<0.000000e+00> : vector<32x512xf32>
    %10 = tpu.matmul %8, %9, %cst_8 {dimension_numbers = #tpu.dot_dimension_numbers<[1], [0], [0], [1], [0, 0, 1, 1], [], []>} : vector<32x864xbf16>, vector<864x512xbf16>, vector<32x512xf32> -> vector<32x512xf32>
    %c0_9 = arith.constant 0 : index
    %c0_10 = arith.constant 0 : index
    %11 = vector.load %arg4[%c0_9, %c0_10] : memref<1x512xf32, #tpu.memory_space<vmem>>, vector<1x512xf32>
    %12 = vector.broadcast %11 : vector<1x512xf32> to vector<32x512xf32>
    %13 = arith.addf %10, %12 : vector<32x512xf32>
    %cst_11 = arith.constant dense<0.000000e+00> : vector<512xf32>
    %14 = vector.multi_reduction <add>, %13, %cst_11 [0] : vector<32x512xf32> to vector<512xf32>
    %15 = vector.shape_cast %14 : vector<512xf32> to vector<1x512xf32>
    %16 = arith.mulf %13, %13 : vector<32x512xf32>
    %cst_12 = arith.constant dense<0.000000e+00> : vector<512xf32>
    %17 = vector.multi_reduction <add>, %16, %cst_12 [0] : vector<32x512xf32> to vector<512xf32>
    %18 = vector.shape_cast %17 : vector<512xf32> to vector<1x512xf32>
    %c256_i32 = arith.constant 256 : i32
    %19 = tpu.dynamic_rotate %15 by %c256_i32 dim 1 : vector<1x512xf32>, i32 -> vector<1x512xf32>
    %20 = arith.addf %15, %19 : vector<1x512xf32>
    %c256_i32_13 = arith.constant 256 : i32
    %21 = tpu.dynamic_rotate %18 by %c256_i32_13 dim 1 : vector<1x512xf32>, i32 -> vector<1x512xf32>
    %22 = arith.addf %18, %21 : vector<1x512xf32>
    %c128_i32 = arith.constant 128 : i32
    %23 = tpu.dynamic_rotate %20 by %c128_i32 dim 1 : vector<1x512xf32>, i32 -> vector<1x512xf32>
    %24 = arith.addf %20, %23 : vector<1x512xf32>
    %c128_i32_14 = arith.constant 128 : i32
    %25 = tpu.dynamic_rotate %22 by %c128_i32_14 dim 1 : vector<1x512xf32>, i32 -> vector<1x512xf32>
    %26 = arith.addf %22, %25 : vector<1x512xf32>
    %c64_i32 = arith.constant 64 : i32
    %27 = tpu.dynamic_rotate %24 by %c64_i32 dim 1 : vector<1x512xf32>, i32 -> vector<1x512xf32>
    %28 = arith.addf %24, %27 : vector<1x512xf32>
    %c64_i32_15 = arith.constant 64 : i32
    %29 = tpu.dynamic_rotate %26 by %c64_i32_15 dim 1 : vector<1x512xf32>, i32 -> vector<1x512xf32>
    %30 = arith.addf %26, %29 : vector<1x512xf32>
    %c32_i32 = arith.constant 32 : i32
    %31 = tpu.dynamic_rotate %28 by %c32_i32 dim 1 : vector<1x512xf32>, i32 -> vector<1x512xf32>
    %32 = arith.addf %28, %31 : vector<1x512xf32>
    %c32_i32_16 = arith.constant 32 : i32
    %33 = tpu.dynamic_rotate %30 by %c32_i32_16 dim 1 : vector<1x512xf32>, i32 -> vector<1x512xf32>
    %34 = arith.addf %30, %33 : vector<1x512xf32>
    %cst_17 = arith.constant 0.001953125 : f32
    %35 = vector.broadcast %cst_17 : f32 to vector<1x512xf32>
    %36 = arith.mulf %32, %35 : vector<1x512xf32>
    %cst_18 = arith.constant 0.001953125 : f32
    %37 = vector.broadcast %cst_18 : f32 to vector<1x512xf32>
    %38 = arith.mulf %34, %37 : vector<1x512xf32>
    %39 = arith.mulf %36, %36 : vector<1x512xf32>
    %40 = arith.subf %38, %39 : vector<1x512xf32>
    %c0_19 = arith.constant 0 : index
    %c0_20 = arith.constant 0 : index
    %41 = vector.load %arg5[%c0_19, %c0_20] : memref<1x512xf32, #tpu.memory_space<vmem>>, vector<1x512xf32>
    %cst_21 = arith.constant 9.99999974E-6 : f32
    %42 = vector.broadcast %cst_21 : f32 to vector<1x512xf32>
    %43 = arith.addf %40, %42 : vector<1x512xf32>
    %44 = math.rsqrt %43 : vector<1x512xf32>
    %45 = arith.mulf %41, %44 : vector<1x512xf32>
    %c0_22 = arith.constant 0 : index
    %c0_23 = arith.constant 0 : index
    %46 = vector.load %arg6[%c0_22, %c0_23] : memref<1x512xf32, #tpu.memory_space<vmem>>, vector<1x512xf32>
    %47 = arith.mulf %36, %45 : vector<1x512xf32>
    %48 = arith.subf %46, %47 : vector<1x512xf32>
    %49 = vector.broadcast %45 : vector<1x512xf32> to vector<32x512xf32>
    %50 = arith.mulf %13, %49 : vector<32x512xf32>
    %51 = vector.broadcast %48 : vector<1x512xf32> to vector<32x512xf32>
    %52 = arith.addf %50, %51 : vector<32x512xf32>
    %cst_24 = arith.constant 0.000000e+00 : f32
    %53 = vector.broadcast %cst_24 : f32 to vector<32x512xf32>
    %54 = arith.maximumf %52, %53 : vector<32x512xf32>
    %55 = arith.truncf %54 : vector<32x512xf32> to vector<32x512xbf16>
    %c0_25 = arith.constant 0 : index
    %c0_26 = arith.constant 0 : index
    %56 = vector.load %arg7[%c0_25, %c0_26] : memref<8x32xbf16, #tpu.memory_space<vmem>>, vector<8x32xbf16>
    %cst_27 = arith.constant dense<0.000000e+00> : vector<8x512xf32>
    %57 = tpu.matmul %56, %55, %cst_27 {dimension_numbers = #tpu.dot_dimension_numbers<[1], [0], [0], [1], [0, 0, 1, 1], [], []>} : vector<8x32xbf16>, vector<32x512xbf16>, vector<8x512xf32> -> vector<8x512xf32>
    %58 = arith.truncf %57 : vector<8x512xf32> to vector<8x512xbf16>
    %59 = vector.shape_cast %58 : vector<8x512xbf16> to vector<2x2048xbf16>
    %c0_28 = arith.constant 0 : index
    %c0_29 = arith.constant 0 : index
    %60 = vector.load %arg8[%c0_28, %c0_29] : memref<2048x32xbf16, #tpu.memory_space<vmem>>, vector<2048x32xbf16>
    %cst_30 = arith.constant dense<0.000000e+00> : vector<2x32xf32>
    %61 = tpu.matmul %59, %60, %cst_30 {dimension_numbers = #tpu.dot_dimension_numbers<[1], [0], [0], [1], [0, 0, 1, 1], [], []>} : vector<2x2048xbf16>, vector<2048x32xbf16>, vector<2x32xf32> -> vector<2x32xf32>
    %c0_31 = arith.constant 0 : index
    %c0_32 = arith.constant 0 : index
    %62 = vector.load %arg9[%c0_31, %c0_32] : memref<1x32xf32, #tpu.memory_space<vmem>>, vector<1x32xf32>
    %63 = vector.broadcast %62 : vector<1x32xf32> to vector<2x32xf32>
    %64 = arith.addf %61, %63 : vector<2x32xf32>
    %cst_33 = arith.constant 0.000000e+00 : f32
    %65 = vector.broadcast %cst_33 : f32 to vector<2x32xf32>
    %66 = arith.maximumf %64, %65 : vector<2x32xf32>
    %67 = arith.truncf %66 : vector<2x32xf32> to vector<2x32xbf16>
    %c0_34 = arith.constant 0 : index
    %c0_35 = arith.constant 0 : index
    %68 = vector.load %arg10[%c0_34, %c0_35] : memref<32x10xbf16, #tpu.memory_space<vmem>>, vector<32x10xbf16>
    %cst_36 = arith.constant dense<0.000000e+00> : vector<2x10xf32>
    %69 = tpu.matmul %67, %68, %cst_36 {dimension_numbers = #tpu.dot_dimension_numbers<[1], [0], [0], [1], [0, 0, 1, 1], [], []>} : vector<2x32xbf16>, vector<32x10xbf16>, vector<2x10xf32> -> vector<2x10xf32>
    %c0_37 = arith.constant 0 : index
    %c0_38 = arith.constant 0 : index
    %70 = vector.load %arg11[%c0_37, %c0_38] : memref<1x10xf32, #tpu.memory_space<vmem>>, vector<1x10xf32>
    %71 = vector.broadcast %70 : vector<1x10xf32> to vector<2x10xf32>
    %72 = arith.addf %69, %71 : vector<2x10xf32>
    %c0_39 = arith.constant 0 : index
    %c0_40 = arith.constant 0 : index
    %73 = vector.load %arg12[%c0_39, %c0_40] : memref<2x10xf32, #tpu.memory_space<vmem>>, vector<2x10xf32>
    tpu.vector_store %arg12[%c0_39, %c0_40], %72 {strides = array<i32>} : memref<2x10xf32, #tpu.memory_space<vmem>>, vector<2x10xf32>,
    return
  }
}

</mosaic_0001>

<llo_original>
// kernel: model_forward.1
$region0: #{model_forward.1}
  #allocation0 [shape = 'u32[]', space=smem, size = 0x4, offset = 0x4, fixed_abs, tag = 'smem constant byte address 0x4 - core index']
  #allocation1 [shape = 'u32[144,128]{1,0:T(1,128)}', space=vmem, size = 0x12000, scoped, tag = 'internal scratch']
  %s0 = inlined_call_operand.vmem [shape: bf16[32,100], index: 0, kind: input, shape index: {}]
  %s1 = inlined_call_operand.hbm [shape: bf16[100,864], index: 1, kind: input, shape index: {}]
  %s2 = inlined_call_operand.vmem [shape: f32[1,864], index: 2, kind: input, shape index: {}]
  %s3 = inlined_call_operand.vmem [shape: bf16[864,512], index: 3, kind: input, shape index: {}]
  %s4 = inlined_call_operand.vmem [shape: f32[1,512], index: 4, kind: input, shape index: {}]
  %s5 = inlined_call_operand.vmem [shape: f32[1,512], index: 5, kind: input, shape index: {}]
  %s6 = inlined_call_operand.vmem [shape: f32[1,512], index: 6, kind: input, shape index: {}]
  %s7 = inlined_call_operand.vmem [shape: bf16[8,32], index: 7, kind: input, shape index: {}]
  %s8 = inlined_call_operand.vmem [shape: bf16[2048,32], index: 8, kind: input, shape index: {}]
  %s9 = inlined_call_operand.vmem [shape: f32[1,32], index: 9, kind: input, shape index: {}]
  %s10 = inlined_call_operand.vmem [shape: bf16[32,10], index: 10, kind: input, shape index: {}]
  %s11 = inlined_call_operand.vmem [shape: f32[1,10], index: 11, kind: input, shape index: {}]
  %s12 = inlined_call_operand.hbm [shape: f32[2,10], index: 12, kind: output, shape index: {}]
  %s13 = sld [smem:[#allocation0]]
  $region62: #{model_forward.1} parent=0
    _
  %s15 = ssub.s32 1, %s13
  %s16 = scalar_select 0, %s15, %s13
  $region1: #{model_forward.1} parent=0
    #allocation2 [shape = 'u8[186368]{0}', space=vmem, size = 0x2d800, scoped, tag = 'input window, operand 1, single buffered']
    #allocation3 [shape = 's32[1]{0}', space=sflag, size = 0x4, scoped, tag = 'scoped memory for model_forward.1']
    #allocation4 [shape = 's32[1]{0}', space=sflag, size = 0x4, scoped, tag = 'scoped memory for model_forward.1']
    #allocation5 [shape = 'u8[1024]{0}', space=vmem, size = 0x400, scoped, tag = 'output window, operand 0, single buffered']
    %17 = vsyncpa [#allocation3], 0
    %18 = vsyncpa [#allocation4], 0
    // Predicated region
    $region2: #{model_forward.1} parent=1 // pred_check
      _
    $region3: #{model_forward.1} parent=1 // pred_check_branch
      %20 = sbr.rel (0) target = $region5
    $region4: #{model_forward.1} parent=1 // pred_region
      _
    $region5: #{model_forward.1} parent=1 // pred_fallthru
      _
    // Predicated region
    $region6: #{model_forward.1} parent=1 // pred_check
      _
    $region7: #{model_forward.1} parent=1 // pred_check_branch
      %22 = sbr.rel (0) target = $region9
    $region8: #{model_forward.1} parent=1 // pred_region
      %s24 = ssub.s32 5824, 5824
      %25 = vsyncadd [#allocation3], %s24
      %s26 = sshll.u32 [#allocation2], 4
      %s27 = int_to_ptr.vmem [resolvable:$true] %s26
      %32 = dma.hbm_to_vmem [thread:$0]  %s1, 5824, %s27, [#allocation3], 448, 448, 28
    $region9: #{model_forward.1} parent=1 // pred_fallthru
      _
    // Predicated region
    $region10: #{model_forward.1} parent=1 // pred_check
      _
    $region11: #{model_forward.1} parent=1 // pred_check_branch
      %34 = sbr.rel (0) target = $region13
    $region12: #{model_forward.1} parent=1 // pred_region
      _
    $region13: #{model_forward.1} parent=1 // pred_fallthru
      _
    // Predicated region
    $region14: #{model_forward.1} parent=1 // pred_check
      _
    $region15: #{model_forward.1} parent=1 // pred_check_branch
      %36 = sbr.rel (0) target = $region17
    $region16: #{model_forward.1} parent=1 // pred_region
      _
    $region17: #{model_forward.1} parent=1 // pred_fallthru
      _
    // Predicated region
    $region18: #{model_forward.1} parent=1 // pred_check
      _
    $region19: #{model_forward.1} parent=1 // pred_check_branch
      %38 = sbr.rel (0) target = $region21
    $region20: #{model_forward.1} parent=1 // pred_region
      _
    $region21: #{model_forward.1} parent=1 // pred_fallthru
      _
    // Predicated region
    $region22: #{model_forward.1} parent=1 // pred_check
      _
    $region23: #{model_forward.1} parent=1 // pred_check_branch
      %40 = sbr.rel (0) target = $region25
    $region24: #{model_forward.1} parent=1 // pred_region
      _
    $region25: #{model_forward.1} parent=1 // pred_fallthru
      _
    // Predicated region
    $region26: #{model_forward.1} parent=1 // pred_check
      _
    $region27: #{model_forward.1} parent=1 // pred_check_branch
      %42 = sbr.rel (0) target = $region29
    $region28: #{model_forward.1} parent=1 // pred_region
      _
    $region29: #{model_forward.1} parent=1 // pred_fallthru
      _
    // Predicated region
    $region30: #{model_forward.1} parent=1 // pred_check
      _
    $region31: #{model_forward.1} parent=1 // pred_check_branch
      %44 = sbr.rel (0) target = $region33
    $region32: #{model_forward.1} parent=1 // pred_region
      _
    $region33: #{model_forward.1} parent=1 // pred_fallthru
      _
    // Predicated region
    $region34: #{model_forward.1} parent=1 // pred_check
      _
    $region35: #{model_forward.1} parent=1 // pred_check_branch
      %46 = sbr.rel (0) target = $region37
    $region36: #{model_forward.1} parent=1 // pred_region
      _
    $region37: #{model_forward.1} parent=1 // pred_fallthru
      _
    // Predicated region
    $region38: #{model_forward.1} parent=1 // pred_check
      _
    $region39: #{model_forward.1} parent=1 // pred_check_branch
      %48 = sbr.rel (0) target = $region41
    $region40: #{model_forward.1} parent=1 // pred_region
      _
    $region41: #{model_forward.1} parent=1 // pred_fallthru
      _
    // Predicated region
    $region42: #{model_forward.1} parent=1 // pred_check
      _
    $region43: #{model_forward.1} parent=1 // pred_check_branch
      %50 = sbr.rel (0) target = $region45
    $region44: #{model_forward.1} parent=1 // pred_region
      _
    $region45: #{model_forward.1} parent=1 // pred_fallthru
      _
    // Predicated region
    $region46: #{model_forward.1} parent=1 // pred_check
      _
    $region47: #{model_forward.1} parent=1 // pred_check_branch
      %52 = sbr.rel (0) target = $region49
    $region48: #{model_forward.1} parent=1 // pred_region
      _
    $region49: #{model_forward.1} parent=1 // pred_fallthru
      _
    // Predicated region
    $region50: #{model_forward.1} parent=1 // pred_check
      _
    $region51: #{model_forward.1} parent=1 // pred_check_branch
      %54 = sbr.rel (0) target = $region53
    $region52: #{model_forward.1} parent=1 // pred_region
      %55 = dma.done [#allocation3], 5824
    $region53: #{model_forward.1} parent=1 // pred_fallthru
      _
    %v57 = vld [vmem:[%s0] sm:$0xf]
    %v58 = vld [vmem:[%s0 + $0x4] sm:$0xf]
    %v59 = vld [vmem:[%s0 + $0x8] sm:$0xf]
    %v60 = vld [vmem:[%s0 + $0xc] sm:$0xf]
    %v61 = vld [vmem:[#allocation2] sm:$0xff]
    %v62 = vld [vmem:[#allocation2 + $0x8] sm:$0xff]
    %v63 = vld [vmem:[#allocation2 + $0x10] sm:$0xff]
    %v64 = vld [vmem:[#allocation2 + $0x18] sm:$0xf]
    %v65 = vld [vmem:[#allocation2 + $0x1c] sm:$0xff]
    %v66 = vld [vmem:[#allocation2 + $0x24] sm:$0xff]
    %v67 = vld [vmem:[#allocation2 + $0x2c] sm:$0xff]
    %v68 = vld [vmem:[#allocation2 + $0x34] sm:$0xf]
    %v69 = vld [vmem:[#allocation2 + $0x38] sm:$0xff]
    %v70 = vld [vmem:[#allocation2 + $0x40] sm:$0xff]
    %v71 = vld [vmem:[#allocation2 + $0x48] sm:$0xff]
    %v72 = vld [vmem:[#allocation2 + $0x50] sm:$0xf]
    %v73 = vld [vmem:[#allocation2 + $0x54] sm:$0xff]
    %v74 = vld [vmem:[#allocation2 + $0x5c] sm:$0xff]
    %v75 = vld [vmem:[#allocation2 + $0x64] sm:$0xff]
    %v76 = vld [vmem:[#allocation2 + $0x6c] sm:$0xf]
    %v77 = vld [vmem:[#allocation2 + $0x70] sm:$0xff]
    %v78 = vld [vmem:[#allocation2 + $0x78] sm:$0xff]
    %v79 = vld [vmem:[#allocation2 + $0x80] sm:$0xff]
    %v80 = vld [vmem:[#allocation2 + $0x88] sm:$0xf]
    %v81 = vld [vmem:[#allocation2 + $0x8c] sm:$0xff]
    %v82 = vld [vmem:[#allocation2 + $0x94] sm:$0xff]
    %v83 = vld [vmem:[#allocation2 + $0x9c] sm:$0xff]
    %v84 = vld [vmem:[#allocation2 + $0xa4] sm:$0xf]
    %v85 = vld [vmem:[#allocation2 + $0xa8] sm:$0xff]
    %v86 = vld [vmem:[#allocation2 + $0xb0] sm:$0xff]
    %v87 = vld [vmem:[#allocation2 + $0xb8] sm:$0xff]
    %v88 = vld [vmem:[#allocation2 + $0xc0] sm:$0xf]
    %v89 = vld [vmem:[#allocation2 + $0xc4] sm:$0xff]
    %v90 = vld [vmem:[#allocation2 + $0xcc] sm:$0xff]
    %v91 = vld [vmem:[#allocation2 + $0xd4] sm:$0xff]
    %v92 = vld [vmem:[#allocation2 + $0xdc] sm:$0xf]
    %v93 = vld [vmem:[#allocation2 + $0xe0] sm:$0xff]
    %v94 = vld [vmem:[#allocation2 + $0xe8] sm:$0xff]
    %v95 = vld [vmem:[#allocation2 + $0xf0] sm:$0xff]
    %v96 = vld [vmem:[#allocation2 + $0xf8] sm:$0xf]
    %v97 = vld [vmem:[#allocation2 + $0xfc] sm:$0xff]
    %v98 = vld [vmem:[#allocation2 + $0x104] sm:$0xff]
    %v99 = vld [vmem:[#allocation2 + $0x10c] sm:$0xff]
    %v100 = vld [vmem:[#allocation2 + $0x114] sm:$0xf]
    %v101 = vld [vmem:[#allocation2 + $0x118] sm:$0xff]
    %v102 = vld [vmem:[#allocation2 + $0x120] sm:$0xff]
    %v103 = vld [vmem:[#allocation2 + $0x128] sm:$0xff]
    %v104 = vld [vmem:[#allocation2 + $0x130] sm:$0xf]
    %v105 = vld [vmem:[#allocation2 + $0x134] sm:$0xff]
    %v106 = vld [vmem:[#allocation2 + $0x13c] sm:$0xff]
    %v107 = vld [vmem:[#allocation2 + $0x144] sm:$0xff]
    %v108 = vld [vmem:[#allocation2 + $0x14c] sm:$0xf]
    %v109 = vld [vmem:[#allocation2 + $0x150] sm:$0x33]
    %v110 = vld [vmem:[#allocation2 + $0x158] sm:$0x33]
    %v111 = vld [vmem:[#allocation2 + $0x160] sm:$0x33]
    %v112 = vld [vmem:[#allocation2 + $0x168] sm:$0x3]
    %v113 = vld [vmem:[%s2] sm:$0x7f]
    %v115 = vlaneseq
    %v116 = vshrl.u32 %v115, 7
    %v117 = vsub.s32 0, %v116
    %v118 = vrot.slane %v113, %v117
    %v119 = vlaneseq
    %v120 = vshrl.u32 %v119, 7
    %v121 = vsub.s32 1, %v120
    %v122 = vrot.slane %v113, %v121
    %v123 = vlaneseq
    %v124 = vshrl.u32 %v123, 7
    %v125 = vsub.s32 2, %v124
    %v126 = vrot.slane %v113, %v125
    %v127 = vlaneseq
    %v128 = vshrl.u32 %v127, 7
    %v129 = vsub.s32 3, %v128
    %v130 = vrot.slane %v113, %v129
    %v131 = vlaneseq
    %v132 = vshrl.u32 %v131, 7
    %v133 = vsub.s32 4, %v132
    %v134 = vrot.slane %v113, %v133
    %v135 = vlaneseq
    %v136 = vshrl.u32 %v135, 7
    %v137 = vsub.s32 5, %v136
    %v138 = vrot.slane %v113, %v137
    %v139 = vlaneseq
    %v140 = vshrl.u32 %v139, 7
    %v141 = vsub.s32 6, %v140
    %v142 = vrot.slane %v113, %v141
    %v154 = vunpack.c.l.b16 %v57
    %v155 = vunpack.c.l.b16 %v58
    %v156 = vunpack.c.l.b16 %v59
    %v157 = vunpack.c.l.b16 %v60
    %v158 = vpack.c.b16 %v155, %v154
    %v159 = vpack.c.b16 %v157, %v156
    %v212 = vunpack.c.l.b16 %v61
    %v213 = vunpack.c.h.b16 %v61
    %v214 = vunpack.c.l.b16 %v62
    %v215 = vunpack.c.h.b16 %v62
    %v216 = vunpack.c.l.b16 %v63
    %v217 = vunpack.c.h.b16 %v63
    %v218 = vunpack.c.l.b16 %v64
    %v219 = vunpack.c.l.b16 %v65
    %v220 = vunpack.c.h.b16 %v65
    %v221 = vunpack.c.l.b16 %v66
    %v222 = vunpack.c.h.b16 %v66
    %v223 = vunpack.c.l.b16 %v67
    %v224 = vunpack.c.h.b16 %v67
    %v225 = vunpack.c.l.b16 %v68
    %v226 = vunpack.c.l.b16 %v69
    %v227 = vunpack.c.h.b16 %v69
    %v228 = vunpack.c.l.b16 %v70
    %v229 = vunpack.c.h.b16 %v70
    %v230 = vunpack.c.l.b16 %v71
    %v231 = vunpack.c.h.b16 %v71
    %v232 = vunpack.c.l.b16 %v72
    %v233 = vunpack.c.l.b16 %v73
    %v234 = vunpack.c.h.b16 %v73
    %v235 = vunpack.c.l.b16 %v74
    %v236 = vunpack.c.h.b16 %v74
    %v237 = vunpack.c.l.b16 %v75
    %v238 = vunpack.c.h.b16 %v75
    %v239 = vunpack.c.l.b16 %v76
    %v240 = vunpack.c.l.b16 %v77
    %v241 = vunpack.c.h.b16 %v77
    %v242 = vunpack.c.l.b16 %v78
    %v243 = vunpack.c.h.b16 %v78
    %v244 = vunpack.c.l.b16 %v79
    %v245 = vunpack.c.h.b16 %v79
    %v246 = vunpack.c.l.b16 %v80
    %v247 = vunpack.c.l.b16 %v81
    %v248 = vunpack.c.h.b16 %v81
    %v249 = vunpack.c.l.b16 %v82
    %v250 = vunpack.c.h.b16 %v82
    %v251 = vunpack.c.l.b16 %v83
    %v252 = vunpack.c.h.b16 %v83
    %v253 = vunpack.c.l.b16 %v84
    %v254 = vunpack.c.l.b16 %v85
    %v255 = vunpack.c.h.b16 %v85
    %v256 = vunpack.c.l.b16 %v86
    %v257 = vunpack.c.h.b16 %v86
    %v258 = vunpack.c.l.b16 %v87
    %v259 = vunpack.c.h.b16 %v87
    %v260 = vunpack.c.l.b16 %v88
    %v261 = vunpack.c.l.b16 %v89
    %v262 = vunpack.c.h.b16 %v89
    %v263 = vunpack.c.l.b16 %v90
    %v264 = vunpack.c.h.b16 %v90
    %v265 = vunpack.c.l.b16 %v91
    %v266 = vunpack.c.h.b16 %v91
    %v267 = vunpack.c.l.b16 %v92
    %v268 = vunpack.c.l.b16 %v93
    %v269 = vunpack.c.h.b16 %v93
    %v270 = vunpack.c.l.b16 %v94
    %v271 = vunpack.c.h.b16 %v94
    %v272 = vunpack.c.l.b16 %v95
    %v273 = vunpack.c.h.b16 %v95
    %v274 = vunpack.c.l.b16 %v96
    %v275 = vunpack.c.l.b16 %v97
    %v276 = vunpack.c.h.b16 %v97
    %v277 = vunpack.c.l.b16 %v98
    %v278 = vunpack.c.h.b16 %v98
    %v279 = vunpack.c.l.b16 %v99
    %v280 = vunpack.c.h.b16 %v99
    %v281 = vunpack.c.l.b16 %v100
    %v282 = vunpack.c.l.b16 %v101
    %v283 = vunpack.c.h.b16 %v101
    %v284 = vunpack.c.l.b16 %v102
    %v285 = vunpack.c.h.b16 %v102
    %v286 = vunpack.c.l.b16 %v103
    %v287 = vunpack.c.h.b16 %v103
    %v288 = vunpack.c.l.b16 %v104
    %v289 = vunpack.c.l.b16 %v105
    %v290 = vunpack.c.h.b16 %v105
    %v291 = vunpack.c.l.b16 %v106
    %v292 = vunpack.c.h.b16 %v106
    %v293 = vunpack.c.l.b16 %v107
    %v294 = vunpack.c.h.b16 %v107
    %v295 = vunpack.c.l.b16 %v108
    %v296 = vunpack.c.l.b16 %v109
    %v297 = vunpack.c.h.b16 %v109
    %v298 = vunpack.c.l.b16 %v110
    %v299 = vunpack.c.h.b16 %v110
    %v300 = vunpack.c.l.b16 %v111
    %v301 = vunpack.c.h.b16 %v111
    %v302 = vunpack.c.l.b16 %v112
    %v303 = vpack.c.b16 %v219, %v212
    %v304 = vpack.c.b16 %v220, %v213
    %v305 = vpack.c.b16 %v221, %v214
    %v306 = vpack.c.b16 %v222, %v215
    %v307 = vpack.c.b16 %v223, %v216
    %v308 = vpack.c.b16 %v224, %v217
    %v309 = vpack.c.b16 %v225, %v218
    %v310 = vpack.c.b16 %v233, %v226
    %v311 = vpack.c.b16 %v234, %v227
    %v312 = vpack.c.b16 %v235, %v228
    %v313 = vpack.c.b16 %v236, %v229
    %v314 = vpack.c.b16 %v237, %v230
    %v315 = vpack.c.b16 %v238, %v231
    %v316 = vpack.c.b16 %v239, %v232
    %v317 = vpack.c.b16 %v247, %v240
    %v318 = vpack.c.b16 %v248, %v241
    %v319 = vpack.c.b16 %v249, %v242
    %v320 = vpack.c.b16 %v250, %v243
    %v321 = vpack.c.b16 %v251, %v244
    %v322 = vpack.c.b16 %v252, %v245
    %v323 = vpack.c.b16 %v253, %v246
    %v324 = vpack.c.b16 %v261, %v254
    %v325 = vpack.c.b16 %v262, %v255
    %v326 = vpack.c.b16 %v263, %v256
    %v327 = vpack.c.b16 %v264, %v257
    %v328 = vpack.c.b16 %v265, %v258
    %v329 = vpack.c.b16 %v266, %v259
    %v330 = vpack.c.b16 %v267, %v260
    %v331 = vpack.c.b16 %v275, %v268
    %v332 = vpack.c.b16 %v276, %v269
    %v333 = vpack.c.b16 %v277, %v270
    %v334 = vpack.c.b16 %v278, %v271
    %v335 = vpack.c.b16 %v279, %v272
    %v336 = vpack.c.b16 %v280, %v273
    %v337 = vpack.c.b16 %v281, %v274
    %v338 = vpack.c.b16 %v289, %v282
    %v339 = vpack.c.b16 %v290, %v283
    %v340 = vpack.c.b16 %v291, %v284
    %v341 = vpack.c.b16 %v292, %v285
    %v342 = vpack.c.b16 %v293, %v286
    %v343 = vpack.c.b16 %v294, %v287
    %v344 = vpack.c.b16 %v295, %v288
    %v345 = vpack.c.b16 %v296, %v296
    %v346 = vpack.c.b16 %v297, %v297
    %v347 = vpack.c.b16 %v298, %v298
    %v348 = vpack.c.b16 %v299, %v299
    %v349 = vpack.c.b16 %v300, %v300
    %v350 = vpack.c.b16 %v301, %v301
    %v351 = vpack.c.b16 %v302, %v302
    %vm394 = vcmask 818176
    %v396 = vsel %vm394, %v158, 0
    %v399 = vsel %vm394, %v159, 0
    %vm401 = vcmask 1041408
    %v403 = vsel %vm401, %v345, 0
    %v406 = vsel %vm401, %v346, 0
    %v409 = vsel %vm401, %v347, 0
    %v412 = vsel %vm401, %v348, 0
    %v415 = vsel %vm401, %v349, 0
    %v418 = vsel %vm401, %v350, 0
    %v421 = vsel %vm401, %v351, 0
    %423 = vmatprep.subr.bf16.mxu0 0
    %424 = vmatpush1.bf16.msra.mxu0 0
    %425 = vmatprep.subr.bf16.mxu0 %v406
    %426 = vmatpush1.bf16.msra.mxu0 %v403
    %427 = vmatprep.subr.bf16.mxu0 %v339
    %428 = vmatpush1.bf16.msra.mxu0 %v338
    %429 = vmatprep.subr.bf16.mxu0 %v332
    %430 = vmatpush1.bf16.msra.mxu0 %v331
    %431 = vmatprep.subr.bf16.mxu0 %v325
    %432 = vmatpush1.bf16.msra.mxu0 %v324
    %433 = vmatprep.subr.bf16.mxu0 %v318
    %434 = vmatpush1.bf16.msra.mxu0 %v317
    %435 = vmatprep.subr.bf16.mxu0 %v311
    %436 = vmatpush1.bf16.msra.mxu0 %v310
    %437 = vmatprep.subr.bf16.mxu0 %v304
    %438 = vmatpush1.bf16.msra.mxu0 %v303
    %439 = vmatprep.subr.bf16.mxu0 0
    %440 = vmatpush2.bf16.msra.mxu0 0
    %441 = vmatprep.subr.bf16.mxu0 0
    %442 = vmatpush2.bf16.msra.mxu0 0
    %443 = vmatprep.subr.bf16.mxu0 0
    %444 = vmatpush2.bf16.msra.mxu0 0
    %445 = vmatprep.subr.bf16.mxu0 0
    %446 = vmatpush2.bf16.msra.mxu0 0
    %447 = vmatprep.subr.bf16.mxu0 0
    %448 = vmatpush2.bf16.msra.mxu0 0
    %449 = vmatprep.subr.bf16.mxu0 0
    %450 = vmatpush2.bf16.msra.mxu0 0
    %451 = vmatprep.subr.bf16.mxu0 0
    %452 = vmatpush2.bf16.msra.mxu0 0
    %453 = vmatprep.subr.bf16.mxu0 0
    %454 = vmatpush2.bf16.msra.mxu0 0
    %455 = vmatprep.mubr.bf16.mxu0 0
    %456 = vmatmul.mubr.bf16.gmra.mxu0 %v396
    %v457 = vpop.f32.mrf.mxu0
    %v458 = vadd.f32 %v118, %v457
    %v459 = vpop.f32.mrf.mxu0
    %v460 = vadd.f32 %v122, %v459
    %v461 = vpop.f32.mrf.mxu0
    %v462 = vadd.f32 %v118, %v461
    %v463 = vpop.f32.mrf.mxu0
    %v464 = vadd.f32 %v122, %v463
    %465 = vmatprep.mubr.bf16.mxu0 0
    %466 = vmatmul.mubr.bf16.gmra.mxu0 %v399
    %v467 = vpop.f32.mrf.mxu0
    %v468 = vadd.f32 %v118, %v467
    %v469 = vpop.f32.mrf.mxu0
    %v470 = vadd.f32 %v122, %v469
    %v471 = vpop.f32.mrf.mxu0
    %v472 = vadd.f32 %v118, %v471
    %v473 = vpop.f32.mrf.mxu0
    %v474 = vadd.f32 %v122, %v473
    %475 = vdwg.mxu0
    %476 = vmatprep.subr.bf16.mxu0 0
    %477 = vmatpush1.bf16.msra.mxu0 0
    %478 = vmatprep.subr.bf16.mxu0 %v412
    %479 = vmatpush1.bf16.msra.mxu0 %v409
    %480 = vmatprep.subr.bf16.mxu0 %v341
    %481 = vmatpush1.bf16.msra.mxu0 %v340
    %482 = vmatprep.subr.bf16.mxu0 %v334
    %483 = vmatpush1.bf16.msra.mxu0 %v333
    %484 = vmatprep.subr.bf16.mxu0 %v327
    %485 = vmatpush1.bf16.msra.mxu0 %v326
    %486 = vmatprep.subr.bf16.mxu0 %v320
    %487 = vmatpush1.bf16.msra.mxu0 %v319
    %488 = vmatprep.subr.bf16.mxu0 %v313
    %489 = vmatpush1.bf16.msra.mxu0 %v312
    %490 = vmatprep.subr.bf16.mxu0 %v306
    %491 = vmatpush1.bf16.msra.mxu0 %v305
    %492 = vmatprep.subr.bf16.mxu0 0
    %493 = vmatpush2.bf16.msra.mxu0 0
    %494 = vmatprep.subr.bf16.mxu0 0
    %495 = vmatpush2.bf16.msra.mxu0 0
    %496 = vmatprep.subr.bf16.mxu0 0
    %497 = vmatpush2.bf16.msra.mxu0 0
    %498 = vmatprep.subr.bf16.mxu0 0
    %499 = vmatpush2.bf16.msra.mxu0 0
    %500 = vmatprep.subr.bf16.mxu0 0
    %501 = vmatpush2.bf16.msra.mxu0 0
    %502 = vmatprep.subr.bf16.mxu0 0
    %503 = vmatpush2.bf16.msra.mxu0 0
    %504 = vmatprep.subr.bf16.mxu0 0
    %505 = vmatpush2.bf16.msra.mxu0 0
    %506 = vmatprep.subr.bf16.mxu0 0
    %507 = vmatpush2.bf16.msra.mxu0 0
    %508 = vmatprep.mubr.bf16.mxu0 0
    %509 = vmatmul.mubr.bf16.gmra.mxu0 %v396
    %v510 = vpop.f32.mrf.mxu0
    %v511 = vadd.f32 %v126, %v510
    %v512 = vpop.f32.mrf.mxu0
    %v513 = vadd.f32 %v130, %v512
    %v514 = vpop.f32.mrf.mxu0
    %v515 = vadd.f32 %v126, %v514
    %v516 = vpop.f32.mrf.mxu0
    %v517 = vadd.f32 %v130, %v516
    %518 = vmatprep.mubr.bf16.mxu0 0
    %519 = vmatmul.mubr.bf16.gmra.mxu0 %v399
    %v520 = vpop.f32.mrf.mxu0
    %v521 = vadd.f32 %v126, %v520
    %v522 = vpop.f32.mrf.mxu0
    %v523 = vadd.f32 %v130, %v522
    %v524 = vpop.f32.mrf.mxu0
    %v525 = vadd.f32 %v126, %v524
    %v526 = vpop.f32.mrf.mxu0
    %v527 = vadd.f32 %v130, %v526
    %528 = vdwg.mxu0
    %529 = vmatprep.subr.bf16.mxu0 0
    %530 = vmatpush1.bf16.msra.mxu0 0
    %531 = vmatprep.subr.bf16.mxu0 %v418
    %532 = vmatpush1.bf16.msra.mxu0 %v415
    %533 = vmatprep.subr.bf16.mxu0 %v343
    %534 = vmatpush1.bf16.msra.mxu0 %v342
    %535 = vmatprep.subr.bf16.mxu0 %v336
    %536 = vmatpush1.bf16.msra.mxu0 %v335
    %537 = vmatprep.subr.bf16.mxu0 %v329
    %538 = vmatpush1.bf16.msra.mxu0 %v328
    %539 = vmatprep.subr.bf16.mxu0 %v322
    %540 = vmatpush1.bf16.msra.mxu0 %v321
    %541 = vmatprep.subr.bf16.mxu0 %v315
    %542 = vmatpush1.bf16.msra.mxu0 %v314
    %543 = vmatprep.subr.bf16.mxu0 %v308
    %544 = vmatpush1.bf16.msra.mxu0 %v307
    %545 = vmatprep.subr.bf16.mxu0 0
    %546 = vmatpush2.bf16.msra.mxu0 0
    %547 = vmatprep.subr.bf16.mxu0 0
    %548 = vmatpush2.bf16.msra.mxu0 0
    %549 = vmatprep.subr.bf16.mxu0 0
    %550 = vmatpush2.bf16.msra.mxu0 0
    %551 = vmatprep.subr.bf16.mxu0 0
    %552 = vmatpush2.bf16.msra.mxu0 0
    %553 = vmatprep.subr.bf16.mxu0 0
    %554 = vmatpush2.bf16.msra.mxu0 0
    %555 = vmatprep.subr.bf16.mxu0 0
    %556 = vmatpush2.bf16.msra.mxu0 0
    %557 = vmatprep.subr.bf16.mxu0 0
    %558 = vmatpush2.bf16.msra.mxu0 0
    %559 = vmatprep.subr.bf16.mxu0 0
    %560 = vmatpush2.bf16.msra.mxu0 0
    %561 = vmatprep.mubr.bf16.mxu0 0
    %562 = vmatmul.mubr.bf16.gmra.mxu0 %v396
    %v563 = vpop.f32.mrf.mxu0
    %v564 = vadd.f32 %v134, %v563
    %v565 = vpop.f32.mrf.mxu0
    %v566 = vadd.f32 %v138, %v565
    %v567 = vpop.f32.mrf.mxu0
    %v568 = vadd.f32 %v134, %v567
    %v569 = vpop.f32.mrf.mxu0
    %v570 = vadd.f32 %v138, %v569
    %571 = vmatprep.mubr.bf16.mxu0 0
    %572 = vmatmul.mubr.bf16.gmra.mxu0 %v399
    %v573 = vpop.f32.mrf.mxu0
    %v574 = vadd.f32 %v134, %v573
    %v575 = vpop.f32.mrf.mxu0
    %v576 = vadd.f32 %v138, %v575
    %v577 = vpop.f32.mrf.mxu0
    %v578 = vadd.f32 %v134, %v577
    %v579 = vpop.f32.mrf.mxu0
    %v580 = vadd.f32 %v138, %v579
    %581 = vdwg.mxu0
    %582 = vmatprep.subr.bf16.mxu0 0
    %583 = vmatpush1.bf16.msra.mxu0 0
    %584 = vmatprep.subr.bf16.mxu0 0
    %585 = vmatpush1.bf16.msra.mxu0 %v421
    %586 = vmatprep.subr.bf16.mxu0 0
    %587 = vmatpush1.bf16.msra.mxu0 %v344
    %588 = vmatprep.subr.bf16.mxu0 0
    %589 = vmatpush1.bf16.msra.mxu0 %v337
    %590 = vmatprep.subr.bf16.mxu0 0
    %591 = vmatpush1.bf16.msra.mxu0 %v330
    %592 = vmatprep.subr.bf16.mxu0 0
    %593 = vmatpush1.bf16.msra.mxu0 %v323
    %594 = vmatprep.subr.bf16.mxu0 0
    %595 = vmatpush1.bf16.msra.mxu0 %v316
    %596 = vmatprep.subr.bf16.mxu0 0
    %597 = vmatpush1.bf16.msra.mxu0 %v309
    %598 = vmatprep.subr.bf16.mxu0 0
    %599 = vmatpush2.bf16.msra.mxu0 0
    %600 = vmatprep.subr.bf16.mxu0 0
    %601 = vmatpush2.bf16.msra.mxu0 0
    %602 = vmatprep.subr.bf16.mxu0 0
    %603 = vmatpush2.bf16.msra.mxu0 0
    %604 = vmatprep.subr.bf16.mxu0 0
    %605 = vmatpush2.bf16.msra.mxu0 0
    %606 = vmatprep.subr.bf16.mxu0 0
    %607 = vmatpush2.bf16.msra.mxu0 0
    %608 = vmatprep.subr.bf16.mxu0 0
    %609 = vmatpush2.bf16.msra.mxu0 0
    %610 = vmatprep.subr.bf16.mxu0 0
    %611 = vmatpush2.bf16.msra.mxu0 0
    %612 = vmatprep.subr.bf16.mxu0 0
    %613 = vmatpush2.bf16.msra.mxu0 0
    %614 = vmatprep.mubr.bf16.mxu0 0
    %615 = vmatmul.mubr.bf16.gmra.mxu0 %v396
    %v616 = vpop.f32.mrf.mxu0
    %v617 = vadd.f32 %v142, %v616
    %v618 = vpop.f32.mrf.mxu0
    %v619 = vpop.f32.mrf.mxu0
    %v620 = vadd.f32 %v142, %v619
    %v621 = vpop.f32.mrf.mxu0
    %622 = vmatprep.mubr.bf16.mxu0 0
    %623 = vmatmul.mubr.bf16.gmra.mxu0 %v399
    %v624 = vpop.f32.mrf.mxu0
    %v625 = vadd.f32 %v142, %v624
    %v626 = vpop.f32.mrf.mxu0
    %v627 = vpop.f32.mrf.mxu0
    %v628 = vadd.f32 %v142, %v627
    %v629 = vpop.f32.mrf.mxu0
    %630 = vdwg.mxu0
    %v631 = vmax.f32 %v458, 0.0
    %v632 = vmax.f32 %v460, 0.0
    %v633 = vmax.f32 %v511, 0.0
    %v634 = vmax.f32 %v513, 0.0
    %v635 = vmax.f32 %v564, 0.0
    %v636 = vmax.f32 %v566, 0.0
    %v637 = vmax.f32 %v617, 0.0
    %v638 = vmax.f32 %v462, 0.0
    %v639 = vmax.f32 %v464, 0.0
    %v640 = vmax.f32 %v515, 0.0
    %v641 = vmax.f32 %v517, 0.0
    %v642 = vmax.f32 %v568, 0.0
    %v643 = vmax.f32 %v570, 0.0
    %v644 = vmax.f32 %v620, 0.0
    %v645 = vmax.f32 %v468, 0.0
    %v646 = vmax.f32 %v470, 0.0
    %v647 = vmax.f32 %v521, 0.0
    %v648 = vmax.f32 %v523, 0.0
    %v649 = vmax.f32 %v574, 0.0
    %v650 = vmax.f32 %v576, 0.0
    %v651 = vmax.f32 %v625, 0.0
    %v652 = vmax.f32 %v472, 0.0
    %v653 = vmax.f32 %v474, 0.0
    %v654 = vmax.f32 %v525, 0.0
    %v655 = vmax.f32 %v527, 0.0
    %v656 = vmax.f32 %v578, 0.0
    %v657 = vmax.f32 %v580, 0.0
    %v658 = vmax.f32 %v628, 0.0
    %v659 = vpack.c.bf16 %v638, %v631
    %v660 = vpack.c.bf16 %v639, %v632
    %v661 = vpack.c.bf16 %v640, %v633
    %v662 = vpack.c.bf16 %v641, %v634
    %v663 = vpack.c.bf16 %v642, %v635
    %v664 = vpack.c.bf16 %v643, %v636
    %v665 = vpack.c.bf16 %v644, %v637
    %v666 = vpack.c.bf16 %v652, %v645
    %v667 = vpack.c.bf16 %v653, %v646
    %v668 = vpack.c.bf16 %v654, %v647
    %v669 = vpack.c.bf16 %v655, %v648
    %v670 = vpack.c.bf16 %v656, %v649
    %v671 = vpack.c.bf16 %v657, %v650
    %v672 = vpack.c.bf16 %v658, %v651
    %v673 = vld [vmem:[%s3] sm:$0xff]
    %v674 = vld [vmem:[%s3 + $0x8] sm:$0xff]
    %v675 = vld [vmem:[%s3 + $0x10] sm:$0xff]
    %v676 = vld [vmem:[%s3 + $0x18] sm:$0xff]
    %v677 = vld [vmem:[%s3 + $0x20] sm:$0xff]
    %v678 = vld [vmem:[%s3 + $0x28] sm:$0xff]
    %v679 = vld [vmem:[%s3 + $0x30] sm:$0xff]
    %v680 = vld [vmem:[%s3 + $0x38] sm:$0xff]
    %v681 = vld [vmem:[%s3 + $0x40] sm:$0xff]
    %v682 = vld [vmem:[%s3 + $0x48] sm:$0xff]
    %v683 = vld [vmem:[%s3 + $0x50] sm:$0xff]
    %v684 = vld [vmem:[%s3 + $0x58] sm:$0xff]
    %v685 = vld [vmem:[%s3 + $0x60] sm:$0xff]
    %v686 = vld [vmem:[%s3 + $0x68] sm:$0xff]
    %v687 = vld [vmem:[%s3 + $0x70] sm:$0xff]
    %v688 = vld [vmem:[%s3 + $0x78] sm:$0xff]
    %v689 = vld [vmem:[%s3 + $0x80] sm:$0xff]
    %v690 = vld [vmem:[%s3 + $0x88] sm:$0xff]
    %v691 = vld [vmem:[%s3 + $0x90] sm:$0xff]
    %v692 = vld [vmem:[%s3 + $0x98] sm:$0xff]
    %v693 = vld [vmem:[%s3 + $0xa0] sm:$0xff]
    %v694 = vld [vmem:[%s3 + $0xa8] sm:$0xff]
    %v695 = vld [vmem:[%s3 + $0xb0] sm:$0xff]
    %v696 = vld [vmem:[%s3 + $0xb8] sm:$0xff]
    %v697 = vld [vmem:[%s3 + $0xc0] sm:$0xff]
    %v698 = vld [vmem:[%s3 + $0xc8] sm:$0xff]
    %v699 = vld [vmem:[%s3 + $0xd0] sm:$0xff]
    %v700 = vld [vmem:[%s3 + $0xd8] sm:$0xff]
    %v701 = vld [vmem:[%s3 + $0xe0] sm:$0xff]
    %v702 = vld [vmem:[%s3 + $0xe8] sm:$0xff]
    %v703 = vld [vmem:[%s3 + $0xf0] sm:$0xff]
    %v704 = vld [vmem:[%s3 + $0xf8] sm:$0xff]
    %v705 = vld [vmem:[%s3 + $0x100] sm:$0xff]
    %v706 = vld [vmem:[%s3 + $0x108] sm:$0xff]
    %v707 = vld [vmem:[%s3 + $0x110] sm:$0xff]
    %v708 = vld [vmem:[%s3 + $0x118] sm:$0xff]
    %v709 = vld [vmem:[%s3 + $0x120] sm:$0xff]
    %v710 = vld [vmem:[%s3 + $0x128] sm:$0xff]
    %v711 = vld [vmem:[%s3 + $0x130] sm:$0xff]
    %v712 = vld [vmem:[%s3 + $0x138] sm:$0xff]
    %v713 = vld [vmem:[%s3 + $0x140] sm:$0xff]
    %v714 = vld [vmem:[%s3 + $0x148] sm:$0xff]
    %v715 = vld [vmem:[%s3 + $0x150] sm:$0xff]
    %v716 = vld [vmem:[%s3 + $0x158] sm:$0xff]
    %v717 = vld [vmem:[%s3 + $0x160] sm:$0xff]
    %v718 = vld [vmem:[%s3 + $0x168] sm:$0xff]
    %v719 = vld [vmem:[%s3 + $0x170] sm:$0xff]
    %v720 = vld [vmem:[%s3 + $0x178] sm:$0xff]
    %v721 = vld [vmem:[%s3 + $0x180] sm:$0xff]
    %v722 = vld [vmem:[%s3 + $0x188] sm:$0xff]
    %v723 = vld [vmem:[%s3 + $0x190] sm:$0xff]
    %v724 = vld [vmem:[%s3 + $0x198] sm:$0xff]
    %v725 = vld [vmem:[%s3 + $0x1a0] sm:$0xff]
    %v726 = vld [vmem:[%s3 + $0x1a8] sm:$0xff]
    %v727 = vld [vmem:[%s3 + $0x1b0] sm:$0xff]
    %v728 = vld [vmem:[%s3 + $0x1b8] sm:$0xff]
    %v729 = vld [vmem:[%s3 + $0x1c0] sm:$0xff]
    %v730 = vld [vmem:[%s3 + $0x1c8] sm:$0xff]
    %v731 = vld [vmem:[%s3 + $0x1d0] sm:$0xff]
    %v732 = vld [vmem:[%s3 + $0x1d8] sm:$0xff]
    %v733 = vld [vmem:[%s3 + $0x1e0] sm:$0xff]
    %v734 = vld [vmem:[%s3 + $0x1e8] sm:$0xff]
    %v735 = vld [vmem:[%s3 + $0x1f0] sm:$0xff]
    %v736 = vld [vmem:[%s3 + $0x1f8] sm:$0xff]
    %v737 = vld [vmem:[%s3 + $0x200] sm:$0xff]
    %v738 = vld [vmem:[%s3 + $0x208] sm:$0xff]
    %v739 = vld [vmem:[%s3 + $0x210] sm:$0xff]
    %v740 = vld [vmem:[%s3 + $0x218] sm:$0xff]
    %v741 = vld [vmem:[%s3 + $0x220] sm:$0xff]
    %v742 = vld [vmem:[%s3 + $0x228] sm:$0xff]
    %v743 = vld [vmem:[%s3 + $0x230] sm:$0xff]
    %v744 = vld [vmem:[%s3 + $0x238] sm:$0xff]
    %v745 = vld [vmem:[%s3 + $0x240] sm:$0xff]
    %v746 = vld [vmem:[%s3 + $0x248] sm:$0xff]
    %v747 = vld [vmem:[%s3 + $0x250] sm:$0xff]
    %v748 = vld [vmem:[%s3 + $0x258] sm:$0xff]
    %v749 = vld [vmem:[%s3 + $0x260] sm:$0xff]
    %v750 = vld [vmem:[%s3 + $0x268] sm:$0xff]
    %v751 = vld [vmem:[%s3 + $0x270] sm:$0xff]
    %v752 = vld [vmem:[%s3 + $0x278] sm:$0xff]
    %v753 = vld [vmem:[%s3 + $0x280] sm:$0xff]
    %v754 = vld [vmem:[%s3 + $0x288] sm:$0xff]
    %v755 = vld [vmem:[%s3 + $0x290] sm:$0xff]
    %v756 = vld [vmem:[%s3 + $0x298] sm:$0xff]
    %v757 = vld [vmem:[%s3 + $0x2a0] sm:$0xff]
    %v758 = vld [vmem:[%s3 + $0x2a8] sm:$0xff]
    %v759 = vld [vmem:[%s3 + $0x2b0] sm:$0xff]
    %v760 = vld [vmem:[%s3 + $0x2b8] sm:$0xff]
    %v761 = vld [vmem:[%s3 + $0x2c0] sm:$0xff]
    %v762 = vld [vmem:[%s3 + $0x2c8] sm:$0xff]
    %v763 = vld [vmem:[%s3 + $0x2d0] sm:$0xff]
    %v764 = vld [vmem:[%s3 + $0x2d8] sm:$0xff]
    %v765 = vld [vmem:[%s3 + $0x2e0] sm:$0xff]
    %v766 = vld [vmem:[%s3 + $0x2e8] sm:$0xff]
    %v767 = vld [vmem:[%s3 + $0x2f0] sm:$0xff]
    %v768 = vld [vmem:[%s3 + $0x2f8] sm:$0xff]
    %v769 = vld [vmem:[%s3 + $0x300] sm:$0xff]
    %v770 = vld [vmem:[%s3 + $0x308] sm:$0xff]
    %v771 = vld [vmem:[%s3 + $0x310] sm:$0xff]
    %v772 = vld [vmem:[%s3 + $0x318] sm:$0xff]
    %v773 = vld [vmem:[%s3 + $0x320] sm:$0xff]
    %v774 = vld [vmem:[%s3 + $0x328] sm:$0xff]
    %v775 = vld [vmem:[%s3 + $0x330] sm:$0xff]
    %v776 = vld [vmem:[%s3 + $0x338] sm:$0xff]
    %v777 = vld [vmem:[%s3 + $0x340] sm:$0xff]
    %v778 = vld [vmem:[%s3 + $0x348] sm:$0xff]
    %v779 = vld [vmem:[%s3 + $0x350] sm:$0xff]
    %v780 = vld [vmem:[%s3 + $0x358] sm:$0xff]
    %v781 = vld [vmem:[%s3 + $0x360] sm:$0xff]
    %v782 = vld [vmem:[%s3 + $0x368] sm:$0xff]
    %v783 = vld [vmem:[%s3 + $0x370] sm:$0xff]
    %v784 = vld [vmem:[%s3 + $0x378] sm:$0xff]
    %v785 = vld [vmem:[%s3 + $0x380] sm:$0xff]
    %v786 = vld [vmem:[%s3 + $0x388] sm:$0xff]
    %v787 = vld [vmem:[%s3 + $0x390] sm:$0xff]
    %v788 = vld [vmem:[%s3 + $0x398] sm:$0xff]
    %v789 = vld [vmem:[%s3 + $0x3a0] sm:$0xff]
    %v790 = vld [vmem:[%s3 + $0x3a8] sm:$0xff]
    %v791 = vld [vmem:[%s3 + $0x3b0] sm:$0xff]
    %v792 = vld [vmem:[%s3 + $0x3b8] sm:$0xff]
    %v793 = vld [vmem:[%s3 + $0x3c0] sm:$0xff]
    %v794 = vld [vmem:[%s3 + $0x3c8] sm:$0xff]
    %v795 = vld [vmem:[%s3 + $0x3d0] sm:$0xff]
    %v796 = vld [vmem:[%s3 + $0x3d8] sm:$0xff]
    %v797 = vld [vmem:[%s3 + $0x3e0] sm:$0xff]
    %v798 = vld [vmem:[%s3 + $0x3e8] sm:$0xff]
    %v799 = vld [vmem:[%s3 + $0x3f0] sm:$0xff]
    %v800 = vld [vmem:[%s3 + $0x3f8] sm:$0xff]
    %v801 = vld [vmem:[%s3 + $0x400] sm:$0xff]
    %v802 = vld [vmem:[%s3 + $0x408] sm:$0xff]
    %v803 = vld [vmem:[%s3 + $0x410] sm:$0xff]
    %v804 = vld [vmem:[%s3 + $0x418] sm:$0xff]
    %v805 = vld [vmem:[%s3 + $0x420] sm:$0xff]
    %v806 = vld [vmem:[%s3 + $0x428] sm:$0xff]
    %v807 = vld [vmem:[%s3 + $0x430] sm:$0xff]
    %v808 = vld [vmem:[%s3 + $0x438] sm:$0xff]
    %v809 = vld [vmem:[%s3 + $0x440] sm:$0xff]
    %v810 = vld [vmem:[%s3 + $0x448] sm:$0xff]
    %v811 = vld [vmem:[%s3 + $0x450] sm:$0xff]
    %v812 = vld [vmem:[%s3 + $0x458] sm:$0xff]
    %v813 = vld [vmem:[%s3 + $0x460] sm:$0xff]
    %v814 = vld [vmem:[%s3 + $0x468] sm:$0xff]
    %v815 = vld [vmem:[%s3 + $0x470] sm:$0xff]
    %v816 = vld [vmem:[%s3 + $0x478] sm:$0xff]
    %v817 = vld [vmem:[%s3 + $0x480] sm:$0xff]
    %v818 = vld [vmem:[%s3 + $0x488] sm:$0xff]
    %v819 = vld [vmem:[%s3 + $0x490] sm:$0xff]
    %v820 = vld [vmem:[%s3 + $0x498] sm:$0xff]
    %v821 = vld [vmem:[%s3 + $0x4a0] sm:$0xff]
    %v822 = vld [vmem:[%s3 + $0x4a8] sm:$0xff]
    %v823 = vld [vmem:[%s3 + $0x4b0] sm:$0xff]
    %v824 = vld [vmem:[%s3 + $0x4b8] sm:$0xff]
    %v825 = vld [vmem:[%s3 + $0x4c0] sm:$0xff]
    %v826 = vld [vmem:[%s3 + $0x4c8] sm:$0xff]
    %v827 = vld [vmem:[%s3 + $0x4d0] sm:$0xff]
    %v828 = vld [vmem:[%s3 + $0x4d8] sm:$0xff]
    %v829 = vld [vmem:[%s3 + $0x4e0] sm:$0xff]
    %v830 = vld [vmem:[%s3 + $0x4e8] sm:$0xff]
    %v831 = vld [vmem:[%s3 + $0x4f0] sm:$0xff]
    %v832 = vld [vmem:[%s3 + $0x4f8] sm:$0xff]
    %v833 = vld [vmem:[%s3 + $0x500] sm:$0xff]
    %v834 = vld [vmem:[%s3 + $0x508] sm:$0xff]
    %v835 = vld [vmem:[%s3 + $0x510] sm:$0xff]
    %v836 = vld [vmem:[%s3 + $0x518] sm:$0xff]
    %v837 = vld [vmem:[%s3 + $0x520] sm:$0xff]
    %v838 = vld [vmem:[%s3 + $0x528] sm:$0xff]
    %v839 = vld [vmem:[%s3 + $0x530] sm:$0xff]
    %v840 = vld [vmem:[%s3 + $0x538] sm:$0xff]
    %v841 = vld [vmem:[%s3 + $0x540] sm:$0xff]
    %v842 = vld [vmem:[%s3 + $0x548] sm:$0xff]
    %v843 = vld [vmem:[%s3 + $0x550] sm:$0xff]
    %v844 = vld [vmem:[%s3 + $0x558] sm:$0xff]
    %v845 = vld [vmem:[%s3 + $0x560] sm:$0xff]
    %v846 = vld [vmem:[%s3 + $0x568] sm:$0xff]
    %v847 = vld [vmem:[%s3 + $0x570] sm:$0xff]
    %v848 = vld [vmem:[%s3 + $0x578] sm:$0xff]
    %v849 = vld [vmem:[%s3 + $0x580] sm:$0xff]
    %v850 = vld [vmem:[%s3 + $0x588] sm:$0xff]
    %v851 = vld [vmem:[%s3 + $0x590] sm:$0xff]
    %v852 = vld [vmem:[%s3 + $0x598] sm:$0xff]
    %v853 = vld [vmem:[%s3 + $0x5a0] sm:$0xff]
    %v854 = vld [vmem:[%s3 + $0x5a8] sm:$0xff]
    %v855 = vld [vmem:[%s3 + $0x5b0] sm:$0xff]
    %v856 = vld [vmem:[%s3 + $0x5b8] sm:$0xff]
    %v857 = vld [vmem:[%s3 + $0x5c0] sm:$0xff]
    %v858 = vld [vmem:[%s3 + $0x5c8] sm:$0xff]
    %v859 = vld [vmem:[%s3 + $0x5d0] sm:$0xff]
    %v860 = vld [vmem:[%s3 + $0x5d8] sm:$0xff]
    %v861 = vld [vmem:[%s3 + $0x5e0] sm:$0xff]
    %v862 = vld [vmem:[%s3 + $0x5e8] sm:$0xff]
    %v863 = vld [vmem:[%s3 + $0x5f0] sm:$0xff]
    %v864 = vld [vmem:[%s3 + $0x5f8] sm:$0xff]
    %v865 = vld [vmem:[%s3 + $0x600] sm:$0xff]
    %v866 = vld [vmem:[%s3 + $0x608] sm:$0xff]
    %v867 = vld [vmem:[%s3 + $0x610] sm:$0xff]
    %v868 = vld [vmem:[%s3 + $0x618] sm:$0xff]
    %v869 = vld [vmem:[%s3 + $0x620] sm:$0xff]
    %v870 = vld [vmem:[%s3 + $0x628] sm:$0xff]
    %v871 = vld [vmem:[%s3 + $0x630] sm:$0xff]
    %v872 = vld [vmem:[%s3 + $0x638] sm:$0xff]
    %v873 = vld [vmem:[%s3 + $0x640] sm:$0xff]
    %v874 = vld [vmem:[%s3 + $0x648] sm:$0xff]
    %v875 = vld [vmem:[%s3 + $0x650] sm:$0xff]
    %v876 = vld [vmem:[%s3 + $0x658] sm:$0xff]
    %v877 = vld [vmem:[%s3 + $0x660] sm:$0xff]
    %v878 = vld [vmem:[%s3 + $0x668] sm:$0xff]
    %v879 = vld [vmem:[%s3 + $0x670] sm:$0xff]
    %v880 = vld [vmem:[%s3 + $0x678] sm:$0xff]
    %v881 = vld [vmem:[%s3 + $0x680] sm:$0xff]
    %v882 = vld [vmem:[%s3 + $0x688] sm:$0xff]
    %v883 = vld [vmem:[%s3 + $0x690] sm:$0xff]
    %v884 = vld [vmem:[%s3 + $0x698] sm:$0xff]
    %v885 = vld [vmem:[%s3 + $0x6a0] sm:$0xff]
    %v886 = vld [vmem:[%s3 + $0x6a8] sm:$0xff]
    %v887 = vld [vmem:[%s3 + $0x6b0] sm:$0xff]
    %v888 = vld [vmem:[%s3 + $0x6b8] sm:$0xff]
    %v889 = vld [vmem:[%s4] sm:$0xf]
    %v891 = vlaneseq
    %v892 = vshrl.u32 %v891, 7
    %v893 = vsub.s32 0, %v892
    %v894 = vrot.slane %v889, %v893
    %v895 = vlaneseq
    %v896 = vshrl.u32 %v895, 7
    %v897 = vsub.s32 1, %v896
    %v898 = vrot.slane %v889, %v897
    %v899 = vlaneseq
    %v900 = vshrl.u32 %v899, 7
    %v901 = vsub.s32 2, %v900
    %v902 = vrot.slane %v889, %v901
    %v903 = vlaneseq
    %v904 = vshrl.u32 %v903, 7
    %v905 = vsub.s32 3, %v904
    %v906 = vrot.slane %v889, %v905
    %v1127 = vunpack.c.l.b16 %v673
    %v1128 = vunpack.c.h.b16 %v673
    %v1129 = vunpack.c.l.b16 %v674
    %v1130 = vunpack.c.h.b16 %v674
    %v1131 = vunpack.c.l.b16 %v675
    %v1132 = vunpack.c.h.b16 %v675
    %v1133 = vunpack.c.l.b16 %v676
    %v1134 = vunpack.c.h.b16 %v676
    %v1135 = vunpack.c.l.b16 %v677
    %v1136 = vunpack.c.h.b16 %v677
    %v1137 = vunpack.c.l.b16 %v678
    %v1138 = vunpack.c.h.b16 %v678
    %v1139 = vunpack.c.l.b16 %v679
    %v1140 = vunpack.c.h.b16 %v679
    %v1141 = vunpack.c.l.b16 %v680
    %v1142 = vunpack.c.h.b16 %v680
    %v1143 = vunpack.c.l.b16 %v681
    %v1144 = vunpack.c.h.b16 %v681
    %v1145 = vunpack.c.l.b16 %v682
    %v1146 = vunpack.c.h.b16 %v682
    %v1147 = vunpack.c.l.b16 %v683
    %v1148 = vunpack.c.h.b16 %v683
    %v1149 = vunpack.c.l.b16 %v684
    %v1150 = vunpack.c.h.b16 %v684
    %v1151 = vunpack.c.l.b16 %v685
    %v1152 = vunpack.c.h.b16 %v685
    %v1153 = vunpack.c.l.b16 %v686
    %v1154 = vunpack.c.h.b16 %v686
    %v1155 = vunpack.c.l.b16 %v687
    %v1156 = vunpack.c.h.b16 %v687
    %v1157 = vunpack.c.l.b16 %v688
    %v1158 = vunpack.c.h.b16 %v688
    %v1159 = vunpack.c.l.b16 %v689
    %v1160 = vunpack.c.h.b16 %v689
    %v1161 = vunpack.c.l.b16 %v690
    %v1162 = vunpack.c.h.b16 %v690
    %v1163 = vunpack.c.l.b16 %v691
    %v1164 = vunpack.c.h.b16 %v691
    %v1165 = vunpack.c.l.b16 %v692
    %v1166 = vunpack.c.h.b16 %v692
    %v1167 = vunpack.c.l.b16 %v693
    %v1168 = vunpack.c.h.b16 %v693
    %v1169 = vunpack.c.l.b16 %v694
    %v1170 = vunpack.c.h.b16 %v694
    %v1171 = vunpack.c.l.b16 %v695
    %v1172 = vunpack.c.h.b16 %v695
    %v1173 = vunpack.c.l.b16 %v696
    %v1174 = vunpack.c.h.b16 %v696
    %v1175 = vunpack.c.l.b16 %v697
    %v1176 = vunpack.c.h.b16 %v697
    %v1177 = vunpack.c.l.b16 %v698
    %v1178 = vunpack.c.h.b16 %v698
    %v1179 = vunpack.c.l.b16 %v699
    %v1180 = vunpack.c.h.b16 %v699
    %v1181 = vunpack.c.l.b16 %v700
    %v1182 = vunpack.c.h.b16 %v700
    %v1183 = vunpack.c.l.b16 %v701
    %v1184 = vunpack.c.h.b16 %v701
    %v1185 = vunpack.c.l.b16 %v702
    %v1186 = vunpack.c.h.b16 %v702
    %v1187 = vunpack.c.l.b16 %v703
    %v1188 = vunpack.c.h.b16 %v703
    %v1189 = vunpack.c.l.b16 %v704
    %v1190 = vunpack.c.h.b16 %v704
    %v1191 = vunpack.c.l.b16 %v705
    %v1192 = vunpack.c.h.b16 %v705
    %v1193 = vunpack.c.l.b16 %v706
    %v1194 = vunpack.c.h.b16 %v706
    %v1195 = vunpack.c.l.b16 %v707
    %v1196 = vunpack.c.h.b16 %v707
    %v1197 = vunpack.c.l.b16 %v708
    %v1198 = vunpack.c.h.b16 %v708
    %v1199 = vunpack.c.l.b16 %v709
    %v1200 = vunpack.c.h.b16 %v709
    %v1201 = vunpack.c.l.b16 %v710
    %v1202 = vunpack.c.h.b16 %v710
    %v1203 = vunpack.c.l.b16 %v711
    %v1204 = vunpack.c.h.b16 %v711
    %v1205 = vunpack.c.l.b16 %v712
    %v1206 = vunpack.c.h.b16 %v712
    %v1207 = vunpack.c.l.b16 %v713
    %v1208 = vunpack.c.h.b16 %v713
    %v1209 = vunpack.c.l.b16 %v714
    %v1210 = vunpack.c.h.b16 %v714
    %v1211 = vunpack.c.l.b16 %v715
    %v1212 = vunpack.c.h.b16 %v715
    %v1213 = vunpack.c.l.b16 %v716
    %v1214 = vunpack.c.h.b16 %v716
    %v1215 = vunpack.c.l.b16 %v717
    %v1216 = vunpack.c.h.b16 %v717
    %v1217 = vunpack.c.l.b16 %v718
    %v1218 = vunpack.c.h.b16 %v718
    %v1219 = vunpack.c.l.b16 %v719
    %v1220 = vunpack.c.h.b16 %v719
    %v1221 = vunpack.c.l.b16 %v720
    %v1222 = vunpack.c.h.b16 %v720
    %v1223 = vunpack.c.l.b16 %v721
    %v1224 = vunpack.c.h.b16 %v721
    %v1225 = vunpack.c.l.b16 %v722
    %v1226 = vunpack.c.h.b16 %v722
    %v1227 = vunpack.c.l.b16 %v723
    %v1228 = vunpack.c.h.b16 %v723
    %v1229 = vunpack.c.l.b16 %v724
    %v1230 = vunpack.c.h.b16 %v724
    %v1231 = vunpack.c.l.b16 %v725
    %v1232 = vunpack.c.h.b16 %v725
    %v1233 = vunpack.c.l.b16 %v726
    %v1234 = vunpack.c.h.b16 %v726
    %v1235 = vunpack.c.l.b16 %v727
    %v1236 = vunpack.c.h.b16 %v727
    %v1237 = vunpack.c.l.b16 %v728
    %v1238 = vunpack.c.h.b16 %v728
    %v1239 = vunpack.c.l.b16 %v729
    %v1240 = vunpack.c.h.b16 %v729
    %v1241 = vunpack.c.l.b16 %v730
    %v1242 = vunpack.c.h.b16 %v730
    %v1243 = vunpack.c.l.b16 %v731
    %v1244 = vunpack.c.h.b16 %v731
    %v1245 = vunpack.c.l.b16 %v732
    %v1246 = vunpack.c.h.b16 %v732
    %v1247 = vunpack.c.l.b16 %v733
    %v1248 = vunpack.c.h.b16 %v733
    %v1249 = vunpack.c.l.b16 %v734
    %v1250 = vunpack.c.h.b16 %v734
    %v1251 = vunpack.c.l.b16 %v735
    %v1252 = vunpack.c.h.b16 %v735
    %v1253 = vunpack.c.l.b16 %v736
    %v1254 = vunpack.c.h.b16 %v736
    %v1255 = vunpack.c.l.b16 %v737
    %v1256 = vunpack.c.h.b16 %v737
    %v1257 = vunpack.c.l.b16 %v738
    %v1258 = vunpack.c.h.b16 %v738
    %v1259 = vunpack.c.l.b16 %v739
    %v1260 = vunpack.c.h.b16 %v739
    %v1261 = vunpack.c.l.b16 %v740
    %v1262 = vunpack.c.h.b16 %v740
    %v1263 = vunpack.c.l.b16 %v741
    %v1264 = vunpack.c.h.b16 %v741
    %v1265 = vunpack.c.l.b16 %v742
    %v1266 = vunpack.c.h.b16 %v742
    %v1267 = vunpack.c.l.b16 %v743
    %v1268 = vunpack.c.h.b16 %v743
    %v1269 = vunpack.c.l.b16 %v744
    %v1270 = vunpack.c.h.b16 %v744
    %v1271 = vunpack.c.l.b16 %v745
    %v1272 = vunpack.c.h.b16 %v745
    %v1273 = vunpack.c.l.b16 %v746
    %v1274 = vunpack.c.h.b16 %v746
    %v1275 = vunpack.c.l.b16 %v747
    %v1276 = vunpack.c.h.b16 %v747
    %v1277 = vunpack.c.l.b16 %v748
    %v1278 = vunpack.c.h.b16 %v748
    %v1279 = vunpack.c.l.b16 %v749
    %v1280 = vunpack.c.h.b16 %v749
    %v1281 = vunpack.c.l.b16 %v750
    %v1282 = vunpack.c.h.b16 %v750
    %v1283 = vunpack.c.l.b16 %v751
    %v1284 = vunpack.c.h.b16 %v751
    %v1285 = vunpack.c.l.b16 %v752
    %v1286 = vunpack.c.h.b16 %v752
    %v1287 = vunpack.c.l.b16 %v753
    %v1288 = vunpack.c.h.b16 %v753
    %v1289 = vunpack.c.l.b16 %v754
    %v1290 = vunpack.c.h.b16 %v754
    %v1291 = vunpack.c.l.b16 %v755
    %v1292 = vunpack.c.h.b16 %v755
    %v1293 = vunpack.c.l.b16 %v756
    %v1294 = vunpack.c.h.b16 %v756
    %v1295 = vunpack.c.l.b16 %v757
    %v1296 = vunpack.c.h.b16 %v757
    %v1297 = vunpack.c.l.b16 %v758
    %v1298 = vunpack.c.h.b16 %v758
    %v1299 = vunpack.c.l.b16 %v759
    %v1300 = vunpack.c.h.b16 %v759
    %v1301 = vunpack.c.l.b16 %v760
    %v1302 = vunpack.c.h.b16 %v760
    %v1303 = vunpack.c.l.b16 %v761
    %v1304 = vunpack.c.h.b16 %v761
    %v1305 = vunpack.c.l.b16 %v762
    %v1306 = vunpack.c.h.b16 %v762
    %v1307 = vunpack.c.l.b16 %v763
    %v1308 = vunpack.c.h.b16 %v763
    %v1309 = vunpack.c.l.b16 %v764
    %v1310 = vunpack.c.h.b16 %v764
    %v1311 = vunpack.c.l.b16 %v765
    %v1312 = vunpack.c.h.b16 %v765
    %v1313 = vunpack.c.l.b16 %v766
    %v1314 = vunpack.c.h.b16 %v766
    %v1315 = vunpack.c.l.b16 %v767
    %v1316 = vunpack.c.h.b16 %v767
    %v1317 = vunpack.c.l.b16 %v768
    %v1318 = vunpack.c.h.b16 %v768
    %v1319 = vunpack.c.l.b16 %v769
    %v1320 = vunpack.c.h.b16 %v769
    %v1321 = vunpack.c.l.b16 %v770
    %v1322 = vunpack.c.h.b16 %v770
    %v1323 = vunpack.c.l.b16 %v771
    %v1324 = vunpack.c.h.b16 %v771
    %v1325 = vunpack.c.l.b16 %v772
    %v1326 = vunpack.c.h.b16 %v772
    %v1327 = vunpack.c.l.b16 %v773
    %v1328 = vunpack.c.h.b16 %v773
    %v1329 = vunpack.c.l.b16 %v774
    %v1330 = vunpack.c.h.b16 %v774
    %v1331 = vunpack.c.l.b16 %v775
    %v1332 = vunpack.c.h.b16 %v775
    %v1333 = vunpack.c.l.b16 %v776
    %v1334 = vunpack.c.h.b16 %v776
    %v1335 = vunpack.c.l.b16 %v777
    %v1336 = vunpack.c.h.b16 %v777
    %v1337 = vunpack.c.l.b16 %v778
    %v1338 = vunpack.c.h.b16 %v778
    %v1339 = vunpack.c.l.b16 %v779
    %v1340 = vunpack.c.h.b16 %v779
    %v1341 = vunpack.c.l.b16 %v780
    %v1342 = vunpack.c.h.b16 %v780
    %v1343 = vunpack.c.l.b16 %v781
    %v1344 = vunpack.c.h.b16 %v781
    %v1345 = vunpack.c.l.b16 %v782
    %v1346 = vunpack.c.h.b16 %v782
    %v1347 = vunpack.c.l.b16 %v783
    %v1348 = vunpack.c.h.b16 %v783
    %v1349 = vunpack.c.l.b16 %v784
    %v1350 = vunpack.c.h.b16 %v784
    %v1351 = vunpack.c.l.b16 %v785
    %v1352 = vunpack.c.h.b16 %v785
    %v1353 = vunpack.c.l.b16 %v786
    %v1354 = vunpack.c.h.b16 %v786
    %v1355 = vunpack.c.l.b16 %v787
    %v1356 = vunpack.c.h.b16 %v787
    %v1357 = vunpack.c.l.b16 %v788
    %v1358 = vunpack.c.h.b16 %v788
    %v1359 = vunpack.c.l.b16 %v789
    %v1360 = vunpack.c.h.b16 %v789
    %v1361 = vunpack.c.l.b16 %v790
    %v1362 = vunpack.c.h.b16 %v790
    %v1363 = vunpack.c.l.b16 %v791
    %v1364 = vunpack.c.h.b16 %v791
    %v1365 = vunpack.c.l.b16 %v792
    %v1366 = vunpack.c.h.b16 %v792
    %v1367 = vunpack.c.l.b16 %v793
    %v1368 = vunpack.c.h.b16 %v793
    %v1369 = vunpack.c.l.b16 %v794
    %v1370 = vunpack.c.h.b16 %v794
    %v1371 = vunpack.c.l.b16 %v795
    %v1372 = vunpack.c.h.b16 %v795
    %v1373 = vunpack.c.l.b16 %v796
    %v1374 = vunpack.c.h.b16 %v796
    %v1375 = vunpack.c.l.b16 %v797
    %v1376 = vunpack.c.h.b16 %v797
    %v1377 = vunpack.c.l.b16 %v798
    %v1378 = vunpack.c.h.b16 %v798
    %v1379 = vunpack.c.l.b16 %v799
    %v1380 = vunpack.c.h.b16 %v799
    %v1381 = vunpack.c.l.b16 %v800
    %v1382 = vunpack.c.h.b16 %v800
    %v1383 = vunpack.c.l.b16 %v801
    %v1384 = vunpack.c.h.b16 %v801
    %v1385 = vunpack.c.l.b16 %v802
    %v1386 = vunpack.c.h.b16 %v802
    %v1387 = vunpack.c.l.b16 %v803
    %v1388 = vunpack.c.h.b16 %v803
    %v1389 = vunpack.c.l.b16 %v804
    %v1390 = vunpack.c.h.b16 %v804
    %v1391 = vunpack.c.l.b16 %v805
    %v1392 = vunpack.c.h.b16 %v805
    %v1393 = vunpack.c.l.b16 %v806
    %v1394 = vunpack.c.h.b16 %v806
    %v1395 = vunpack.c.l.b16 %v807
    %v1396 = vunpack.c.h.b16 %v807
    %v1397 = vunpack.c.l.b16 %v808
    %v1398 = vunpack.c.h.b16 %v808
    %v1399 = vunpack.c.l.b16 %v809
    %v1400 = vunpack.c.h.b16 %v809
    %v1401 = vunpack.c.l.b16 %v810
    %v1402 = vunpack.c.h.b16 %v810
    %v1403 = vunpack.c.l.b16 %v811
    %v1404 = vunpack.c.h.b16 %v811
    %v1405 = vunpack.c.l.b16 %v812
    %v1406 = vunpack.c.h.b16 %v812
    %v1407 = vunpack.c.l.b16 %v813
    %v1408 = vunpack.c.h.b16 %v813
    %v1409 = vunpack.c.l.b16 %v814
    %v1410 = vunpack.c.h.b16 %v814
    %v1411 = vunpack.c.l.b16 %v815
    %v1412 = vunpack.c.h.b16 %v815
    %v1413 = vunpack.c.l.b16 %v816
    %v1414 = vunpack.c.h.b16 %v816
    %v1415 = vunpack.c.l.b16 %v817
    %v1416 = vunpack.c.h.b16 %v817
    %v1417 = vunpack.c.l.b16 %v818
    %v1418 = vunpack.c.h.b16 %v818
    %v1419 = vunpack.c.l.b16 %v819
    %v1420 = vunpack.c.h.b16 %v819
    %v1421 = vunpack.c.l.b16 %v820
    %v1422 = vunpack.c.h.b16 %v820
    %v1423 = vunpack.c.l.b16 %v821
    %v1424 = vunpack.c.h.b16 %v821
    %v1425 = vunpack.c.l.b16 %v822
    %v1426 = vunpack.c.h.b16 %v822
    %v1427 = vunpack.c.l.b16 %v823
    %v1428 = vunpack.c.h.b16 %v823
    %v1429 = vunpack.c.l.b16 %v824
    %v1430 = vunpack.c.h.b16 %v824
    %v1431 = vunpack.c.l.b16 %v825
    %v1432 = vunpack.c.h.b16 %v825
    %v1433 = vunpack.c.l.b16 %v826
    %v1434 = vunpack.c.h.b16 %v826
    %v1435 = vunpack.c.l.b16 %v827
    %v1436 = vunpack.c.h.b16 %v827
    %v1437 = vunpack.c.l.b16 %v828
    %v1438 = vunpack.c.h.b16 %v828
    %v1439 = vunpack.c.l.b16 %v829
    %v1440 = vunpack.c.h.b16 %v829
    %v1441 = vunpack.c.l.b16 %v830
    %v1442 = vunpack.c.h.b16 %v830
    %v1443 = vunpack.c.l.b16 %v831
    %v1444 = vunpack.c.h.b16 %v831
    %v1445 = vunpack.c.l.b16 %v832
    %v1446 = vunpack.c.h.b16 %v832
    %v1447 = vunpack.c.l.b16 %v833
    %v1448 = vunpack.c.h.b16 %v833
    %v1449 = vunpack.c.l.b16 %v834
    %v1450 = vunpack.c.h.b16 %v834
    %v1451 = vunpack.c.l.b16 %v835
    %v1452 = vunpack.c.h.b16 %v835
    %v1453 = vunpack.c.l.b16 %v836
    %v1454 = vunpack.c.h.b16 %v836
    %v1455 = vunpack.c.l.b16 %v837
    %v1456 = vunpack.c.h.b16 %v837
    %v1457 = vunpack.c.l.b16 %v838
    %v1458 = vunpack.c.h.b16 %v838
    %v1459 = vunpack.c.l.b16 %v839
    %v1460 = vunpack.c.h.b16 %v839
    %v1461 = vunpack.c.l.b16 %v840
    %v1462 = vunpack.c.h.b16 %v840
    %v1463 = vunpack.c.l.b16 %v841
    %v1464 = vunpack.c.h.b16 %v841
    %v1465 = vunpack.c.l.b16 %v842
    %v1466 = vunpack.c.h.b16 %v842
    %v1467 = vunpack.c.l.b16 %v843
    %v1468 = vunpack.c.h.b16 %v843
    %v1469 = vunpack.c.l.b16 %v844
    %v1470 = vunpack.c.h.b16 %v844
    %v1471 = vunpack.c.l.b16 %v845
    %v1472 = vunpack.c.h.b16 %v845
    %v1473 = vunpack.c.l.b16 %v846
    %v1474 = vunpack.c.h.b16 %v846
    %v1475 = vunpack.c.l.b16 %v847
    %v1476 = vunpack.c.h.b16 %v847
    %v1477 = vunpack.c.l.b16 %v848
    %v1478 = vunpack.c.h.b16 %v848
    %v1479 = vunpack.c.l.b16 %v849
    %v1480 = vunpack.c.h.b16 %v849
    %v1481 = vunpack.c.l.b16 %v850
    %v1482 = vunpack.c.h.b16 %v850
    %v1483 = vunpack.c.l.b16 %v851
    %v1484 = vunpack.c.h.b16 %v851
    %v1485 = vunpack.c.l.b16 %v852
    %v1486 = vunpack.c.h.b16 %v852
    %v1487 = vunpack.c.l.b16 %v853
    %v1488 = vunpack.c.h.b16 %v853
    %v1489 = vunpack.c.l.b16 %v854
    %v1490 = vunpack.c.h.b16 %v854
    %v1491 = vunpack.c.l.b16 %v855
    %v1492 = vunpack.c.h.b16 %v855
    %v1493 = vunpack.c.l.b16 %v856
    %v1494 = vunpack.c.h.b16 %v856
    %v1495 = vunpack.c.l.b16 %v857
    %v1496 = vunpack.c.h.b16 %v857
    %v1497 = vunpack.c.l.b16 %v858
    %v1498 = vunpack.c.h.b16 %v858
    %v1499 = vunpack.c.l.b16 %v859
    %v1500 = vunpack.c.h.b16 %v859
    %v1501 = vunpack.c.l.b16 %v860
    %v1502 = vunpack.c.h.b16 %v860
    %v1503 = vunpack.c.l.b16 %v861
    %v1504 = vunpack.c.h.b16 %v861
    %v1505 = vunpack.c.l.b16 %v862
    %v1506 = vunpack.c.h.b16 %v862
    %v1507 = vunpack.c.l.b16 %v863
    %v1508 = vunpack.c.h.b16 %v863
    %v1509 = vunpack.c.l.b16 %v864
    %v1510 = vunpack.c.h.b16 %v864
    %v1511 = vunpack.c.l.b16 %v865
    %v1512 = vunpack.c.h.b16 %v865
    %v1513 = vunpack.c.l.b16 %v866
    %v1514 = vunpack.c.h.b16 %v866
    %v1515 = vunpack.c.l.b16 %v867
    %v1516 = vunpack.c.h.b16 %v867
    %v1517 = vunpack.c.l.b16 %v868
    %v1518 = vunpack.c.h.b16 %v868
    %v1519 = vunpack.c.l.b16 %v869
    %v1520 = vunpack.c.h.b16 %v869
    %v1521 = vunpack.c.l.b16 %v870
    %v1522 = vunpack.c.h.b16 %v870
    %v1523 = vunpack.c.l.b16 %v871
    %v1524 = vunpack.c.h.b16 %v871
    %v1525 = vunpack.c.l.b16 %v872
    %v1526 = vunpack.c.h.b16 %v872
    %v1527 = vunpack.c.l.b16 %v873
    %v1528 = vunpack.c.h.b16 %v873
    %v1529 = vunpack.c.l.b16 %v874
    %v1530 = vunpack.c.h.b16 %v874
    %v1531 = vunpack.c.l.b16 %v875
    %v1532 = vunpack.c.h.b16 %v875
    %v1533 = vunpack.c.l.b16 %v876
    %v1534 = vunpack.c.h.b16 %v876
    %v1535 = vunpack.c.l.b16 %v877
    %v1536 = vunpack.c.h.b16 %v877
    %v1537 = vunpack.c.l.b16 %v878
    %v1538 = vunpack.c.h.b16 %v878
    %v1539 = vunpack.c.l.b16 %v879
    %v1540 = vunpack.c.h.b16 %v879
    %v1541 = vunpack.c.l.b16 %v880
    %v1542 = vunpack.c.h.b16 %v880
    %v1543 = vunpack.c.l.b16 %v881
    %v1544 = vunpack.c.h.b16 %v881
    %v1545 = vunpack.c.l.b16 %v882
    %v1546 = vunpack.c.h.b16 %v882
    %v1547 = vunpack.c.l.b16 %v883
    %v1548 = vunpack.c.h.b16 %v883
    %v1549 = vunpack.c.l.b16 %v884
    %v1550 = vunpack.c.h.b16 %v884
    %v1551 = vunpack.c.l.b16 %v885
    %v1552 = vunpack.c.h.b16 %v885
    %v1553 = vunpack.c.l.b16 %v886
    %v1554 = vunpack.c.h.b16 %v886
    %v1555 = vunpack.c.l.b16 %v887
    %v1556 = vunpack.c.h.b16 %v887
    %v1557 = vunpack.c.l.b16 %v888
    %v1558 = vunpack.c.h.b16 %v888
    %v1559 = vpack.c.b16 %v1131, %v1127
    %v1560 = vpack.c.b16 %v1132, %v1128
    %v1561 = vpack.c.b16 %v1133, %v1129
    %v1562 = vpack.c.b16 %v1134, %v1130
    %v1563 = vpack.c.b16 %v1139, %v1135
    %v1564 = vpack.c.b16 %v1140, %v1136
    %v1565 = vpack.c.b16 %v1141, %v1137
    %v1566 = vpack.c.b16 %v1142, %v1138
    %v1567 = vpack.c.b16 %v1147, %v1143
    %v1568 = vpack.c.b16 %v1148, %v1144
    %v1569 = vpack.c.b16 %v1149, %v1145
    %v1570 = vpack.c.b16 %v1150, %v1146
    %v1571 = vpack.c.b16 %v1155, %v1151
    %v1572 = vpack.c.b16 %v1156, %v1152
    %v1573 = vpack.c.b16 %v1157, %v1153
    %v1574 = vpack.c.b16 %v1158, %v1154
    %v1575 = vpack.c.b16 %v1163, %v1159
    %v1576 = vpack.c.b16 %v1164, %v1160
    %v1577 = vpack.c.b16 %v1165, %v1161
    %v1578 = vpack.c.b16 %v1166, %v1162
    %v1579 = vpack.c.b16 %v1171, %v1167
    %v1580 = vpack.c.b16 %v1172, %v1168
    %v1581 = vpack.c.b16 %v1173, %v1169
    %v1582 = vpack.c.b16 %v1174, %v1170
    %v1583 = vpack.c.b16 %v1179, %v1175
    %v1584 = vpack.c.b16 %v1180, %v1176
    %v1585 = vpack.c.b16 %v1181, %v1177
    %v1586 = vpack.c.b16 %v1182, %v1178
    %v1587 = vpack.c.b16 %v1187, %v1183
    %v1588 = vpack.c.b16 %v1188, %v1184
    %v1589 = vpack.c.b16 %v1189, %v1185
    %v1590 = vpack.c.b16 %v1190, %v1186
    %v1591 = vpack.c.b16 %v1195, %v1191
    %v1592 = vpack.c.b16 %v1196, %v1192
    %v1593 = vpack.c.b16 %v1197, %v1193
    %v1594 = vpack.c.b16 %v1198, %v1194
    %v1595 = vpack.c.b16 %v1203, %v1199
    %v1596 = vpack.c.b16 %v1204, %v1200
    %v1597 = vpack.c.b16 %v1205, %v1201
    %v1598 = vpack.c.b16 %v1206, %v1202
    %v1599 = vpack.c.b16 %v1211, %v1207
    %v1600 = vpack.c.b16 %v1212, %v1208
    %v1601 = vpack.c.b16 %v1213, %v1209
    %v1602 = vpack.c.b16 %v1214, %v1210
    %v1603 = vpack.c.b16 %v1219, %v1215
    %v1604 = vpack.c.b16 %v1220, %v1216
    %v1605 = vpack.c.b16 %v1221, %v1217
    %v1606 = vpack.c.b16 %v1222, %v1218
    %v1607 = vpack.c.b16 %v1227, %v1223
    %v1608 = vpack.c.b16 %v1228, %v1224
    %v1609 = vpack.c.b16 %v1229, %v1225
    %v1610 = vpack.c.b16 %v1230, %v1226
    %v1611 = vpack.c.b16 %v1235, %v1231
    %v1612 = vpack.c.b16 %v1236, %v1232
    %v1613 = vpack.c.b16 %v1237, %v1233
    %v1614 = vpack.c.b16 %v1238, %v1234
    %v1615 = vpack.c.b16 %v1243, %v1239
    %v1616 = vpack.c.b16 %v1244, %v1240
    %v1617 = vpack.c.b16 %v1245, %v1241
    %v1618 = vpack.c.b16 %v1246, %v1242
    %v1619 = vpack.c.b16 %v1251, %v1247
    %v1620 = vpack.c.b16 %v1252, %v1248
    %v1621 = vpack.c.b16 %v1253, %v1249
    %v1622 = vpack.c.b16 %v1254, %v1250
    %v1623 = vpack.c.b16 %v1259, %v1255
    %v1624 = vpack.c.b16 %v1260, %v1256
    %v1625 = vpack.c.b16 %v1261, %v1257
    %v1626 = vpack.c.b16 %v1262, %v1258
    %v1627 = vpack.c.b16 %v1267, %v1263
    %v1628 = vpack.c.b16 %v1268, %v1264
    %v1629 = vpack.c.b16 %v1269, %v1265
    %v1630 = vpack.c.b16 %v1270, %v1266
    %v1631 = vpack.c.b16 %v1275, %v1271
    %v1632 = vpack.c.b16 %v1276, %v1272
    %v1633 = vpack.c.b16 %v1277, %v1273
    %v1634 = vpack.c.b16 %v1278, %v1274
    %v1635 = vpack.c.b16 %v1283, %v1279
    %v1636 = vpack.c.b16 %v1284, %v1280
    %v1637 = vpack.c.b16 %v1285, %v1281
    %v1638 = vpack.c.b16 %v1286, %v1282
    %v1639 = vpack.c.b16 %v1291, %v1287
    %v1640 = vpack.c.b16 %v1292, %v1288
    %v1641 = vpack.c.b16 %v1293, %v1289
    %v1642 = vpack.c.b16 %v1294, %v1290
    %v1643 = vpack.c.b16 %v1299, %v1295
    %v1644 = vpack.c.b16 %v1300, %v1296
    %v1645 = vpack.c.b16 %v1301, %v1297
    %v1646 = vpack.c.b16 %v1302, %v1298
    %v1647 = vpack.c.b16 %v1307, %v1303
    %v1648 = vpack.c.b16 %v1308, %v1304
    %v1649 = vpack.c.b16 %v1309, %v1305
    %v1650 = vpack.c.b16 %v1310, %v1306
    %v1651 = vpack.c.b16 %v1315, %v1311
    %v1652 = vpack.c.b16 %v1316, %v1312
    %v1653 = vpack.c.b16 %v1317, %v1313
    %v1654 = vpack.c.b16 %v1318, %v1314
    %v1655 = vpack.c.b16 %v1323, %v1319
    %v1656 = vpack.c.b16 %v1324, %v1320
    %v1657 = vpack.c.b16 %v1325, %v1321
    %v1658 = vpack.c.b16 %v1326, %v1322
    %v1659 = vpack.c.b16 %v1331, %v1327
    %v1660 = vpack.c.b16 %v1332, %v1328
    %v1661 = vpack.c.b16 %v1333, %v1329
    %v1662 = vpack.c.b16 %v1334, %v1330
    %v1663 = vpack.c.b16 %v1339, %v1335
    %v1664 = vpack.c.b16 %v1340, %v1336
    %v1665 = vpack.c.b16 %v1341, %v1337
    %v1666 = vpack.c.b16 %v1342, %v1338
    %v1667 = vpack.c.b16 %v1347, %v1343
    %v1668 = vpack.c.b16 %v1348, %v1344
    %v1669 = vpack.c.b16 %v1349, %v1345
    %v1670 = vpack.c.b16 %v1350, %v1346
    %v1671 = vpack.c.b16 %v1355, %v1351
    %v1672 = vpack.c.b16 %v1356, %v1352
    %v1673 = vpack.c.b16 %v1357, %v1353
    %v1674 = vpack.c.b16 %v1358, %v1354
    %v1675 = vpack.c.b16 %v1363, %v1359
    %v1676 = vpack.c.b16 %v1364, %v1360
    %v1677 = vpack.c.b16 %v1365, %v1361
    %v1678 = vpack.c.b16 %v1366, %v1362
    %v1679 = vpack.c.b16 %v1371, %v1367
    %v1680 = vpack.c.b16 %v1372, %v1368
    %v1681 = vpack.c.b16 %v1373, %v1369
    %v1682 = vpack.c.b16 %v1374, %v1370
    %v1683 = vpack.c.b16 %v1379, %v1375
    %v1684 = vpack.c.b16 %v1380, %v1376
    %v1685 = vpack.c.b16 %v1381, %v1377
    %v1686 = vpack.c.b16 %v1382, %v1378
    %v1687 = vpack.c.b16 %v1387, %v1383
    %v1688 = vpack.c.b16 %v1388, %v1384
    %v1689 = vpack.c.b16 %v1389, %v1385
    %v1690 = vpack.c.b16 %v1390, %v1386
    %v1691 = vpack.c.b16 %v1395, %v1391
    %v1692 = vpack.c.b16 %v1396, %v1392
    %v1693 = vpack.c.b16 %v1397, %v1393
    %v1694 = vpack.c.b16 %v1398, %v1394
    %v1695 = vpack.c.b16 %v1403, %v1399
    %v1696 = vpack.c.b16 %v1404, %v1400
    %v1697 = vpack.c.b16 %v1405, %v1401
    %v1698 = vpack.c.b16 %v1406, %v1402
    %v1699 = vpack.c.b16 %v1411, %v1407
    %v1700 = vpack.c.b16 %v1412, %v1408
    %v1701 = vpack.c.b16 %v1413, %v1409
    %v1702 = vpack.c.b16 %v1414, %v1410
    %v1703 = vpack.c.b16 %v1419, %v1415
    %v1704 = vpack.c.b16 %v1420, %v1416
    %v1705 = vpack.c.b16 %v1421, %v1417
    %v1706 = vpack.c.b16 %v1422, %v1418
    %v1707 = vpack.c.b16 %v1427, %v1423
    %v1708 = vpack.c.b16 %v1428, %v1424
    %v1709 = vpack.c.b16 %v1429, %v1425
    %v1710 = vpack.c.b16 %v1430, %v1426
    %v1711 = vpack.c.b16 %v1435, %v1431
    %v1712 = vpack.c.b16 %v1436, %v1432
    %v1713 = vpack.c.b16 %v1437, %v1433
    %v1714 = vpack.c.b16 %v1438, %v1434
    %v1715 = vpack.c.b16 %v1443, %v1439
    %v1716 = vpack.c.b16 %v1444, %v1440
    %v1717 = vpack.c.b16 %v1445, %v1441
    %v1718 = vpack.c.b16 %v1446, %v1442
    %v1719 = vpack.c.b16 %v1451, %v1447
    %v1720 = vpack.c.b16 %v1452, %v1448
    %v1721 = vpack.c.b16 %v1453, %v1449
    %v1722 = vpack.c.b16 %v1454, %v1450
    %v1723 = vpack.c.b16 %v1459, %v1455
    %v1724 = vpack.c.b16 %v1460, %v1456
    %v1725 = vpack.c.b16 %v1461, %v1457
    %v1726 = vpack.c.b16 %v1462, %v1458
    %v1727 = vpack.c.b16 %v1467, %v1463
    %v1728 = vpack.c.b16 %v1468, %v1464
    %v1729 = vpack.c.b16 %v1469, %v1465
    %v1730 = vpack.c.b16 %v1470, %v1466
    %v1731 = vpack.c.b16 %v1475, %v1471
    %v1732 = vpack.c.b16 %v1476, %v1472
    %v1733 = vpack.c.b16 %v1477, %v1473
    %v1734 = vpack.c.b16 %v1478, %v1474
    %v1735 = vpack.c.b16 %v1483, %v1479
    %v1736 = vpack.c.b16 %v1484, %v1480
    %v1737 = vpack.c.b16 %v1485, %v1481
    %v1738 = vpack.c.b16 %v1486, %v1482
    %v1739 = vpack.c.b16 %v1491, %v1487
    %v1740 = vpack.c.b16 %v1492, %v1488
    %v1741 = vpack.c.b16 %v1493, %v1489
    %v1742 = vpack.c.b16 %v1494, %v1490
    %v1743 = vpack.c.b16 %v1499, %v1495
    %v1744 = vpack.c.b16 %v1500, %v1496
    %v1745 = vpack.c.b16 %v1501, %v1497
    %v1746 = vpack.c.b16 %v1502, %v1498
    %v1747 = vpack.c.b16 %v1507, %v1503
    %v1748 = vpack.c.b16 %v1508, %v1504
    %v1749 = vpack.c.b16 %v1509, %v1505
    %v1750 = vpack.c.b16 %v1510, %v1506
    %v1751 = vpack.c.b16 %v1515, %v1511
    %v1752 = vpack.c.b16 %v1516, %v1512
    %v1753 = vpack.c.b16 %v1517, %v1513
    %v1754 = vpack.c.b16 %v1518, %v1514
    %v1755 = vpack.c.b16 %v1523, %v1519
    %v1756 = vpack.c.b16 %v1524, %v1520
    %v1757 = vpack.c.b16 %v1525, %v1521
    %v1758 = vpack.c.b16 %v1526, %v1522
    %v1759 = vpack.c.b16 %v1531, %v1527
    %v1760 = vpack.c.b16 %v1532, %v1528
    %v1761 = vpack.c.b16 %v1533, %v1529
    %v1762 = vpack.c.b16 %v1534, %v1530
    %v1763 = vpack.c.b16 %v1539, %v1535
    %v1764 = vpack.c.b16 %v1540, %v1536
    %v1765 = vpack.c.b16 %v1541, %v1537
    %v1766 = vpack.c.b16 %v1542, %v1538
    %v1767 = vpack.c.b16 %v1547, %v1543
    %v1768 = vpack.c.b16 %v1548, %v1544
    %v1769 = vpack.c.b16 %v1549, %v1545
    %v1770 = vpack.c.b16 %v1550, %v1546
    %v1771 = vpack.c.b16 %v1555, %v1551
    %v1772 = vpack.c.b16 %v1556, %v1552
    %v1773 = vpack.c.b16 %v1557, %v1553
    %v1774 = vpack.c.b16 %v1558, %v1554
    %vm1991 = vcmask 785408
    %v1993 = vsel %vm1991, %v665, 0
    %v1996 = vsel %vm1991, %v672, 0
    %1998 = vmatprep.subr.bf16.mxu0 %v1588
    %1999 = vmatpush1.bf16.msra.mxu0 %v1587
    %2000 = vmatprep.subr.bf16.mxu0 %v1584
    %2001 = vmatpush1.bf16.msra.mxu0 %v1583
    %2002 = vmatprep.subr.bf16.mxu0 %v1580
    %2003 = vmatpush1.bf16.msra.mxu0 %v1579
    %2004 = vmatprep.subr.bf16.mxu0 %v1576
    %2005 = vmatpush1.bf16.msra.mxu0 %v1575
    %2006 = vmatprep.subr.bf16.mxu0 %v1572
    %2007 = vmatpush1.bf16.msra.mxu0 %v1571
    %2008 = vmatprep.subr.bf16.mxu0 %v1568
    %2009 = vmatpush1.bf16.msra.mxu0 %v1567
    %2010 = vmatprep.subr.bf16.mxu0 %v1564
    %2011 = vmatpush1.bf16.msra.mxu0 %v1563
    %2012 = vmatprep.subr.bf16.mxu0 %v1560
    %2013 = vmatpush1.bf16.msra.mxu0 %v1559
    %2014 = vmatprep.subr.bf16.mxu0 %v1620
    %2015 = vmatpush2.bf16.msra.mxu0 %v1619
    %2016 = vmatprep.subr.bf16.mxu0 %v1616
    %2017 = vmatpush2.bf16.msra.mxu0 %v1615
    %2018 = vmatprep.subr.bf16.mxu0 %v1612
    %2019 = vmatpush2.bf16.msra.mxu0 %v1611
    %2020 = vmatprep.subr.bf16.mxu0 %v1608
    %2021 = vmatpush2.bf16.msra.mxu0 %v1607
    %2022 = vmatprep.subr.bf16.mxu0 %v1604
    %2023 = vmatpush2.bf16.msra.mxu0 %v1603
    %2024 = vmatprep.subr.bf16.mxu0 %v1600
    %2025 = vmatpush2.bf16.msra.mxu0 %v1599
    %2026 = vmatprep.subr.bf16.mxu0 %v1596
    %2027 = vmatpush2.bf16.msra.mxu0 %v1595
    %2028 = vmatprep.subr.bf16.mxu0 %v1592
    %2029 = vmatpush2.bf16.msra.mxu0 %v1591
    %2030 = vmatprep.mubr.bf16.mxu0 %v660
    %2031 = vmatmul.mubr.bf16.gmra.mxu0 %v659
    %v2032 = vpop.f32.mrf.mxu0
    %v2033 = vadd.f32 %v894, %v2032
    %v2034 = vpop.f32.mrf.mxu0
    %v2035 = vadd.f32 %v898, %v2034
    %v2036 = vpop.f32.mrf.mxu0
    %v2037 = vadd.f32 %v894, %v2036
    %v2038 = vpop.f32.mrf.mxu0
    %v2039 = vadd.f32 %v898, %v2038
    %2040 = vmatprep.mubr.bf16.mxu0 %v667
    %2041 = vmatmul.mubr.bf16.gmra.mxu0 %v666
    %v2042 = vpop.f32.mrf.mxu0
    %v2043 = vadd.f32 %v894, %v2042
    %v2044 = vpop.f32.mrf.mxu0
    %v2045 = vadd.f32 %v898, %v2044
    %v2046 = vpop.f32.mrf.mxu0
    %v2047 = vadd.f32 %v894, %v2046
    %v2048 = vpop.f32.mrf.mxu0
    %v2049 = vadd.f32 %v898, %v2048
    %2050 = vdwg.mxu0
    %2051 = vmatprep.subr.bf16.mxu0 %v1652
    %2052 = vmatpush1.bf16.msra.mxu0 %v1651
    %2053 = vmatprep.subr.bf16.mxu0 %v1648
    %2054 = vmatpush1.bf16.msra.mxu0 %v1647
    %2055 = vmatprep.subr.bf16.mxu0 %v1644
    %2056 = vmatpush1.bf16.msra.mxu0 %v1643
    %2057 = vmatprep.subr.bf16.mxu0 %v1640
    %2058 = vmatpush1.bf16.msra.mxu0 %v1639
    %2059 = vmatprep.subr.bf16.mxu0 %v1636
    %2060 = vmatpush1.bf16.msra.mxu0 %v1635
    %2061 = vmatprep.subr.bf16.mxu0 %v1632
    %2062 = vmatpush1.bf16.msra.mxu0 %v1631
    %2063 = vmatprep.subr.bf16.mxu0 %v1628
    %2064 = vmatpush1.bf16.msra.mxu0 %v1627
    %2065 = vmatprep.subr.bf16.mxu0 %v1624
    %2066 = vmatpush1.bf16.msra.mxu0 %v1623
    %2067 = vmatprep.subr.bf16.mxu0 %v1684
    %2068 = vmatpush2.bf16.msra.mxu0 %v1683
    %2069 = vmatprep.subr.bf16.mxu0 %v1680
    %2070 = vmatpush2.bf16.msra.mxu0 %v1679
    %2071 = vmatprep.subr.bf16.mxu0 %v1676
    %2072 = vmatpush2.bf16.msra.mxu0 %v1675
    %2073 = vmatprep.subr.bf16.mxu0 %v1672
    %2074 = vmatpush2.bf16.msra.mxu0 %v1671
    %2075 = vmatprep.subr.bf16.mxu0 %v1668
    %2076 = vmatpush2.bf16.msra.mxu0 %v1667
    %2077 = vmatprep.subr.bf16.mxu0 %v1664
    %2078 = vmatpush2.bf16.msra.mxu0 %v1663
    %2079 = vmatprep.subr.bf16.mxu0 %v1660
    %2080 = vmatpush2.bf16.msra.mxu0 %v1659
    %2081 = vmatprep.subr.bf16.mxu0 %v1656
    %2082 = vmatpush2.bf16.msra.mxu0 %v1655
    %2083 = vmatprep.mubr.bf16.mxu0 %v662
    %2084 = vmatmul.mubr.bf16.gmra.mxu0 %v661
    %v2085 = vpop.f32.mrf.mxu0
    %v2086 = vadd.f32 %v2033, %v2085
    %v2087 = vpop.f32.mrf.mxu0
    %v2088 = vadd.f32 %v2035, %v2087
    %v2089 = vpop.f32.mrf.mxu0
    %v2090 = vadd.f32 %v2037, %v2089
    %v2091 = vpop.f32.mrf.mxu0
    %v2092 = vadd.f32 %v2039, %v2091
    %2093 = vmatprep.mubr.bf16.mxu0 %v669
    %2094 = vmatmul.mubr.bf16.gmra.mxu0 %v668
    %v2095 = vpop.f32.mrf.mxu0
    %v2096 = vadd.f32 %v2043, %v2095
    %v2097 = vpop.f32.mrf.mxu0
    %v2098 = vadd.f32 %v2045, %v2097
    %v2099 = vpop.f32.mrf.mxu0
    %v2100 = vadd.f32 %v2047, %v2099
    %v2101 = vpop.f32.mrf.mxu0
    %v2102 = vadd.f32 %v2049, %v2101
    %2103 = vdwg.mxu0
    %2104 = vmatprep.subr.bf16.mxu0 %v1716
    %2105 = vmatpush1.bf16.msra.mxu0 %v1715
    %2106 = vmatprep.subr.bf16.mxu0 %v1712
    %2107 = vmatpush1.bf16.msra.mxu0 %v1711
    %2108 = vmatprep.subr.bf16.mxu0 %v1708
    %2109 = vmatpush1.bf16.msra.mxu0 %v1707
    %2110 = vmatprep.subr.bf16.mxu0 %v1704
    %2111 = vmatpush1.bf16.msra.mxu0 %v1703
    %2112 = vmatprep.subr.bf16.mxu0 %v1700
    %2113 = vmatpush1.bf16.msra.mxu0 %v1699
    %2114 = vmatprep.subr.bf16.mxu0 %v1696
    %2115 = vmatpush1.bf16.msra.mxu0 %v1695
    %2116 = vmatprep.subr.bf16.mxu0 %v1692
    %2117 = vmatpush1.bf16.msra.mxu0 %v1691
    %2118 = vmatprep.subr.bf16.mxu0 %v1688
    %2119 = vmatpush1.bf16.msra.mxu0 %v1687
    %2120 = vmatprep.subr.bf16.mxu0 %v1748
    %2121 = vmatpush2.bf16.msra.mxu0 %v1747
    %2122 = vmatprep.subr.bf16.mxu0 %v1744
    %2123 = vmatpush2.bf16.msra.mxu0 %v1743
    %2124 = vmatprep.subr.bf16.mxu0 %v1740
    %2125 = vmatpush2.bf16.msra.mxu0 %v1739
    %2126 = vmatprep.subr.bf16.mxu0 %v1736
    %2127 = vmatpush2.bf16.msra.mxu0 %v1735
    %2128 = vmatprep.subr.bf16.mxu0 %v1732
    %2129 = vmatpush2.bf16.msra.mxu0 %v1731
    %2130 = vmatprep.subr.bf16.mxu0 %v1728
    %2131 = vmatpush2.bf16.msra.mxu0 %v1727
    %2132 = vmatprep.subr.bf16.mxu0 %v1724
    %2133 = vmatpush2.bf16.msra.mxu0 %v1723
    %2134 = vmatprep.subr.bf16.mxu0 %v1720
    %2135 = vmatpush2.bf16.msra.mxu0 %v1719
    %2136 = vmatprep.mubr.bf16.mxu0 %v664
    %2137 = vmatmul.mubr.bf16.gmra.mxu0 %v663
    %v2138 = vpop.f32.mrf.mxu0
    %v2139 = vadd.f32 %v2086, %v2138
    %v2140 = vpop.f32.mrf.mxu0
    %v2141 = vadd.f32 %v2088, %v2140
    %v2142 = vpop.f32.mrf.mxu0
    %v2143 = vadd.f32 %v2090, %v2142
    %v2144 = vpop.f32.mrf.mxu0
    %v2145 = vadd.f32 %v2092, %v2144
    %2146 = vmatprep.mubr.bf16.mxu0 %v671
    %2147 = vmatmul.mubr.bf16.gmra.mxu0 %v670
    %v2148 = vpop.f32.mrf.mxu0
    %v2149 = vadd.f32 %v2096, %v2148
    %v2150 = vpop.f32.mrf.mxu0
    %v2151 = vadd.f32 %v2098, %v2150
    %v2152 = vpop.f32.mrf.mxu0
    %v2153 = vadd.f32 %v2100, %v2152
    %v2154 = vpop.f32.mrf.mxu0
    %v2155 = vadd.f32 %v2102, %v2154
    %2156 = vdwg.mxu0
    %2157 = vmatprep.subr.bf16.mxu0 0
    %2158 = vmatpush1.bf16.msra.mxu0 0
    %2159 = vmatprep.subr.bf16.mxu0 0
    %2160 = vmatpush1.bf16.msra.mxu0 0
    %2161 = vmatprep.subr.bf16.mxu0 %v1772
    %2162 = vmatpush1.bf16.msra.mxu0 %v1771
    %2163 = vmatprep.subr.bf16.mxu0 %v1768
    %2164 = vmatpush1.bf16.msra.mxu0 %v1767
    %2165 = vmatprep.subr.bf16.mxu0 %v1764
    %2166 = vmatpush1.bf16.msra.mxu0 %v1763
    %2167 = vmatprep.subr.bf16.mxu0 %v1760
    %2168 = vmatpush1.bf16.msra.mxu0 %v1759
    %2169 = vmatprep.subr.bf16.mxu0 %v1756
    %2170 = vmatpush1.bf16.msra.mxu0 %v1755
    %2171 = vmatprep.subr.bf16.mxu0 %v1752
    %2172 = vmatpush1.bf16.msra.mxu0 %v1751
    %2173 = vmatprep.subr.bf16.mxu0 0
    %2174 = vmatpush2.bf16.msra.mxu0 0
    %2175 = vmatprep.subr.bf16.mxu0 0
    %2176 = vmatpush2.bf16.msra.mxu0 0
    %2177 = vmatprep.subr.bf16.mxu0 0
    %2178 = vmatpush2.bf16.msra.mxu0 0
    %2179 = vmatprep.subr.bf16.mxu0 0
    %2180 = vmatpush2.bf16.msra.mxu0 0
    %2181 = vmatprep.subr.bf16.mxu0 0
    %2182 = vmatpush2.bf16.msra.mxu0 0
    %2183 = vmatprep.subr.bf16.mxu0 0
    %2184 = vmatpush2.bf16.msra.mxu0 0
    %2185 = vmatprep.subr.bf16.mxu0 0
    %2186 = vmatpush2.bf16.msra.mxu0 0
    %2187 = vmatprep.subr.bf16.mxu0 0
    %2188 = vmatpush2.bf16.msra.mxu0 0
    %2189 = vmatprep.mubr.bf16.mxu0 0
    %2190 = vmatmul.mubr.bf16.gmra.mxu0 %v1993
    %v2191 = vpop.f32.mrf.mxu0
    %v2192 = vadd.f32 %v2139, %v2191
    %v2193 = vpop.f32.mrf.mxu0
    %v2194 = vadd.f32 %v2141, %v2193
    %v2195 = vpop.f32.mrf.mxu0
    %v2196 = vadd.f32 %v2143, %v2195
    %v2197 = vpop.f32.mrf.mxu0
    %v2198 = vadd.f32 %v2145, %v2197
    %2199 = vmatprep.mubr.bf16.mxu0 0
    %2200 = vmatmul.mubr.bf16.gmra.mxu0 %v1996
    %v2201 = vpop.f32.mrf.mxu0
    %v2202 = vadd.f32 %v2149, %v2201
    %v2203 = vpop.f32.mrf.mxu0
    %v2204 = vadd.f32 %v2151, %v2203
    %v2205 = vpop.f32.mrf.mxu0
    %v2206 = vadd.f32 %v2153, %v2205
    %v2207 = vpop.f32.mrf.mxu0
    %v2208 = vadd.f32 %v2155, %v2207
    %2209 = vdwg.mxu0
    %2210 = vmatprep.subr.bf16.mxu0 %v1590
    %2211 = vmatpush1.bf16.msra.mxu0 %v1589
    %2212 = vmatprep.subr.bf16.mxu0 %v1586
    %2213 = vmatpush1.bf16.msra.mxu0 %v1585
    %2214 = vmatprep.subr.bf16.mxu0 %v1582
    %2215 = vmatpush1.bf16.msra.mxu0 %v1581
    %2216 = vmatprep.subr.bf16.mxu0 %v1578
    %2217 = vmatpush1.bf16.msra.mxu0 %v1577
    %2218 = vmatprep.subr.bf16.mxu0 %v1574
    %2219 = vmatpush1.bf16.msra.mxu0 %v1573
    %2220 = vmatprep.subr.bf16.mxu0 %v1570
    %2221 = vmatpush1.bf16.msra.mxu0 %v1569
    %2222 = vmatprep.subr.bf16.mxu0 %v1566
    %2223 = vmatpush1.bf16.msra.mxu0 %v1565
    %2224 = vmatprep.subr.bf16.mxu0 %v1562
    %2225 = vmatpush1.bf16.msra.mxu0 %v1561
    %2226 = vmatprep.subr.bf16.mxu0 %v1622
    %2227 = vmatpush2.bf16.msra.mxu0 %v1621
    %2228 = vmatprep.subr.bf16.mxu0 %v1618
    %2229 = vmatpush2.bf16.msra.mxu0 %v1617
    %2230 = vmatprep.subr.bf16.mxu0 %v1614
    %2231 = vmatpush2.bf16.msra.mxu0 %v1613
    %2232 = vmatprep.subr.bf16.mxu0 %v1610
    %2233 = vmatpush2.bf16.msra.mxu0 %v1609
    %2234 = vmatprep.subr.bf16.mxu0 %v1606
    %2235 = vmatpush2.bf16.msra.mxu0 %v1605
    %2236 = vmatprep.subr.bf16.mxu0 %v1602
    %2237 = vmatpush2.bf16.msra.mxu0 %v1601
    %2238 = vmatprep.subr.bf16.mxu0 %v1598
    %2239 = vmatpush2.bf16.msra.mxu0 %v1597
    %2240 = vmatprep.subr.bf16.mxu0 %v1594
    %2241 = vmatpush2.bf16.msra.mxu0 %v1593
    %2242 = vmatprep.mubr.bf16.mxu0 %v660
    %2243 = vmatmul.mubr.bf16.gmra.mxu0 %v659
    %v2244 = vpop.f32.mrf.mxu0
    %v2245 = vadd.f32 %v902, %v2244
    %v2246 = vpop.f32.mrf.mxu0
    %v2247 = vadd.f32 %v906, %v2246
    %v2248 = vpop.f32.mrf.mxu0
    %v2249 = vadd.f32 %v902, %v2248
    %v2250 = vpop.f32.mrf.mxu0
    %v2251 = vadd.f32 %v906, %v2250
    %2252 = vmatprep.mubr.bf16.mxu0 %v667
    %2253 = vmatmul.mubr.bf16.gmra.mxu0 %v666
    %v2254 = vpop.f32.mrf.mxu0
    %v2255 = vadd.f32 %v902, %v2254
    %v2256 = vpop.f32.mrf.mxu0
    %v2257 = vadd.f32 %v906, %v2256
    %v2258 = vpop.f32.mrf.mxu0
    %v2259 = vadd.f32 %v902, %v2258
    %v2260 = vpop.f32.mrf.mxu0
    %v2261 = vadd.f32 %v906, %v2260
    %2262 = vdwg.mxu0
    %2263 = vmatprep.subr.bf16.mxu0 %v1654
    %2264 = vmatpush1.bf16.msra.mxu0 %v1653
    %2265 = vmatprep.subr.bf16.mxu0 %v1650
    %2266 = vmatpush1.bf16.msra.mxu0 %v1649
    %2267 = vmatprep.subr.bf16.mxu0 %v1646
    %2268 = vmatpush1.bf16.msra.mxu0 %v1645
    %2269 = vmatprep.subr.bf16.mxu0 %v1642
    %2270 = vmatpush1.bf16.msra.mxu0 %v1641
    %2271 = vmatprep.subr.bf16.mxu0 %v1638
    %2272 = vmatpush1.bf16.msra.mxu0 %v1637
    %2273 = vmatprep.subr.bf16.mxu0 %v1634
    %2274 = vmatpush1.bf16.msra.mxu0 %v1633
    %2275 = vmatprep.subr.bf16.mxu0 %v1630
    %2276 = vmatpush1.bf16.msra.mxu0 %v1629
    %2277 = vmatprep.subr.bf16.mxu0 %v1626
    %2278 = vmatpush1.bf16.msra.mxu0 %v1625
    %2279 = vmatprep.subr.bf16.mxu0 %v1686
    %2280 = vmatpush2.bf16.msra.mxu0 %v1685
    %2281 = vmatprep.subr.bf16.mxu0 %v1682
    %2282 = vmatpush2.bf16.msra.mxu0 %v1681
    %2283 = vmatprep.subr.bf16.mxu0 %v1678
    %2284 = vmatpush2.bf16.msra.mxu0 %v1677
    %2285 = vmatprep.subr.bf16.mxu0 %v1674
    %2286 = vmatpush2.bf16.msra.mxu0 %v1673
    %2287 = vmatprep.subr.bf16.mxu0 %v1670
    %2288 = vmatpush2.bf16.msra.mxu0 %v1669
    %2289 = vmatprep.subr.bf16.mxu0 %v1666
    %2290 = vmatpush2.bf16.msra.mxu0 %v1665
    %2291 = vmatprep.subr.bf16.mxu0 %v1662
    %2292 = vmatpush2.bf16.msra.mxu0 %v1661
    %2293 = vmatprep.subr.bf16.mxu0 %v1658
    %2294 = vmatpush2.bf16.msra.mxu0 %v1657
    %2295 = vmatprep.mubr.bf16.mxu0 %v662
    %2296 = vmatmul.mubr.bf16.gmra.mxu0 %v661
    %v2297 = vpop.f32.mrf.mxu0
    %v2298 = vadd.f32 %v2245, %v2297
    %v2299 = vpop.f32.mrf.mxu0
    %v2300 = vadd.f32 %v2247, %v2299
    %v2301 = vpop.f32.mrf.mxu0
    %v2302 = vadd.f32 %v2249, %v2301
    %v2303 = vpop.f32.mrf.mxu0
    %v2304 = vadd.f32 %v2251, %v2303
    %2305 = vmatprep.mubr.bf16.mxu0 %v669
    %2306 = vmatmul.mubr.bf16.gmra.mxu0 %v668
    %v2307 = vpop.f32.mrf.mxu0
    %v2308 = vadd.f32 %v2255, %v2307
    %v2309 = vpop.f32.mrf.mxu0
    %v2310 = vadd.f32 %v2257, %v2309
    %v2311 = vpop.f32.mrf.mxu0
    %v2312 = vadd.f32 %v2259, %v2311
    %v2313 = vpop.f32.mrf.mxu0
    %v2314 = vadd.f32 %v2261, %v2313
    %2315 = vdwg.mxu0
    %2316 = vmatprep.subr.bf16.mxu0 %v1718
    %2317 = vmatpush1.bf16.msra.mxu0 %v1717
    %2318 = vmatprep.subr.bf16.mxu0 %v1714
    %2319 = vmatpush1.bf16.msra.mxu0 %v1713
    %2320 = vmatprep.subr.bf16.mxu0 %v1710
    %2321 = vmatpush1.bf16.msra.mxu0 %v1709
    %2322 = vmatprep.subr.bf16.mxu0 %v1706
    %2323 = vmatpush1.bf16.msra.mxu0 %v1705
    %2324 = vmatprep.subr.bf16.mxu0 %v1702
    %2325 = vmatpush1.bf16.msra.mxu0 %v1701
    %2326 = vmatprep.subr.bf16.mxu0 %v1698
    %2327 = vmatpush1.bf16.msra.mxu0 %v1697
    %2328 = vmatprep.subr.bf16.mxu0 %v1694
    %2329 = vmatpush1.bf16.msra.mxu0 %v1693
    %2330 = vmatprep.subr.bf16.mxu0 %v1690
    %2331 = vmatpush1.bf16.msra.mxu0 %v1689
    %2332 = vmatprep.subr.bf16.mxu0 %v1750
    %2333 = vmatpush2.bf16.msra.mxu0 %v1749
    %2334 = vmatprep.subr.bf16.mxu0 %v1746
    %2335 = vmatpush2.bf16.msra.mxu0 %v1745
    %2336 = vmatprep.subr.bf16.mxu0 %v1742
    %2337 = vmatpush2.bf16.msra.mxu0 %v1741
    %2338 = vmatprep.subr.bf16.mxu0 %v1738
    %2339 = vmatpush2.bf16.msra.mxu0 %v1737
    %2340 = vmatprep.subr.bf16.mxu0 %v1734
    %2341 = vmatpush2.bf16.msra.mxu0 %v1733
    %2342 = vmatprep.subr.bf16.mxu0 %v1730
    %2343 = vmatpush2.bf16.msra.mxu0 %v1729
    %2344 = vmatprep.subr.bf16.mxu0 %v1726
    %2345 = vmatpush2.bf16.msra.mxu0 %v1725
    %2346 = vmatprep.subr.bf16.mxu0 %v1722
    %2347 = vmatpush2.bf16.msra.mxu0 %v1721
    %2348 = vmatprep.mubr.bf16.mxu0 %v664
    %2349 = vmatmul.mubr.bf16.gmra.mxu0 %v663
    %v2350 = vpop.f32.mrf.mxu0
    %v2351 = vadd.f32 %v2298, %v2350
    %v2352 = vpop.f32.mrf.mxu0
    %v2353 = vadd.f32 %v2300, %v2352
    %v2354 = vpop.f32.mrf.mxu0
    %v2355 = vadd.f32 %v2302, %v2354
    %v2356 = vpop.f32.mrf.mxu0
    %v2357 = vadd.f32 %v2304, %v2356
    %2358 = vmatprep.mubr.bf16.mxu0 %v671
    %2359 = vmatmul.mubr.bf16.gmra.mxu0 %v670
    %v2360 = vpop.f32.mrf.mxu0
    %v2361 = vadd.f32 %v2308, %v2360
    %v2362 = vpop.f32.mrf.mxu0
    %v2363 = vadd.f32 %v2310, %v2362
    %v2364 = vpop.f32.mrf.mxu0
    %v2365 = vadd.f32 %v2312, %v2364
    %v2366 = vpop.f32.mrf.mxu0
    %v2367 = vadd.f32 %v2314, %v2366
    %2368 = vdwg.mxu0
    %2369 = vmatprep.subr.bf16.mxu0 0
    %2370 = vmatpush1.bf16.msra.mxu0 0
    %2371 = vmatprep.subr.bf16.mxu0 0
    %2372 = vmatpush1.bf16.msra.mxu0 0
    %2373 = vmatprep.subr.bf16.mxu0 %v1774
    %2374 = vmatpush1.bf16.msra.mxu0 %v1773
    %2375 = vmatprep.subr.bf16.mxu0 %v1770
    %2376 = vmatpush1.bf16.msra.mxu0 %v1769
    %2377 = vmatprep.subr.bf16.mxu0 %v1766
    %2378 = vmatpush1.bf16.msra.mxu0 %v1765
    %2379 = vmatprep.subr.bf16.mxu0 %v1762
    %2380 = vmatpush1.bf16.msra.mxu0 %v1761
    %2381 = vmatprep.subr.bf16.mxu0 %v1758
    %2382 = vmatpush1.bf16.msra.mxu0 %v1757
    %2383 = vmatprep.subr.bf16.mxu0 %v1754
    %2384 = vmatpush1.bf16.msra.mxu0 %v1753
    %2385 = vmatprep.subr.bf16.mxu0 0
    %2386 = vmatpush2.bf16.msra.mxu0 0
    %2387 = vmatprep.subr.bf16.mxu0 0
    %2388 = vmatpush2.bf16.msra.mxu0 0
    %2389 = vmatprep.subr.bf16.mxu0 0
    %2390 = vmatpush2.bf16.msra.mxu0 0
    %2391 = vmatprep.subr.bf16.mxu0 0
    %2392 = vmatpush2.bf16.msra.mxu0 0
    %2393 = vmatprep.subr.bf16.mxu0 0
    %2394 = vmatpush2.bf16.msra.mxu0 0
    %2395 = vmatprep.subr.bf16.mxu0 0
    %2396 = vmatpush2.bf16.msra.mxu0 0
    %2397 = vmatprep.subr.bf16.mxu0 0
    %2398 = vmatpush2.bf16.msra.mxu0 0
    %2399 = vmatprep.subr.bf16.mxu0 0
    %2400 = vmatpush2.bf16.msra.mxu0 0
    %2401 = vmatprep.mubr.bf16.mxu0 0
    %2402 = vmatmul.mubr.bf16.gmra.mxu0 %v1993
    %v2403 = vpop.f32.mrf.mxu0
    %v2404 = vadd.f32 %v2351, %v2403
    %v2405 = vpop.f32.mrf.mxu0
    %v2406 = vadd.f32 %v2353, %v2405
    %v2407 = vpop.f32.mrf.mxu0
    %v2408 = vadd.f32 %v2355, %v2407
    %v2409 = vpop.f32.mrf.mxu0
    %v2410 = vadd.f32 %v2357, %v2409
    %2411 = vmatprep.mubr.bf16.mxu0 0
    %2412 = vmatmul.mubr.bf16.gmra.mxu0 %v1996
    %v2413 = vpop.f32.mrf.mxu0
    %v2414 = vadd.f32 %v2361, %v2413
    %v2415 = vpop.f32.mrf.mxu0
    %v2416 = vadd.f32 %v2363, %v2415
    %v2417 = vpop.f32.mrf.mxu0
    %v2418 = vadd.f32 %v2365, %v2417
    %v2419 = vpop.f32.mrf.mxu0
    %v2420 = vadd.f32 %v2367, %v2419
    %2421 = vdwg.mxu0
    %v2422 = vadd.f32 %v2192, %v2196
    %v2423 = vadd.f32 %v2422, %v2202
    %v2424 = vadd.f32 %v2423, %v2206
    %v2425 = vrot.slane %v2424, 4
    %v2426 = vadd.f32 %v2424, %v2425
    %v2427 = vrot.slane %v2426, 2
    %v2428 = vadd.f32 %v2426, %v2427
    %v2429 = vrot.slane %v2428, 1
    %v2430 = vadd.f32 %v2428, %v2429
    %v2431 = vadd.f32 %v2194, %v2198
    %v2432 = vadd.f32 %v2431, %v2204
    %v2433 = vadd.f32 %v2432, %v2208
    %v2434 = vrot.slane %v2433, 4
    %v2435 = vadd.f32 %v2433, %v2434
    %v2436 = vrot.slane %v2435, 2
    %v2437 = vadd.f32 %v2435, %v2436
    %v2438 = vrot.slane %v2437, 1
    %v2439 = vadd.f32 %v2437, %v2438
    %v2440 = vadd.f32 %v2404, %v2408
    %v2441 = vadd.f32 %v2440, %v2414
    %v2442 = vadd.f32 %v2441, %v2418
    %v2443 = vrot.slane %v2442, 4
    %v2444 = vadd.f32 %v2442, %v2443
    %v2445 = vrot.slane %v2444, 2
    %v2446 = vadd.f32 %v2444, %v2445
    %v2447 = vrot.slane %v2446, 1
    %v2448 = vadd.f32 %v2446, %v2447
    %v2449 = vadd.f32 %v2406, %v2410
    %v2450 = vadd.f32 %v2449, %v2416
    %v2451 = vadd.f32 %v2450, %v2420
    %v2452 = vrot.slane %v2451, 4
    %v2453 = vadd.f32 %v2451, %v2452
    %v2454 = vrot.slane %v2453, 2
    %v2455 = vadd.f32 %v2453, %v2454
    %v2456 = vrot.slane %v2455, 1
    %v2457 = vadd.f32 %v2455, %v2456
    %v2458 = vmul.f32 %v2192, %v2192
    %v2459 = vmul.f32 %v2194, %v2194
    %v2460 = vmul.f32 %v2404, %v2404
    %v2461 = vmul.f32 %v2406, %v2406
    %v2462 = vmul.f32 %v2196, %v2196
    %v2463 = vmul.f32 %v2198, %v2198
    %v2464 = vmul.f32 %v2408, %v2408
    %v2465 = vmul.f32 %v2410, %v2410
    %v2466 = vmul.f32 %v2202, %v2202
    %v2467 = vmul.f32 %v2204, %v2204
    %v2468 = vmul.f32 %v2414, %v2414
    %v2469 = vmul.f32 %v2416, %v2416
    %v2470 = vmul.f32 %v2206, %v2206
    %v2471 = vmul.f32 %v2208, %v2208
    %v2472 = vmul.f32 %v2418, %v2418
    %v2473 = vmul.f32 %v2420, %v2420
    %v2474 = vadd.f32 %v2458, %v2462
    %v2475 = vadd.f32 %v2474, %v2466
    %v2476 = vadd.f32 %v2475, %v2470
    %v2477 = vrot.slane %v2476, 4
    %v2478 = vadd.f32 %v2476, %v2477
    %v2479 = vrot.slane %v2478, 2
    %v2480 = vadd.f32 %v2478, %v2479
    %v2481 = vrot.slane %v2480, 1
    %v2482 = vadd.f32 %v2480, %v2481
    %v2483 = vadd.f32 %v2459, %v2463
    %v2484 = vadd.f32 %v2483, %v2467
    %v2485 = vadd.f32 %v2484, %v2471
    %v2486 = vrot.slane %v2485, 4
    %v2487 = vadd.f32 %v2485, %v2486
    %v2488 = vrot.slane %v2487, 2
    %v2489 = vadd.f32 %v2487, %v2488
    %v2490 = vrot.slane %v2489, 1
    %v2491 = vadd.f32 %v2489, %v2490
    %v2492 = vadd.f32 %v2460, %v2464
    %v2493 = vadd.f32 %v2492, %v2468
    %v2494 = vadd.f32 %v2493, %v2472
    %v2495 = vrot.slane %v2494, 4
    %v2496 = vadd.f32 %v2494, %v2495
    %v2497 = vrot.slane %v2496, 2
    %v2498 = vadd.f32 %v2496, %v2497
    %v2499 = vrot.slane %v2498, 1
    %v2500 = vadd.f32 %v2498, %v2499
    %v2501 = vadd.f32 %v2461, %v2465
    %v2502 = vadd.f32 %v2501, %v2469
    %v2503 = vadd.f32 %v2502, %v2473
    %v2504 = vrot.slane %v2503, 4
    %v2505 = vadd.f32 %v2503, %v2504
    %v2506 = vrot.slane %v2505, 2
    %v2507 = vadd.f32 %v2505, %v2506
    %v2508 = vrot.slane %v2507, 1
    %v2509 = vadd.f32 %v2507, %v2508
    %v2510 = vadd.f32 %v2430, %v2448
    %v2511 = vadd.f32 %v2439, %v2457
    %v2512 = vadd.f32 %v2482, %v2500
    %v2513 = vadd.f32 %v2491, %v2509
    %v2514 = vadd.f32 %v2510, %v2511
    %v2515 = vadd.f32 %v2512, %v2513
    %2516 = vrot.lane.b32.xlu0 %v2514, 64
    %v2517 = vpop.permute.xlu0 %2516
    %v2518 = vlaneseq
    %v2519 = vand.u32 %v2518, 127
    %v2520 = vadd.f32 %v2514, %v2517
    %2521 = vrot.lane.b32.xlu0 %v2515, 64
    %v2522 = vpop.permute.xlu0 %2521
    %v2523 = vadd.f32 %v2515, %v2522
    %2524 = vrot.lane.b32.xlu0 %v2520, 32
    %v2525 = vpop.permute.xlu0 %2524
    %v2526 = vadd.f32 %v2520, %v2525
    %2527 = vrot.lane.b32.xlu0 %v2523, 32
    %v2528 = vpop.permute.xlu0 %2527
    %v2529 = vadd.f32 %v2523, %v2528
    %v2530 = vmul.f32 %v2526, 0.001953125
    %v2531 = vmul.f32 %v2529, 0.001953125
    %v2532 = vmul.f32 %v2530, %v2530
    %v2533 = vsub.f32 %v2531, %v2532
    %v2534 = vld [vmem:[%s5] sm:$0xf]
    %v2535 = vadd.f32 %v2533, 1e-05
    %v2536 = vrsqrt.pop %v2535
    %v2538 = vcombine.low %v2536, %v2536
    %v2540 = vunpack.c.l.s4 1966171168
    %v2541 = vunpack.c.0.s8 %v2540
    %v2542 = vlaneseq
    %v2543 = vshrl.u32 %v2542, 7
    %v2544 = vsub.s32 %v2541, %v2543
    %v2545 = vrot.slane %v2538, %v2544
    %v2546 = vcombine.low %v2545, %v2545
    %v2548 = vunpack.c.l.s4 1966171168
    %v2549 = vunpack.c.0.s8 %v2548
    %v2550 = vlaneseq
    %v2551 = vshrl.u32 %v2550, 7
    %v2552 = vsub.s32 %v2549, %v2551
    %v2553 = vrot.slane %v2546, %v2552
    %v2555 = vmul.f32 %v2534, %v2553
    %v2556 = vld [vmem:[%s6] sm:$0xf]
    %v2558 = vlaneseq
    %v2559 = vshrl.u32 %v2558, 7
    %v2560 = vsub.s32 0, %v2559
    %v2561 = vrot.slane %v2555, %v2560
    %v2562 = vlaneseq
    %v2563 = vshrl.u32 %v2562, 7
    %v2564 = vsub.s32 1, %v2563
    %v2565 = vrot.slane %v2555, %v2564
    %v2566 = vlaneseq
    %v2567 = vshrl.u32 %v2566, 7
    %v2568 = vsub.s32 2, %v2567
    %v2569 = vrot.slane %v2555, %v2568
    %v2570 = vlaneseq
    %v2571 = vshrl.u32 %v2570, 7
    %v2572 = vsub.s32 3, %v2571
    %v2573 = vrot.slane %v2555, %v2572
    %v2578 = vmul.f32 %v2530, %v2561
    %v2579 = vmul.f32 %v2530, %v2565
    %v2580 = vmul.f32 %v2530, %v2569
    %v2581 = vmul.f32 %v2530, %v2573
    %v2586 = vcombine.low %v2578, %v2579
    %v2587 = vcombine.low %v2580, %v2581
    %v2589 = vunpack.c.l.s4 1966171168
    %v2590 = vunpack.c.0.s8 %v2589
    %v2591 = vlaneseq
    %v2592 = vshrl.u32 %v2591, 7
    %v2593 = vsub.s32 %v2590, %v2592
    %v2594 = vrot.slane %v2586, %v2593
    %v2596 = vunpack.c.l.s4 1966171168
    %v2597 = vunpack.c.0.s8 %v2596
    %v2598 = vlaneseq
    %v2599 = vshrl.u32 %v2598, 7
    %v2600 = vsub.s32 %v2597, %v2599
    %v2601 = vrot.slane %v2587, %v2600
    %v2602 = vcombine.low %v2594, %v2601
    %v2604 = vunpack.c.l.s4 1966171168
    %v2605 = vunpack.c.0.s8 %v2604
    %v2606 = vlaneseq
    %v2607 = vshrl.u32 %v2606, 7
    %v2608 = vsub.s32 %v2605, %v2607
    %v2609 = vrot.slane %v2602, %v2608
    %v2611 = vsub.f32 %v2556, %v2609
    %v2612 = vmul.f32 %v2192, %v2561
    %v2613 = vmul.f32 %v2194, %v2565
    %v2614 = vmul.f32 %v2404, %v2569
    %v2615 = vmul.f32 %v2406, %v2573
    %v2616 = vmul.f32 %v2196, %v2561
    %v2617 = vmul.f32 %v2198, %v2565
    %v2618 = vmul.f32 %v2408, %v2569
    %v2619 = vmul.f32 %v2410, %v2573
    %v2620 = vmul.f32 %v2202, %v2561
    %v2621 = vmul.f32 %v2204, %v2565
    %v2622 = vmul.f32 %v2414, %v2569
    %v2623 = vmul.f32 %v2416, %v2573
    %v2624 = vmul.f32 %v2206, %v2561
    %v2625 = vmul.f32 %v2208, %v2565
    %v2626 = vmul.f32 %v2418, %v2569
    %v2627 = vmul.f32 %v2420, %v2573
    %v2629 = vlaneseq
    %v2630 = vshrl.u32 %v2629, 7
    %v2631 = vsub.s32 0, %v2630
    %v2632 = vrot.slane %v2611, %v2631
    %v2633 = vlaneseq
    %v2634 = vshrl.u32 %v2633, 7
    %v2635 = vsub.s32 1, %v2634
    %v2636 = vrot.slane %v2611, %v2635
    %v2637 = vlaneseq
    %v2638 = vshrl.u32 %v2637, 7
    %v2639 = vsub.s32 2, %v2638
    %v2640 = vrot.slane %v2611, %v2639
    %v2641 = vlaneseq
    %v2642 = vshrl.u32 %v2641, 7
    %v2643 = vsub.s32 3, %v2642
    %v2644 = vrot.slane %v2611, %v2643
    %v2649 = vadd.f32 %v2612, %v2632
    %v2650 = vadd.f32 %v2613, %v2636
    %v2651 = vadd.f32 %v2614, %v2640
    %v2652 = vadd.f32 %v2615, %v2644
    %v2653 = vadd.f32 %v2616, %v2632
    %v2654 = vadd.f32 %v2617, %v2636
    %v2655 = vadd.f32 %v2618, %v2640
    %v2656 = vadd.f32 %v2619, %v2644
    %v2657 = vadd.f32 %v2620, %v2632
    %v2658 = vadd.f32 %v2621, %v2636
    %v2659 = vadd.f32 %v2622, %v2640
    %v2660 = vadd.f32 %v2623, %v2644
    %v2661 = vadd.f32 %v2624, %v2632
    %v2662 = vadd.f32 %v2625, %v2636
    %v2663 = vadd.f32 %v2626, %v2640
    %v2664 = vadd.f32 %v2627, %v2644
    %v2665 = vmax.f32 %v2649, 0.0
    %v2666 = vmax.f32 %v2650, 0.0
    %v2667 = vmax.f32 %v2651, 0.0
    %v2668 = vmax.f32 %v2652, 0.0
    %v2669 = vmax.f32 %v2653, 0.0
    %v2670 = vmax.f32 %v2654, 0.0
    %v2671 = vmax.f32 %v2655, 0.0
    %v2672 = vmax.f32 %v2656, 0.0
    %v2673 = vmax.f32 %v2657, 0.0
    %v2674 = vmax.f32 %v2658, 0.0
    %v2675 = vmax.f32 %v2659, 0.0
    %v2676 = vmax.f32 %v2660, 0.0
    %v2677 = vmax.f32 %v2661, 0.0
    %v2678 = vmax.f32 %v2662, 0.0
    %v2679 = vmax.f32 %v2663, 0.0
    %v2680 = vmax.f32 %v2664, 0.0
    %v2681 = vpack.c.bf16 %v2669, %v2665
    %v2682 = vpack.c.bf16 %v2670, %v2666
    %v2683 = vpack.c.bf16 %v2671, %v2667
    %v2684 = vpack.c.bf16 %v2672, %v2668
    %v2685 = vpack.c.bf16 %v2677, %v2673
    %v2686 = vpack.c.bf16 %v2678, %v2674
    %v2687 = vpack.c.bf16 %v2679, %v2675
    %v2688 = vpack.c.bf16 %v2680, %v2676
    %v2689 = vld [vmem:[%s7] sm:$0xf]
    %vm2690 = vcmask 261120
    %v2692 = vsel %vm2690, %v2689, 0
    %2694 = vmatprep.subr.bf16.mxu0 0
    %2695 = vmatpush1.bf16.msra.mxu0 0
    %2696 = vmatprep.subr.bf16.mxu0 0
    %2697 = vmatpush1.bf16.msra.mxu0 0
    %2698 = vmatprep.subr.bf16.mxu0 0
    %2699 = vmatpush1.bf16.msra.mxu0 0
    %2700 = vmatprep.subr.bf16.mxu0 0
    %2701 = vmatpush1.bf16.msra.mxu0 0
    %2702 = vmatprep.subr.bf16.mxu0 0
    %2703 = vmatpush1.bf16.msra.mxu0 0
    %2704 = vmatprep.subr.bf16.mxu0 0
    %2705 = vmatpush1.bf16.msra.mxu0 0
    %2706 = vmatprep.subr.bf16.mxu0 %v2686
    %2707 = vmatpush1.bf16.msra.mxu0 %v2685
    %2708 = vmatprep.subr.bf16.mxu0 %v2682
    %2709 = vmatpush1.bf16.msra.mxu0 %v2681
    %2710 = vmatprep.subr.bf16.mxu0 0
    %2711 = vmatpush2.bf16.msra.mxu0 0
    %2712 = vmatprep.subr.bf16.mxu0 0
    %2713 = vmatpush2.bf16.msra.mxu0 0
    %2714 = vmatprep.subr.bf16.mxu0 0
    %2715 = vmatpush2.bf16.msra.mxu0 0
    %2716 = vmatprep.subr.bf16.mxu0 0
    %2717 = vmatpush2.bf16.msra.mxu0 0
    %2718 = vmatprep.subr.bf16.mxu0 0
    %2719 = vmatpush2.bf16.msra.mxu0 0
    %2720 = vmatprep.subr.bf16.mxu0 0
    %2721 = vmatpush2.bf16.msra.mxu0 0
    %2722 = vmatprep.subr.bf16.mxu0 0
    %2723 = vmatpush2.bf16.msra.mxu0 0
    %2724 = vmatprep.subr.bf16.mxu0 0
    %2725 = vmatpush2.bf16.msra.mxu0 0
    %2726 = vmatprep.mubr.bf16.mxu0 0
    %2727 = vmatmul.mubr.bf16.gmra.mxu0 %v2692
    %v2728 = vpop.f32.mrf.mxu0
    %v2729 = vadd.f32 0.0, %v2728
    %v2730 = vpop.f32.mrf.mxu0
    %v2731 = vadd.f32 0.0, %v2730
    %v2732 = vpop.f32.mrf.mxu0
    %v2733 = vpop.f32.mrf.mxu0
    %2734 = vdwg.mxu0
    %2735 = vmatprep.subr.bf16.mxu0 0
    %2736 = vmatpush1.bf16.msra.mxu0 0
    %2737 = vmatprep.subr.bf16.mxu0 0
    %2738 = vmatpush1.bf16.msra.mxu0 0
    %2739 = vmatprep.subr.bf16.mxu0 0
    %2740 = vmatpush1.bf16.msra.mxu0 0
    %2741 = vmatprep.subr.bf16.mxu0 0
    %2742 = vmatpush1.bf16.msra.mxu0 0
    %2743 = vmatprep.subr.bf16.mxu0 0
    %2744 = vmatpush1.bf16.msra.mxu0 0
    %2745 = vmatprep.subr.bf16.mxu0 0
    %2746 = vmatpush1.bf16.msra.mxu0 0
    %2747 = vmatprep.subr.bf16.mxu0 %v2688
    %2748 = vmatpush1.bf16.msra.mxu0 %v2687
    %2749 = vmatprep.subr.bf16.mxu0 %v2684
    %2750 = vmatpush1.bf16.msra.mxu0 %v2683
    %2751 = vmatprep.subr.bf16.mxu0 0
    %2752 = vmatpush2.bf16.msra.mxu0 0
    %2753 = vmatprep.subr.bf16.mxu0 0
    %2754 = vmatpush2.bf16.msra.mxu0 0
    %2755 = vmatprep.subr.bf16.mxu0 0
    %2756 = vmatpush2.bf16.msra.mxu0 0
    %2757 = vmatprep.subr.bf16.mxu0 0
    %2758 = vmatpush2.bf16.msra.mxu0 0
    %2759 = vmatprep.subr.bf16.mxu0 0
    %2760 = vmatpush2.bf16.msra.mxu0 0
    %2761 = vmatprep.subr.bf16.mxu0 0
    %2762 = vmatpush2.bf16.msra.mxu0 0
    %2763 = vmatprep.subr.bf16.mxu0 0
    %2764 = vmatpush2.bf16.msra.mxu0 0
    %2765 = vmatprep.subr.bf16.mxu0 0
    %2766 = vmatpush2.bf16.msra.mxu0 0
    %2767 = vmatprep.mubr.bf16.mxu0 0
    %2768 = vmatmul.mubr.bf16.gmra.mxu0 %v2692
    %v2769 = vpop.f32.mrf.mxu0
    %v2770 = vadd.f32 0.0, %v2769
    %v2771 = vpop.f32.mrf.mxu0
    %v2772 = vadd.f32 0.0, %v2771
    %v2773 = vpop.f32.mrf.mxu0
    %v2774 = vpop.f32.mrf.mxu0
    %2775 = vdwg.mxu0
    %v2776 = vpack.c.bf16 %v2729, %v2729
    %v2777 = vpack.c.bf16 %v2731, %v2731
    %v2778 = vpack.c.bf16 %v2770, %v2770
    %v2779 = vpack.c.bf16 %v2772, %v2772
    %v2784 = vcombine.low %v2776, %v2777
    %v2785 = vcombine.low %v2778, %v2779
    %v2787 = vunpack.c.l.s4 1983009808
    %v2788 = vunpack.c.0.s8 %v2787
    %v2789 = vlaneseq
    %v2790 = vshrl.u32 %v2789, 7
    %v2791 = vsub.s32 %v2788, %v2790
    %v2792 = vrot.slane %v2784, %v2791
    %v2794 = vunpack.c.l.s4 1983009808
    %v2795 = vunpack.c.0.s8 %v2794
    %v2796 = vlaneseq
    %v2797 = vshrl.u32 %v2796, 7
    %v2798 = vsub.s32 %v2795, %v2797
    %v2799 = vrot.slane %v2785, %v2798
    %v2800 = vcombine.low %v2792, %v2799
    %v2801 = vcombine.high %v2792, %v2799
    %v2802 = vunpack.i.l.s16 %v2800
    %v2803 = vunpack.i.h.s16 %v2800
    %v2804 = vpack.c.b16 %v2803, %v2802
    %v2805 = vunpack.i.l.s16 %v2804
    %v2806 = vunpack.i.h.s16 %v2804
    %v2807 = vunpack.i.l.s16 %v2801
    %v2808 = vunpack.i.h.s16 %v2801
    %v2809 = vpack.c.b16 %v2808, %v2807
    %v2810 = vunpack.i.l.s16 %v2809
    %v2811 = vunpack.i.h.s16 %v2809
    %v2812 = vld [vmem:[%s8] sm:$0xf]
    %v2813 = vld [vmem:[%s8 + $0x4] sm:$0xf]
    %v2814 = vld [vmem:[%s8 + $0x8] sm:$0xf]
    %v2815 = vld [vmem:[%s8 + $0xc] sm:$0xf]
    %v2816 = vld [vmem:[%s8 + $0x10] sm:$0xf]
    %v2817 = vld [vmem:[%s8 + $0x14] sm:$0xf]
    %v2818 = vld [vmem:[%s8 + $0x18] sm:$0xf]
    %v2819 = vld [vmem:[%s8 + $0x1c] sm:$0xf]
    %v2820 = vld [vmem:[%s8 + $0x20] sm:$0xf]
    %v2821 = vld [vmem:[%s8 + $0x24] sm:$0xf]
    %v2822 = vld [vmem:[%s8 + $0x28] sm:$0xf]
    %v2823 = vld [vmem:[%s8 + $0x2c] sm:$0xf]
    %v2824 = vld [vmem:[%s8 + $0x30] sm:$0xf]
    %v2825 = vld [vmem:[%s8 + $0x34] sm:$0xf]
    %v2826 = vld [vmem:[%s8 + $0x38] sm:$0xf]
    %v2827 = vld [vmem:[%s8 + $0x3c] sm:$0xf]
    %v2828 = vld [vmem:[%s8 + $0x40] sm:$0xf]
    %v2829 = vld [vmem:[%s8 + $0x44] sm:$0xf]
    %v2830 = vld [vmem:[%s8 + $0x48] sm:$0xf]
    %v2831 = vld [vmem:[%s8 + $0x4c] sm:$0xf]
    %v2832 = vld [vmem:[%s8 + $0x50] sm:$0xf]
    %v2833 = vld [vmem:[%s8 + $0x54] sm:$0xf]
    %v2834 = vld [vmem:[%s8 + $0x58] sm:$0xf]
    %v2835 = vld [vmem:[%s8 + $0x5c] sm:$0xf]
    %v2836 = vld [vmem:[%s8 + $0x60] sm:$0xf]
    %v2837 = vld [vmem:[%s8 + $0x64] sm:$0xf]
    %v2838 = vld [vmem:[%s8 + $0x68] sm:$0xf]
    %v2839 = vld [vmem:[%s8 + $0x6c] sm:$0xf]
    %v2840 = vld [vmem:[%s8 + $0x70] sm:$0xf]
    %v2841 = vld [vmem:[%s8 + $0x74] sm:$0xf]
    %v2842 = vld [vmem:[%s8 + $0x78] sm:$0xf]
    %v2843 = vld [vmem:[%s8 + $0x7c] sm:$0xf]
    %v2844 = vld [vmem:[%s8 + $0x80] sm:$0xf]
    %v2845 = vld [vmem:[%s8 + $0x84] sm:$0xf]
    %v2846 = vld [vmem:[%s8 + $0x88] sm:$0xf]
    %v2847 = vld [vmem:[%s8 + $0x8c] sm:$0xf]
    %v2848 = vld [vmem:[%s8 + $0x90] sm:$0xf]
    %v2849 = vld [vmem:[%s8 + $0x94] sm:$0xf]
    %v2850 = vld [vmem:[%s8 + $0x98] sm:$0xf]
    %v2851 = vld [vmem:[%s8 + $0x9c] sm:$0xf]
    %v2852 = vld [vmem:[%s8 + $0xa0] sm:$0xf]
    %v2853 = vld [vmem:[%s8 + $0xa4] sm:$0xf]
    %v2854 = vld [vmem:[%s8 + $0xa8] sm:$0xf]
    %v2855 = vld [vmem:[%s8 + $0xac] sm:$0xf]
    %v2856 = vld [vmem:[%s8 + $0xb0] sm:$0xf]
    %v2857 = vld [vmem:[%s8 + $0xb4] sm:$0xf]
    %v2858 = vld [vmem:[%s8 + $0xb8] sm:$0xf]
    %v2859 = vld [vmem:[%s8 + $0xbc] sm:$0xf]
    %v2860 = vld [vmem:[%s8 + $0xc0] sm:$0xf]
    %v2861 = vld [vmem:[%s8 + $0xc4] sm:$0xf]
    %v2862 = vld [vmem:[%s8 + $0xc8] sm:$0xf]
    %v2863 = vld [vmem:[%s8 + $0xcc] sm:$0xf]
    %v2864 = vld [vmem:[%s8 + $0xd0] sm:$0xf]
    %v2865 = vld [vmem:[%s8 + $0xd4] sm:$0xf]
    %v2866 = vld [vmem:[%s8 + $0xd8] sm:$0xf]
    %v2867 = vld [vmem:[%s8 + $0xdc] sm:$0xf]
    %v2868 = vld [vmem:[%s8 + $0xe0] sm:$0xf]
    %v2869 = vld [vmem:[%s8 + $0xe4] sm:$0xf]
    %v2870 = vld [vmem:[%s8 + $0xe8] sm:$0xf]
    %v2871 = vld [vmem:[%s8 + $0xec] sm:$0xf]
    %v2872 = vld [vmem:[%s8 + $0xf0] sm:$0xf]
    %v2873 = vld [vmem:[%s8 + $0xf4] sm:$0xf]
    %v2874 = vld [vmem:[%s8 + $0xf8] sm:$0xf]
    %v2875 = vld [vmem:[%s8 + $0xfc] sm:$0xf]
    %v2876 = vld [vmem:[%s8 + $0x100] sm:$0xf]
    %v2877 = vld [vmem:[%s8 + $0x104] sm:$0xf]
    %v2878 = vld [vmem:[%s8 + $0x108] sm:$0xf]
    %v2879 = vld [vmem:[%s8 + $0x10c] sm:$0xf]
    %v2880 = vld [vmem:[%s8 + $0x110] sm:$0xf]
    %v2881 = vld [vmem:[%s8 + $0x114] sm:$0xf]
    %v2882 = vld [vmem:[%s8 + $0x118] sm:$0xf]
    %v2883 = vld [vmem:[%s8 + $0x11c] sm:$0xf]
    %v2884 = vld [vmem:[%s8 + $0x120] sm:$0xf]
    %v2885 = vld [vmem:[%s8 + $0x124] sm:$0xf]
    %v2886 = vld [vmem:[%s8 + $0x128] sm:$0xf]
    %v2887 = vld [vmem:[%s8 + $0x12c] sm:$0xf]
    %v2888 = vld [vmem:[%s8 + $0x130] sm:$0xf]
    %v2889 = vld [vmem:[%s8 + $0x134] sm:$0xf]
    %v2890 = vld [vmem:[%s8 + $0x138] sm:$0xf]
    %v2891 = vld [vmem:[%s8 + $0x13c] sm:$0xf]
    %v2892 = vld [vmem:[%s8 + $0x140] sm:$0xf]
    %v2893 = vld [vmem:[%s8 + $0x144] sm:$0xf]
    %v2894 = vld [vmem:[%s8 + $0x148] sm:$0xf]
    %v2895 = vld [vmem:[%s8 + $0x14c] sm:$0xf]
    %v2896 = vld [vmem:[%s8 + $0x150] sm:$0xf]
    %v2897 = vld [vmem:[%s8 + $0x154] sm:$0xf]
    %v2898 = vld [vmem:[%s8 + $0x158] sm:$0xf]
    %v2899 = vld [vmem:[%s8 + $0x15c] sm:$0xf]
    %v2900 = vld [vmem:[%s8 + $0x160] sm:$0xf]
    %v2901 = vld [vmem:[%s8 + $0x164] sm:$0xf]
    %v2902 = vld [vmem:[%s8 + $0x168] sm:$0xf]
    %v2903 = vld [vmem:[%s8 + $0x16c] sm:$0xf]
    %v2904 = vld [vmem:[%s8 + $0x170] sm:$0xf]
    %v2905 = vld [vmem:[%s8 + $0x174] sm:$0xf]
    %v2906 = vld [vmem:[%s8 + $0x178] sm:$0xf]
    %v2907 = vld [vmem:[%s8 + $0x17c] sm:$0xf]
    %v2908 = vld [vmem:[%s8 + $0x180] sm:$0xf]
    %v2909 = vld [vmem:[%s8 + $0x184] sm:$0xf]
    %v2910 = vld [vmem:[%s8 + $0x188] sm:$0xf]
    %v2911 = vld [vmem:[%s8 + $0x18c] sm:$0xf]
    %v2912 = vld [vmem:[%s8 + $0x190] sm:$0xf]
    %v2913 = vld [vmem:[%s8 + $0x194] sm:$0xf]
    %v2914 = vld [vmem:[%s8 + $0x198] sm:$0xf]
    %v2915 = vld [vmem:[%s8 + $0x19c] sm:$0xf]
    %v2916 = vld [vmem:[%s8 + $0x1a0] sm:$0xf]
    %v2917 = vld [vmem:[%s8 + $0x1a4] sm:$0xf]
    %v2918 = vld [vmem:[%s8 + $0x1a8] sm:$0xf]
    %v2919 = vld [vmem:[%s8 + $0x1ac] sm:$0xf]
    %v2920 = vld [vmem:[%s8 + $0x1b0] sm:$0xf]
    %v2921 = vld [vmem:[%s8 + $0x1b4] sm:$0xf]
    %v2922 = vld [vmem:[%s8 + $0x1b8] sm:$0xf]
    %v2923 = vld [vmem:[%s8 + $0x1bc] sm:$0xf]
    %v2924 = vld [vmem:[%s8 + $0x1c0] sm:$0xf]
    %v2925 = vld [vmem:[%s8 + $0x1c4] sm:$0xf]
    %v2926 = vld [vmem:[%s8 + $0x1c8] sm:$0xf]
    %v2927 = vld [vmem:[%s8 + $0x1cc] sm:$0xf]
    %v2928 = vld [vmem:[%s8 + $0x1d0] sm:$0xf]
    %v2929 = vld [vmem:[%s8 + $0x1d4] sm:$0xf]
    %v2930 = vld [vmem:[%s8 + $0x1d8] sm:$0xf]
    %v2931 = vld [vmem:[%s8 + $0x1dc] sm:$0xf]
    %v2932 = vld [vmem:[%s8 + $0x1e0] sm:$0xf]
    %v2933 = vld [vmem:[%s8 + $0x1e4] sm:$0xf]
    %v2934 = vld [vmem:[%s8 + $0x1e8] sm:$0xf]
    %v2935 = vld [vmem:[%s8 + $0x1ec] sm:$0xf]
    %v2936 = vld [vmem:[%s8 + $0x1f0] sm:$0xf]
    %v2937 = vld [vmem:[%s8 + $0x1f4] sm:$0xf]
    %v2938 = vld [vmem:[%s8 + $0x1f8] sm:$0xf]
    %v2939 = vld [vmem:[%s8 + $0x1fc] sm:$0xf]
    %v2940 = vld [vmem:[%s8 + $0x200] sm:$0xf]
    %v2941 = vld [vmem:[%s8 + $0x204] sm:$0xf]
    %v2942 = vld [vmem:[%s8 + $0x208] sm:$0xf]
    %v2943 = vld [vmem:[%s8 + $0x20c] sm:$0xf]
    %v2944 = vld [vmem:[%s8 + $0x210] sm:$0xf]
    %v2945 = vld [vmem:[%s8 + $0x214] sm:$0xf]
    %v2946 = vld [vmem:[%s8 + $0x218] sm:$0xf]
    %v2947 = vld [vmem:[%s8 + $0x21c] sm:$0xf]
    %v2948 = vld [vmem:[%s8 + $0x220] sm:$0xf]
    %v2949 = vld [vmem:[%s8 + $0x224] sm:$0xf]
    %v2950 = vld [vmem:[%s8 + $0x228] sm:$0xf]
    %v2951 = vld [vmem:[%s8 + $0x22c] sm:$0xf]
    %v2952 = vld [vmem:[%s8 + $0x230] sm:$0xf]
    %v2953 = vld [vmem:[%s8 + $0x234] sm:$0xf]
    %v2954 = vld [vmem:[%s8 + $0x238] sm:$0xf]
    %v2955 = vld [vmem:[%s8 + $0x23c] sm:$0xf]
    %v2956 = vld [vmem:[%s8 + $0x240] sm:$0xf]
    %v2957 = vld [vmem:[%s8 + $0x244] sm:$0xf]
    %v2958 = vld [vmem:[%s8 + $0x248] sm:$0xf]
    %v2959 = vld [vmem:[%s8 + $0x24c] sm:$0xf]
    %v2960 = vld [vmem:[%s8 + $0x250] sm:$0xf]
    %v2961 = vld [vmem:[%s8 + $0x254] sm:$0xf]
    %v2962 = vld [vmem:[%s8 + $0x258] sm:$0xf]
    %v2963 = vld [vmem:[%s8 + $0x25c] sm:$0xf]
    %v2964 = vld [vmem:[%s8 + $0x260] sm:$0xf]
    %v2965 = vld [vmem:[%s8 + $0x264] sm:$0xf]
    %v2966 = vld [vmem:[%s8 + $0x268] sm:$0xf]
    %v2967 = vld [vmem:[%s8 + $0x26c] sm:$0xf]
    %v2968 = vld [vmem:[%s8 + $0x270] sm:$0xf]
    %v2969 = vld [vmem:[%s8 + $0x274] sm:$0xf]
    %v2970 = vld [vmem:[%s8 + $0x278] sm:$0xf]
    %v2971 = vld [vmem:[%s8 + $0x27c] sm:$0xf]
    %v2972 = vld [vmem:[%s8 + $0x280] sm:$0xf]
    %v2973 = vld [vmem:[%s8 + $0x284] sm:$0xf]
    %v2974 = vld [vmem:[%s8 + $0x288] sm:$0xf]
    %v2975 = vld [vmem:[%s8 + $0x28c] sm:$0xf]
    %v2976 = vld [vmem:[%s8 + $0x290] sm:$0xf]
    %v2977 = vld [vmem:[%s8 + $0x294] sm:$0xf]
    %v2978 = vld [vmem:[%s8 + $0x298] sm:$0xf]
    %v2979 = vld [vmem:[%s8 + $0x29c] sm:$0xf]
    %v2980 = vld [vmem:[%s8 + $0x2a0] sm:$0xf]
    %v2981 = vld [vmem:[%s8 + $0x2a4] sm:$0xf]
    %v2982 = vld [vmem:[%s8 + $0x2a8] sm:$0xf]
    %v2983 = vld [vmem:[%s8 + $0x2ac] sm:$0xf]
    %v2984 = vld [vmem:[%s8 + $0x2b0] sm:$0xf]
    %v2985 = vld [vmem:[%s8 + $0x2b4] sm:$0xf]
    %v2986 = vld [vmem:[%s8 + $0x2b8] sm:$0xf]
    %v2987 = vld [vmem:[%s8 + $0x2bc] sm:$0xf]
    %v2988 = vld [vmem:[%s8 + $0x2c0] sm:$0xf]
    %v2989 = vld [vmem:[%s8 + $0x2c4] sm:$0xf]
    %v2990 = vld [vmem:[%s8 + $0x2c8] sm:$0xf]
    %v2991 = vld [vmem:[%s8 + $0x2cc] sm:$0xf]
    %v2992 = vld [vmem:[%s8 + $0x2d0] sm:$0xf]
    %v2993 = vld [vmem:[%s8 + $0x2d4] sm:$0xf]
    %v2994 = vld [vmem:[%s8 + $0x2d8] sm:$0xf]
    %v2995 = vld [vmem:[%s8 + $0x2dc] sm:$0xf]
    %v2996 = vld [vmem:[%s8 + $0x2e0] sm:$0xf]
    %v2997 = vld [vmem:[%s8 + $0x2e4] sm:$0xf]
    %v2998 = vld [vmem:[%s8 + $0x2e8] sm:$0xf]
    %v2999 = vld [vmem:[%s8 + $0x2ec] sm:$0xf]
    %v3000 = vld [vmem:[%s8 + $0x2f0] sm:$0xf]
    %v3001 = vld [vmem:[%s8 + $0x2f4] sm:$0xf]
    %v3002 = vld [vmem:[%s8 + $0x2f8] sm:$0xf]
    %v3003 = vld [vmem:[%s8 + $0x2fc] sm:$0xf]
    %v3004 = vld [vmem:[%s8 + $0x300] sm:$0xf]
    %v3005 = vld [vmem:[%s8 + $0x304] sm:$0xf]
    %v3006 = vld [vmem:[%s8 + $0x308] sm:$0xf]
    %v3007 = vld [vmem:[%s8 + $0x30c] sm:$0xf]
    %v3008 = vld [vmem:[%s8 + $0x310] sm:$0xf]
    %v3009 = vld [vmem:[%s8 + $0x314] sm:$0xf]
    %v3010 = vld [vmem:[%s8 + $0x318] sm:$0xf]
    %v3011 = vld [vmem:[%s8 + $0x31c] sm:$0xf]
    %v3012 = vld [vmem:[%s8 + $0x320] sm:$0xf]
    %v3013 = vld [vmem:[%s8 + $0x324] sm:$0xf]
    %v3014 = vld [vmem:[%s8 + $0x328] sm:$0xf]
    %v3015 = vld [vmem:[%s8 + $0x32c] sm:$0xf]
    %v3016 = vld [vmem:[%s8 + $0x330] sm:$0xf]
    %v3017 = vld [vmem:[%s8 + $0x334] sm:$0xf]
    %v3018 = vld [vmem:[%s8 + $0x338] sm:$0xf]
    %v3019 = vld [vmem:[%s8 + $0x33c] sm:$0xf]
    %v3020 = vld [vmem:[%s8 + $0x340] sm:$0xf]
    %v3021 = vld [vmem:[%s8 + $0x344] sm:$0xf]
    %v3022 = vld [vmem:[%s8 + $0x348] sm:$0xf]
    %v3023 = vld [vmem:[%s8 + $0x34c] sm:$0xf]
    %v3024 = vld [vmem:[%s8 + $0x350] sm:$0xf]
    %v3025 = vld [vmem:[%s8 + $0x354] sm:$0xf]
    %v3026 = vld [vmem:[%s8 + $0x358] sm:$0xf]
    %v3027 = vld [vmem:[%s8 + $0x35c] sm:$0xf]
    %v3028 = vld [vmem:[%s8 + $0x360] sm:$0xf]
    %v3029 = vld [vmem:[%s8 + $0x364] sm:$0xf]
    %v3030 = vld [vmem:[%s8 + $0x368] sm:$0xf]
    %v3031 = vld [vmem:[%s8 + $0x36c] sm:$0xf]
    %v3032 = vld [vmem:[%s8 + $0x370] sm:$0xf]
    %v3033 = vld [vmem:[%s8 + $0x374] sm:$0xf]
    %v3034 = vld [vmem:[%s8 + $0x378] sm:$0xf]
    %v3035 = vld [vmem:[%s8 + $0x37c] sm:$0xf]
    %v3036 = vld [vmem:[%s8 + $0x380] sm:$0xf]
    %v3037 = vld [vmem:[%s8 + $0x384] sm:$0xf]
    %v3038 = vld [vmem:[%s8 + $0x388] sm:$0xf]
    %v3039 = vld [vmem:[%s8 + $0x38c] sm:$0xf]
    %v3040 = vld [vmem:[%s8 + $0x390] sm:$0xf]
    %v3041 = vld [vmem:[%s8 + $0x394] sm:$0xf]
    %v3042 = vld [vmem:[%s8 + $0x398] sm:$0xf]
    %v3043 = vld [vmem:[%s8 + $0x39c] sm:$0xf]
    %v3044 = vld [vmem:[%s8 + $0x3a0] sm:$0xf]
    %v3045 = vld [vmem:[%s8 + $0x3a4] sm:$0xf]
    %v3046 = vld [vmem:[%s8 + $0x3a8] sm:$0xf]
    %v3047 = vld [vmem:[%s8 + $0x3ac] sm:$0xf]
    %v3048 = vld [vmem:[%s8 + $0x3b0] sm:$0xf]
    %v3049 = vld [vmem:[%s8 + $0x3b4] sm:$0xf]
    %v3050 = vld [vmem:[%s8 + $0x3b8] sm:$0xf]
    %v3051 = vld [vmem:[%s8 + $0x3bc] sm:$0xf]
    %v3052 = vld [vmem:[%s8 + $0x3c0] sm:$0xf]
    %v3053 = vld [vmem:[%s8 + $0x3c4] sm:$0xf]
    %v3054 = vld [vmem:[%s8 + $0x3c8] sm:$0xf]
    %v3055 = vld [vmem:[%s8 + $0x3cc] sm:$0xf]
    %v3056 = vld [vmem:[%s8 + $0x3d0] sm:$0xf]
    %v3057 = vld [vmem:[%s8 + $0x3d4] sm:$0xf]
    %v3058 = vld [vmem:[%s8 + $0x3d8] sm:$0xf]
    %v3059 = vld [vmem:[%s8 + $0x3dc] sm:$0xf]
    %v3060 = vld [vmem:[%s8 + $0x3e0] sm:$0xf]
    %v3061 = vld [vmem:[%s8 + $0x3e4] sm:$0xf]
    %v3062 = vld [vmem:[%s8 + $0x3e8] sm:$0xf]
    %v3063 = vld [vmem:[%s8 + $0x3ec] sm:$0xf]
    %v3064 = vld [vmem:[%s8 + $0x3f0] sm:$0xf]
    %v3065 = vld [vmem:[%s8 + $0x3f4] sm:$0xf]
    %v3066 = vld [vmem:[%s8 + $0x3f8] sm:$0xf]
    %v3067 = vld [vmem:[%s8 + $0x3fc] sm:$0xf]
    %v3068 = vld [vmem:[%s9] sm:$0x1]
    %v3070 = vlaneseq
    %v3071 = vshrl.u32 %v3070, 7
    %v3072 = vsub.s32 0, %v3071
    %v3073 = vrot.slane %v3068, %v3072
    %v3075 = vpack.i.b16 %v2810, %v2805
    %v3076 = vpack.i.b16 %v2811, %v2806
    %v3077 = vcombine.high %v3075, %v3075
    %v3079 = vunpack.c.l.s4 1966171168
    %v3080 = vunpack.c.0.s8 %v3079
    %v3081 = vlaneseq
    %v3082 = vshrl.u32 %v3081, 7
    %v3083 = vsub.s32 %v3080, %v3082
    %v3084 = vrot.slane %v3075, %v3083
    %v3086 = vunpack.c.l.s4 1966171168
    %v3087 = vunpack.c.0.s8 %v3086
    %v3088 = vlaneseq
    %v3089 = vshrl.u32 %v3088, 7
    %v3090 = vsub.s32 %v3087, %v3089
    %v3091 = vrot.slane %v3077, %v3090
    %v3092 = vcombine.high %v3084, %v3084
    %v3093 = vcombine.high %v3091, %v3091
    %v3095 = vunpack.c.l.s4 1966171168
    %v3096 = vunpack.c.0.s8 %v3095
    %v3097 = vlaneseq
    %v3098 = vshrl.u32 %v3097, 7
    %v3099 = vsub.s32 %v3096, %v3098
    %v3100 = vrot.slane %v3084, %v3099
    %v3102 = vunpack.c.l.s4 1966171168
    %v3103 = vunpack.c.0.s8 %v3102
    %v3104 = vlaneseq
    %v3105 = vshrl.u32 %v3104, 7
    %v3106 = vsub.s32 %v3103, %v3105
    %v3107 = vrot.slane %v3091, %v3106
    %v3109 = vunpack.c.l.s4 1966171168
    %v3110 = vunpack.c.0.s8 %v3109
    %v3111 = vlaneseq
    %v3112 = vshrl.u32 %v3111, 7
    %v3113 = vsub.s32 %v3110, %v3112
    %v3114 = vrot.slane %v3092, %v3113
    %v3116 = vunpack.c.l.s4 1966171168
    %v3117 = vunpack.c.0.s8 %v3116
    %v3118 = vlaneseq
    %v3119 = vshrl.u32 %v3118, 7
    %v3120 = vsub.s32 %v3117, %v3119
    %v3121 = vrot.slane %v3093, %v3120
    %v3122 = vcombine.high %v3100, %v3100
    %v3123 = vcombine.high %v3107, %v3107
    %v3124 = vcombine.high %v3114, %v3114
    %v3125 = vcombine.high %v3121, %v3121
    %v3126 = vcombine.high %v3076, %v3076
    %v3128 = vunpack.c.l.s4 1966171168
    %v3129 = vunpack.c.0.s8 %v3128
    %v3130 = vlaneseq
    %v3131 = vshrl.u32 %v3130, 7
    %v3132 = vsub.s32 %v3129, %v3131
    %v3133 = vrot.slane %v3076, %v3132
    %v3135 = vunpack.c.l.s4 1966171168
    %v3136 = vunpack.c.0.s8 %v3135
    %v3137 = vlaneseq
    %v3138 = vshrl.u32 %v3137, 7
    %v3139 = vsub.s32 %v3136, %v3138
    %v3140 = vrot.slane %v3126, %v3139
    %v3141 = vcombine.high %v3133, %v3133
    %v3142 = vcombine.high %v3140, %v3140
    %v3144 = vunpack.c.l.s4 1966171168
    %v3145 = vunpack.c.0.s8 %v3144
    %v3146 = vlaneseq
    %v3147 = vshrl.u32 %v3146, 7
    %v3148 = vsub.s32 %v3145, %v3147
    %v3149 = vrot.slane %v3133, %v3148
    %v3151 = vunpack.c.l.s4 1966171168
    %v3152 = vunpack.c.0.s8 %v3151
    %v3153 = vlaneseq
    %v3154 = vshrl.u32 %v3153, 7
    %v3155 = vsub.s32 %v3152, %v3154
    %v3156 = vrot.slane %v3140, %v3155
    %v3158 = vunpack.c.l.s4 1966171168
    %v3159 = vunpack.c.0.s8 %v3158
    %v3160 = vlaneseq
    %v3161 = vshrl.u32 %v3160, 7
    %v3162 = vsub.s32 %v3159, %v3161
    %v3163 = vrot.slane %v3141, %v3162
    %v3165 = vunpack.c.l.s4 1966171168
    %v3166 = vunpack.c.0.s8 %v3165
    %v3167 = vlaneseq
    %v3168 = vshrl.u32 %v3167, 7
    %v3169 = vsub.s32 %v3166, %v3168
    %v3170 = vrot.slane %v3142, %v3169
    %v3171 = vcombine.high %v3149, %v3149
    %v3172 = vcombine.high %v3156, %v3156
    %v3173 = vcombine.high %v3163, %v3163
    %v3174 = vcombine.high %v3170, %v3170
    %v3447 = vunpack.c.l.b16 %v2812
    %v3448 = vunpack.c.l.b16 %v2813
    %v3449 = vunpack.c.l.b16 %v2814
    %v3450 = vunpack.c.l.b16 %v2815
    %v3451 = vunpack.c.l.b16 %v2816
    %v3452 = vunpack.c.l.b16 %v2817
    %v3453 = vunpack.c.l.b16 %v2818
    %v3454 = vunpack.c.l.b16 %v2819
    %v3455 = vunpack.c.l.b16 %v2820
    %v3456 = vunpack.c.l.b16 %v2821
    %v3457 = vunpack.c.l.b16 %v2822
    %v3458 = vunpack.c.l.b16 %v2823
    %v3459 = vunpack.c.l.b16 %v2824
    %v3460 = vunpack.c.l.b16 %v2825
    %v3461 = vunpack.c.l.b16 %v2826
    %v3462 = vunpack.c.l.b16 %v2827
    %v3463 = vunpack.c.l.b16 %v2828
    %v3464 = vunpack.c.l.b16 %v2829
    %v3465 = vunpack.c.l.b16 %v2830
    %v3466 = vunpack.c.l.b16 %v2831
    %v3467 = vunpack.c.l.b16 %v2832
    %v3468 = vunpack.c.l.b16 %v2833
    %v3469 = vunpack.c.l.b16 %v2834
    %v3470 = vunpack.c.l.b16 %v2835
    %v3471 = vunpack.c.l.b16 %v2836
    %v3472 = vunpack.c.l.b16 %v2837
    %v3473 = vunpack.c.l.b16 %v2838
    %v3474 = vunpack.c.l.b16 %v2839
    %v3475 = vunpack.c.l.b16 %v2840
    %v3476 = vunpack.c.l.b16 %v2841
    %v3477 = vunpack.c.l.b16 %v2842
    %v3478 = vunpack.c.l.b16 %v2843
    %v3479 = vunpack.c.l.b16 %v2844
    %v3480 = vunpack.c.l.b16 %v2845
    %v3481 = vunpack.c.l.b16 %v2846
    %v3482 = vunpack.c.l.b16 %v2847
    %v3483 = vunpack.c.l.b16 %v2848
    %v3484 = vunpack.c.l.b16 %v2849
    %v3485 = vunpack.c.l.b16 %v2850
    %v3486 = vunpack.c.l.b16 %v2851
    %v3487 = vunpack.c.l.b16 %v2852
    %v3488 = vunpack.c.l.b16 %v2853
    %v3489 = vunpack.c.l.b16 %v2854
    %v3490 = vunpack.c.l.b16 %v2855
    %v3491 = vunpack.c.l.b16 %v2856
    %v3492 = vunpack.c.l.b16 %v2857
    %v3493 = vunpack.c.l.b16 %v2858
    %v3494 = vunpack.c.l.b16 %v2859
    %v3495 = vunpack.c.l.b16 %v2860
    %v3496 = vunpack.c.l.b16 %v2861
    %v3497 = vunpack.c.l.b16 %v2862
    %v3498 = vunpack.c.l.b16 %v2863
    %v3499 = vunpack.c.l.b16 %v2864
    %v3500 = vunpack.c.l.b16 %v2865
    %v3501 = vunpack.c.l.b16 %v2866
    %v3502 = vunpack.c.l.b16 %v2867
    %v3503 = vunpack.c.l.b16 %v2868
    %v3504 = vunpack.c.l.b16 %v2869
    %v3505 = vunpack.c.l.b16 %v2870
    %v3506 = vunpack.c.l.b16 %v2871
    %v3507 = vunpack.c.l.b16 %v2872
    %v3508 = vunpack.c.l.b16 %v2873
    %v3509 = vunpack.c.l.b16 %v2874
    %v3510 = vunpack.c.l.b16 %v2875
    %v3511 = vunpack.c.l.b16 %v2876
    %v3512 = vunpack.c.l.b16 %v2877
    %v3513 = vunpack.c.l.b16 %v2878
    %v3514 = vunpack.c.l.b16 %v2879
    %v3515 = vunpack.c.l.b16 %v2880
    %v3516 = vunpack.c.l.b16 %v2881
    %v3517 = vunpack.c.l.b16 %v2882
    %v3518 = vunpack.c.l.b16 %v2883
    %v3519 = vunpack.c.l.b16 %v2884
    %v3520 = vunpack.c.l.b16 %v2885
    %v3521 = vunpack.c.l.b16 %v2886
    %v3522 = vunpack.c.l.b16 %v2887
    %v3523 = vunpack.c.l.b16 %v2888
    %v3524 = vunpack.c.l.b16 %v2889
    %v3525 = vunpack.c.l.b16 %v2890
    %v3526 = vunpack.c.l.b16 %v2891
    %v3527 = vunpack.c.l.b16 %v2892
    %v3528 = vunpack.c.l.b16 %v2893
    %v3529 = vunpack.c.l.b16 %v2894
    %v3530 = vunpack.c.l.b16 %v2895
    %v3531 = vunpack.c.l.b16 %v2896
    %v3532 = vunpack.c.l.b16 %v2897
    %v3533 = vunpack.c.l.b16 %v2898
    %v3534 = vunpack.c.l.b16 %v2899
    %v3535 = vunpack.c.l.b16 %v2900
    %v3536 = vunpack.c.l.b16 %v2901
    %v3537 = vunpack.c.l.b16 %v2902
    %v3538 = vunpack.c.l.b16 %v2903
    %v3539 = vunpack.c.l.b16 %v2904
    %v3540 = vunpack.c.l.b16 %v2905
    %v3541 = vunpack.c.l.b16 %v2906
    %v3542 = vunpack.c.l.b16 %v2907
    %v3543 = vunpack.c.l.b16 %v2908
    %v3544 = vunpack.c.l.b16 %v2909
    %v3545 = vunpack.c.l.b16 %v2910
    %v3546 = vunpack.c.l.b16 %v2911
    %v3547 = vunpack.c.l.b16 %v2912
    %v3548 = vunpack.c.l.b16 %v2913
    %v3549 = vunpack.c.l.b16 %v2914
    %v3550 = vunpack.c.l.b16 %v2915
    %v3551 = vunpack.c.l.b16 %v2916
    %v3552 = vunpack.c.l.b16 %v2917
    %v3553 = vunpack.c.l.b16 %v2918
    %v3554 = vunpack.c.l.b16 %v2919
    %v3555 = vunpack.c.l.b16 %v2920
    %v3556 = vunpack.c.l.b16 %v2921
    %v3557 = vunpack.c.l.b16 %v2922
    %v3558 = vunpack.c.l.b16 %v2923
    %v3559 = vunpack.c.l.b16 %v2924
    %v3560 = vunpack.c.l.b16 %v2925
    %v3561 = vunpack.c.l.b16 %v2926
    %v3562 = vunpack.c.l.b16 %v2927
    %v3563 = vunpack.c.l.b16 %v2928
    %v3564 = vunpack.c.l.b16 %v2929
    %v3565 = vunpack.c.l.b16 %v2930
    %v3566 = vunpack.c.l.b16 %v2931
    %v3567 = vunpack.c.l.b16 %v2932
    %v3568 = vunpack.c.l.b16 %v2933
    %v3569 = vunpack.c.l.b16 %v2934
    %v3570 = vunpack.c.l.b16 %v2935
    %v3571 = vunpack.c.l.b16 %v2936
    %v3572 = vunpack.c.l.b16 %v2937
    %v3573 = vunpack.c.l.b16 %v2938
    %v3574 = vunpack.c.l.b16 %v2939
    %v3575 = vunpack.c.l.b16 %v2940
    %v3576 = vunpack.c.l.b16 %v2941
    %v3577 = vunpack.c.l.b16 %v2942
    %v3578 = vunpack.c.l.b16 %v2943
    %v3579 = vunpack.c.l.b16 %v2944
    %v3580 = vunpack.c.l.b16 %v2945
    %v3581 = vunpack.c.l.b16 %v2946
    %v3582 = vunpack.c.l.b16 %v2947
    %v3583 = vunpack.c.l.b16 %v2948
    %v3584 = vunpack.c.l.b16 %v2949
    %v3585 = vunpack.c.l.b16 %v2950
    %v3586 = vunpack.c.l.b16 %v2951
    %v3587 = vunpack.c.l.b16 %v2952
    %v3588 = vunpack.c.l.b16 %v2953
    %v3589 = vunpack.c.l.b16 %v2954
    %v3590 = vunpack.c.l.b16 %v2955
    %v3591 = vunpack.c.l.b16 %v2956
    %v3592 = vunpack.c.l.b16 %v2957
    %v3593 = vunpack.c.l.b16 %v2958
    %v3594 = vunpack.c.l.b16 %v2959
    %v3595 = vunpack.c.l.b16 %v2960
    %v3596 = vunpack.c.l.b16 %v2961
    %v3597 = vunpack.c.l.b16 %v2962
    %v3598 = vunpack.c.l.b16 %v2963
    %v3599 = vunpack.c.l.b16 %v2964
    %v3600 = vunpack.c.l.b16 %v2965
    %v3601 = vunpack.c.l.b16 %v2966
    %v3602 = vunpack.c.l.b16 %v2967
    %v3603 = vunpack.c.l.b16 %v2968
    %v3604 = vunpack.c.l.b16 %v2969
    %v3605 = vunpack.c.l.b16 %v2970
    %v3606 = vunpack.c.l.b16 %v2971
    %v3607 = vunpack.c.l.b16 %v2972
    %v3608 = vunpack.c.l.b16 %v2973
    %v3609 = vunpack.c.l.b16 %v2974
    %v3610 = vunpack.c.l.b16 %v2975
    %v3611 = vunpack.c.l.b16 %v2976
    %v3612 = vunpack.c.l.b16 %v2977
    %v3613 = vunpack.c.l.b16 %v2978
    %v3614 = vunpack.c.l.b16 %v2979
    %v3615 = vunpack.c.l.b16 %v2980
    %v3616 = vunpack.c.l.b16 %v2981
    %v3617 = vunpack.c.l.b16 %v2982
    %v3618 = vunpack.c.l.b16 %v2983
    %v3619 = vunpack.c.l.b16 %v2984
    %v3620 = vunpack.c.l.b16 %v2985
    %v3621 = vunpack.c.l.b16 %v2986
    %v3622 = vunpack.c.l.b16 %v2987
    %v3623 = vunpack.c.l.b16 %v2988
    %v3624 = vunpack.c.l.b16 %v2989
    %v3625 = vunpack.c.l.b16 %v2990
    %v3626 = vunpack.c.l.b16 %v2991
    %v3627 = vunpack.c.l.b16 %v2992
    %v3628 = vunpack.c.l.b16 %v2993
    %v3629 = vunpack.c.l.b16 %v2994
    %v3630 = vunpack.c.l.b16 %v2995
    %v3631 = vunpack.c.l.b16 %v2996
    %v3632 = vunpack.c.l.b16 %v2997
    %v3633 = vunpack.c.l.b16 %v2998
    %v3634 = vunpack.c.l.b16 %v2999
    %v3635 = vunpack.c.l.b16 %v3000
    %v3636 = vunpack.c.l.b16 %v3001
    %v3637 = vunpack.c.l.b16 %v3002
    %v3638 = vunpack.c.l.b16 %v3003
    %v3639 = vunpack.c.l.b16 %v3004
    %v3640 = vunpack.c.l.b16 %v3005
    %v3641 = vunpack.c.l.b16 %v3006
    %v3642 = vunpack.c.l.b16 %v3007
    %v3643 = vunpack.c.l.b16 %v3008
    %v3644 = vunpack.c.l.b16 %v3009
    %v3645 = vunpack.c.l.b16 %v3010
    %v3646 = vunpack.c.l.b16 %v3011
    %v3647 = vunpack.c.l.b16 %v3012
    %v3648 = vunpack.c.l.b16 %v3013
    %v3649 = vunpack.c.l.b16 %v3014
    %v3650 = vunpack.c.l.b16 %v3015
    %v3651 = vunpack.c.l.b16 %v3016
    %v3652 = vunpack.c.l.b16 %v3017
    %v3653 = vunpack.c.l.b16 %v3018
    %v3654 = vunpack.c.l.b16 %v3019
    %v3655 = vunpack.c.l.b16 %v3020
    %v3656 = vunpack.c.l.b16 %v3021
    %v3657 = vunpack.c.l.b16 %v3022
    %v3658 = vunpack.c.l.b16 %v3023
    %v3659 = vunpack.c.l.b16 %v3024
    %v3660 = vunpack.c.l.b16 %v3025
    %v3661 = vunpack.c.l.b16 %v3026
    %v3662 = vunpack.c.l.b16 %v3027
    %v3663 = vunpack.c.l.b16 %v3028
    %v3664 = vunpack.c.l.b16 %v3029
    %v3665 = vunpack.c.l.b16 %v3030
    %v3666 = vunpack.c.l.b16 %v3031
    %v3667 = vunpack.c.l.b16 %v3032
    %v3668 = vunpack.c.l.b16 %v3033
    %v3669 = vunpack.c.l.b16 %v3034
    %v3670 = vunpack.c.l.b16 %v3035
    %v3671 = vunpack.c.l.b16 %v3036
    %v3672 = vunpack.c.l.b16 %v3037
    %v3673 = vunpack.c.l.b16 %v3038
    %v3674 = vunpack.c.l.b16 %v3039
    %v3675 = vunpack.c.l.b16 %v3040
    %v3676 = vunpack.c.l.b16 %v3041
    %v3677 = vunpack.c.l.b16 %v3042
    %v3678 = vunpack.c.l.b16 %v3043
    %v3679 = vunpack.c.l.b16 %v3044
    %v3680 = vunpack.c.l.b16 %v3045
    %v3681 = vunpack.c.l.b16 %v3046
    %v3682 = vunpack.c.l.b16 %v3047
    %v3683 = vunpack.c.l.b16 %v3048
    %v3684 = vunpack.c.l.b16 %v3049
    %v3685 = vunpack.c.l.b16 %v3050
    %v3686 = vunpack.c.l.b16 %v3051
    %v3687 = vunpack.c.l.b16 %v3052
    %v3688 = vunpack.c.l.b16 %v3053
    %v3689 = vunpack.c.l.b16 %v3054
    %v3690 = vunpack.c.l.b16 %v3055
    %v3691 = vunpack.c.l.b16 %v3056
    %v3692 = vunpack.c.l.b16 %v3057
    %v3693 = vunpack.c.l.b16 %v3058
    %v3694 = vunpack.c.l.b16 %v3059
    %v3695 = vunpack.c.l.b16 %v3060
    %v3696 = vunpack.c.l.b16 %v3061
    %v3697 = vunpack.c.l.b16 %v3062
    %v3698 = vunpack.c.l.b16 %v3063
    %v3699 = vunpack.c.l.b16 %v3064
    %v3700 = vunpack.c.l.b16 %v3065
    %v3701 = vunpack.c.l.b16 %v3066
    %v3702 = vunpack.c.l.b16 %v3067
    %v3703 = vpack.c.b16 %v3448, %v3447
    %v3704 = vpack.c.b16 %v3450, %v3449
    %v3705 = vpack.c.b16 %v3452, %v3451
    %v3706 = vpack.c.b16 %v3454, %v3453
    %v3707 = vpack.c.b16 %v3456, %v3455
    %v3708 = vpack.c.b16 %v3458, %v3457
    %v3709 = vpack.c.b16 %v3460, %v3459
    %v3710 = vpack.c.b16 %v3462, %v3461
    %v3711 = vpack.c.b16 %v3464, %v3463
    %v3712 = vpack.c.b16 %v3466, %v3465
    %v3713 = vpack.c.b16 %v3468, %v3467
    %v3714 = vpack.c.b16 %v3470, %v3469
    %v3715 = vpack.c.b16 %v3472, %v3471
    %v3716 = vpack.c.b16 %v3474, %v3473
    %v3717 = vpack.c.b16 %v3476, %v3475
    %v3718 = vpack.c.b16 %v3478, %v3477
    %v3719 = vpack.c.b16 %v3480, %v3479
    %v3720 = vpack.c.b16 %v3482, %v3481
    %v3721 = vpack.c.b16 %v3484, %v3483
    %v3722 = vpack.c.b16 %v3486, %v3485
    %v3723 = vpack.c.b16 %v3488, %v3487
    %v3724 = vpack.c.b16 %v3490, %v3489
    %v3725 = vpack.c.b16 %v3492, %v3491
    %v3726 = vpack.c.b16 %v3494, %v3493
    %v3727 = vpack.c.b16 %v3496, %v3495
    %v3728 = vpack.c.b16 %v3498, %v3497
    %v3729 = vpack.c.b16 %v3500, %v3499
    %v3730 = vpack.c.b16 %v3502, %v3501
    %v3731 = vpack.c.b16 %v3504, %v3503
    %v3732 = vpack.c.b16 %v3506, %v3505
    %v3733 = vpack.c.b16 %v3508, %v3507
    %v3734 = vpack.c.b16 %v3510, %v3509
    %v3735 = vpack.c.b16 %v3512, %v3511
    %v3736 = vpack.c.b16 %v3514, %v3513
    %v3737 = vpack.c.b16 %v3516, %v3515
    %v3738 = vpack.c.b16 %v3518, %v3517
    %v3739 = vpack.c.b16 %v3520, %v3519
    %v3740 = vpack.c.b16 %v3522, %v3521
    %v3741 = vpack.c.b16 %v3524, %v3523
    %v3742 = vpack.c.b16 %v3526, %v3525
    %v3743 = vpack.c.b16 %v3528, %v3527
    %v3744 = vpack.c.b16 %v3530, %v3529
    %v3745 = vpack.c.b16 %v3532, %v3531
    %v3746 = vpack.c.b16 %v3534, %v3533
    %v3747 = vpack.c.b16 %v3536, %v3535
    %v3748 = vpack.c.b16 %v3538, %v3537
    %v3749 = vpack.c.b16 %v3540, %v3539
    %v3750 = vpack.c.b16 %v3542, %v3541
    %v3751 = vpack.c.b16 %v3544, %v3543
    %v3752 = vpack.c.b16 %v3546, %v3545
    %v3753 = vpack.c.b16 %v3548, %v3547
    %v3754 = vpack.c.b16 %v3550, %v3549
    %v3755 = vpack.c.b16 %v3552, %v3551
    %v3756 = vpack.c.b16 %v3554, %v3553
    %v3757 = vpack.c.b16 %v3556, %v3555
    %v3758 = vpack.c.b16 %v3558, %v3557
    %v3759 = vpack.c.b16 %v3560, %v3559
    %v3760 = vpack.c.b16 %v3562, %v3561
    %v3761 = vpack.c.b16 %v3564, %v3563
    %v3762 = vpack.c.b16 %v3566, %v3565
    %v3763 = vpack.c.b16 %v3568, %v3567
    %v3764 = vpack.c.b16 %v3570, %v3569
    %v3765 = vpack.c.b16 %v3572, %v3571
    %v3766 = vpack.c.b16 %v3574, %v3573
    %v3767 = vpack.c.b16 %v3576, %v3575
    %v3768 = vpack.c.b16 %v3578, %v3577
    %v3769 = vpack.c.b16 %v3580, %v3579
    %v3770 = vpack.c.b16 %v3582, %v3581
    %v3771 = vpack.c.b16 %v3584, %v3583
    %v3772 = vpack.c.b16 %v3586, %v3585
    %v3773 = vpack.c.b16 %v3588, %v3587
    %v3774 = vpack.c.b16 %v3590, %v3589
    %v3775 = vpack.c.b16 %v3592, %v3591
    %v3776 = vpack.c.b16 %v3594, %v3593
    %v3777 = vpack.c.b16 %v3596, %v3595
    %v3778 = vpack.c.b16 %v3598, %v3597
    %v3779 = vpack.c.b16 %v3600, %v3599
    %v3780 = vpack.c.b16 %v3602, %v3601
    %v3781 = vpack.c.b16 %v3604, %v3603
    %v3782 = vpack.c.b16 %v3606, %v3605
    %v3783 = vpack.c.b16 %v3608, %v3607
    %v3784 = vpack.c.b16 %v3610, %v3609
    %v3785 = vpack.c.b16 %v3612, %v3611
    %v3786 = vpack.c.b16 %v3614, %v3613
    %v3787 = vpack.c.b16 %v3616, %v3615
    %v3788 = vpack.c.b16 %v3618, %v3617
    %v3789 = vpack.c.b16 %v3620, %v3619
    %v3790 = vpack.c.b16 %v3622, %v3621
    %v3791 = vpack.c.b16 %v3624, %v3623
    %v3792 = vpack.c.b16 %v3626, %v3625
    %v3793 = vpack.c.b16 %v3628, %v3627
    %v3794 = vpack.c.b16 %v3630, %v3629
    %v3795 = vpack.c.b16 %v3632, %v3631
    %v3796 = vpack.c.b16 %v3634, %v3633
    %v3797 = vpack.c.b16 %v3636, %v3635
    %v3798 = vpack.c.b16 %v3638, %v3637
    %v3799 = vpack.c.b16 %v3640, %v3639
    %v3800 = vpack.c.b16 %v3642, %v3641
    %v3801 = vpack.c.b16 %v3644, %v3643
    %v3802 = vpack.c.b16 %v3646, %v3645
    %v3803 = vpack.c.b16 %v3648, %v3647
    %v3804 = vpack.c.b16 %v3650, %v3649
    %v3805 = vpack.c.b16 %v3652, %v3651
    %v3806 = vpack.c.b16 %v3654, %v3653
    %v3807 = vpack.c.b16 %v3656, %v3655
    %v3808 = vpack.c.b16 %v3658, %v3657
    %v3809 = vpack.c.b16 %v3660, %v3659
    %v3810 = vpack.c.b16 %v3662, %v3661
    %v3811 = vpack.c.b16 %v3664, %v3663
    %v3812 = vpack.c.b16 %v3666, %v3665
    %v3813 = vpack.c.b16 %v3668, %v3667
    %v3814 = vpack.c.b16 %v3670, %v3669
    %v3815 = vpack.c.b16 %v3672, %v3671
    %v3816 = vpack.c.b16 %v3674, %v3673
    %v3817 = vpack.c.b16 %v3676, %v3675
    %v3818 = vpack.c.b16 %v3678, %v3677
    %v3819 = vpack.c.b16 %v3680, %v3679
    %v3820 = vpack.c.b16 %v3682, %v3681
    %v3821 = vpack.c.b16 %v3684, %v3683
    %v3822 = vpack.c.b16 %v3686, %v3685
    %v3823 = vpack.c.b16 %v3688, %v3687
    %v3824 = vpack.c.b16 %v3690, %v3689
    %v3825 = vpack.c.b16 %v3692, %v3691
    %v3826 = vpack.c.b16 %v3694, %v3693
    %v3827 = vpack.c.b16 %v3696, %v3695
    %v3828 = vpack.c.b16 %v3698, %v3697
    %v3829 = vpack.c.b16 %v3700, %v3699
    %v3830 = vpack.c.b16 %v3702, %v3701
    %3959 = vmatprep.subr.bf16.mxu0 0
    %3960 = vmatpush1.bf16.msra.mxu0 %v3710
    %3961 = vmatprep.subr.bf16.mxu0 0
    %3962 = vmatpush1.bf16.msra.mxu0 %v3709
    %3963 = vmatprep.subr.bf16.mxu0 0
    %3964 = vmatpush1.bf16.msra.mxu0 %v3708
    %3965 = vmatprep.subr.bf16.mxu0 0
    %3966 = vmatpush1.bf16.msra.mxu0 %v3707
    %3967 = vmatprep.subr.bf16.mxu0 0
    %3968 = vmatpush1.bf16.msra.mxu0 %v3706
    %3969 = vmatprep.subr.bf16.mxu0 0
    %3970 = vmatpush1.bf16.msra.mxu0 %v3705
    %3971 = vmatprep.subr.bf16.mxu0 0
    %3972 = vmatpush1.bf16.msra.mxu0 %v3704
    %3973 = vmatprep.subr.bf16.mxu0 0
    %3974 = vmatpush1.bf16.msra.mxu0 %v3703
    %3975 = vmatprep.subr.bf16.mxu0 0
    %3976 = vmatpush2.bf16.msra.mxu0 %v3718
    %3977 = vmatprep.subr.bf16.mxu0 0
    %3978 = vmatpush2.bf16.msra.mxu0 %v3717
    %3979 = vmatprep.subr.bf16.mxu0 0
    %3980 = vmatpush2.bf16.msra.mxu0 %v3716
    %3981 = vmatprep.subr.bf16.mxu0 0
    %3982 = vmatpush2.bf16.msra.mxu0 %v3715
    %3983 = vmatprep.subr.bf16.mxu0 0
    %3984 = vmatpush2.bf16.msra.mxu0 %v3714
    %3985 = vmatprep.subr.bf16.mxu0 0
    %3986 = vmatpush2.bf16.msra.mxu0 %v3713
    %3987 = vmatprep.subr.bf16.mxu0 0
    %3988 = vmatpush2.bf16.msra.mxu0 %v3712
    %3989 = vmatprep.subr.bf16.mxu0 0
    %3990 = vmatpush2.bf16.msra.mxu0 %v3711
    %3991 = vmatprep.mubr.bf16.mxu0 %v3114
    %3992 = vmatmul.mubr.bf16.gmra.mxu0 %v3100
    %v3993 = vpop.f32.mrf.mxu0
    %v3994 = vadd.f32 %v3073, %v3993
    %v3995 = vpop.f32.mrf.mxu0
    %v3996 = vpop.f32.mrf.mxu0
    %v3997 = vpop.f32.mrf.mxu0
    %3998 = vdwg.mxu0
    %3999 = vmatprep.subr.bf16.mxu0 0
    %4000 = vmatpush1.bf16.msra.mxu0 %v3726
    %4001 = vmatprep.subr.bf16.mxu0 0
    %4002 = vmatpush1.bf16.msra.mxu0 %v3725
    %4003 = vmatprep.subr.bf16.mxu0 0
    %4004 = vmatpush1.bf16.msra.mxu0 %v3724
    %4005 = vmatprep.subr.bf16.mxu0 0
    %4006 = vmatpush1.bf16.msra.mxu0 %v3723
    %4007 = vmatprep.subr.bf16.mxu0 0
    %4008 = vmatpush1.bf16.msra.mxu0 %v3722
    %4009 = vmatprep.subr.bf16.mxu0 0
    %4010 = vmatpush1.bf16.msra.mxu0 %v3721
    %4011 = vmatprep.subr.bf16.mxu0 0
    %4012 = vmatpush1.bf16.msra.mxu0 %v3720
    %4013 = vmatprep.subr.bf16.mxu0 0
    %4014 = vmatpush1.bf16.msra.mxu0 %v3719
    %4015 = vmatprep.subr.bf16.mxu0 0
    %4016 = vmatpush2.bf16.msra.mxu0 %v3734
    %4017 = vmatprep.subr.bf16.mxu0 0
    %4018 = vmatpush2.bf16.msra.mxu0 %v3733
    %4019 = vmatprep.subr.bf16.mxu0 0
    %4020 = vmatpush2.bf16.msra.mxu0 %v3732
    %4021 = vmatprep.subr.bf16.mxu0 0
    %4022 = vmatpush2.bf16.msra.mxu0 %v3731
    %4023 = vmatprep.subr.bf16.mxu0 0
    %4024 = vmatpush2.bf16.msra.mxu0 %v3730
    %4025 = vmatprep.subr.bf16.mxu0 0
    %4026 = vmatpush2.bf16.msra.mxu0 %v3729
    %4027 = vmatprep.subr.bf16.mxu0 0
    %4028 = vmatpush2.bf16.msra.mxu0 %v3728
    %4029 = vmatprep.subr.bf16.mxu0 0
    %4030 = vmatpush2.bf16.msra.mxu0 %v3727
    %4031 = vmatprep.mubr.bf16.mxu0 %v3124
    %4032 = vmatmul.mubr.bf16.gmra.mxu0 %v3122
    %v4033 = vpop.f32.mrf.mxu0
    %v4034 = vadd.f32 %v3994, %v4033
    %v4035 = vpop.f32.mrf.mxu0
    %v4036 = vpop.f32.mrf.mxu0
    %v4037 = vpop.f32.mrf.mxu0
    %4038 = vdwg.mxu0
    %4039 = vmatprep.subr.bf16.mxu0 0
    %4040 = vmatpush1.bf16.msra.mxu0 %v3742
    %4041 = vmatprep.subr.bf16.mxu0 0
    %4042 = vmatpush1.bf16.msra.mxu0 %v3741
    %4043 = vmatprep.subr.bf16.mxu0 0
    %4044 = vmatpush1.bf16.msra.mxu0 %v3740
    %4045 = vmatprep.subr.bf16.mxu0 0
    %4046 = vmatpush1.bf16.msra.mxu0 %v3739
    %4047 = vmatprep.subr.bf16.mxu0 0
    %4048 = vmatpush1.bf16.msra.mxu0 %v3738
    %4049 = vmatprep.subr.bf16.mxu0 0
    %4050 = vmatpush1.bf16.msra.mxu0 %v3737
    %4051 = vmatprep.subr.bf16.mxu0 0
    %4052 = vmatpush1.bf16.msra.mxu0 %v3736
    %4053 = vmatprep.subr.bf16.mxu0 0
    %4054 = vmatpush1.bf16.msra.mxu0 %v3735
    %4055 = vmatprep.subr.bf16.mxu0 0
    %4056 = vmatpush2.bf16.msra.mxu0 %v3750
    %4057 = vmatprep.subr.bf16.mxu0 0
    %4058 = vmatpush2.bf16.msra.mxu0 %v3749
    %4059 = vmatprep.subr.bf16.mxu0 0
    %4060 = vmatpush2.bf16.msra.mxu0 %v3748
    %4061 = vmatprep.subr.bf16.mxu0 0
    %4062 = vmatpush2.bf16.msra.mxu0 %v3747
    %4063 = vmatprep.subr.bf16.mxu0 0
    %4064 = vmatpush2.bf16.msra.mxu0 %v3746
    %4065 = vmatprep.subr.bf16.mxu0 0
    %4066 = vmatpush2.bf16.msra.mxu0 %v3745
    %4067 = vmatprep.subr.bf16.mxu0 0
    %4068 = vmatpush2.bf16.msra.mxu0 %v3744
    %4069 = vmatprep.subr.bf16.mxu0 0
    %4070 = vmatpush2.bf16.msra.mxu0 %v3743
    %4071 = vmatprep.mubr.bf16.mxu0 %v3121
    %4072 = vmatmul.mubr.bf16.gmra.mxu0 %v3107
    %v4073 = vpop.f32.mrf.mxu0
    %v4074 = vadd.f32 %v4034, %v4073
    %v4075 = vpop.f32.mrf.mxu0
    %v4076 = vpop.f32.mrf.mxu0
    %v4077 = vpop.f32.mrf.mxu0
    %4078 = vdwg.mxu0
    %4079 = vmatprep.subr.bf16.mxu0 0
    %4080 = vmatpush1.bf16.msra.mxu0 %v3758
    %4081 = vmatprep.subr.bf16.mxu0 0
    %4082 = vmatpush1.bf16.msra.mxu0 %v3757
    %4083 = vmatprep.subr.bf16.mxu0 0
    %4084 = vmatpush1.bf16.msra.mxu0 %v3756
    %4085 = vmatprep.subr.bf16.mxu0 0
    %4086 = vmatpush1.bf16.msra.mxu0 %v3755
    %4087 = vmatprep.subr.bf16.mxu0 0
    %4088 = vmatpush1.bf16.msra.mxu0 %v3754
    %4089 = vmatprep.subr.bf16.mxu0 0
    %4090 = vmatpush1.bf16.msra.mxu0 %v3753
    %4091 = vmatprep.subr.bf16.mxu0 0
    %4092 = vmatpush1.bf16.msra.mxu0 %v3752
    %4093 = vmatprep.subr.bf16.mxu0 0
    %4094 = vmatpush1.bf16.msra.mxu0 %v3751
    %4095 = vmatprep.subr.bf16.mxu0 0
    %4096 = vmatpush2.bf16.msra.mxu0 %v3766
    %4097 = vmatprep.subr.bf16.mxu0 0
    %4098 = vmatpush2.bf16.msra.mxu0 %v3765
    %4099 = vmatprep.subr.bf16.mxu0 0
    %4100 = vmatpush2.bf16.msra.mxu0 %v3764
    %4101 = vmatprep.subr.bf16.mxu0 0
    %4102 = vmatpush2.bf16.msra.mxu0 %v3763
    %4103 = vmatprep.subr.bf16.mxu0 0
    %4104 = vmatpush2.bf16.msra.mxu0 %v3762
    %4105 = vmatprep.subr.bf16.mxu0 0
    %4106 = vmatpush2.bf16.msra.mxu0 %v3761
    %4107 = vmatprep.subr.bf16.mxu0 0
    %4108 = vmatpush2.bf16.msra.mxu0 %v3760
    %4109 = vmatprep.subr.bf16.mxu0 0
    %4110 = vmatpush2.bf16.msra.mxu0 %v3759
    %4111 = vmatprep.mubr.bf16.mxu0 %v3125
    %4112 = vmatmul.mubr.bf16.gmra.mxu0 %v3123
    %v4113 = vpop.f32.mrf.mxu0
    %v4114 = vadd.f32 %v4074, %v4113
    %v4115 = vpop.f32.mrf.mxu0
    %v4116 = vpop.f32.mrf.mxu0
    %v4117 = vpop.f32.mrf.mxu0
    %4118 = vdwg.mxu0
    %4119 = vmatprep.subr.bf16.mxu0 0
    %4120 = vmatpush1.bf16.msra.mxu0 %v3774
    %4121 = vmatprep.subr.bf16.mxu0 0
    %4122 = vmatpush1.bf16.msra.mxu0 %v3773
    %4123 = vmatprep.subr.bf16.mxu0 0
    %4124 = vmatpush1.bf16.msra.mxu0 %v3772
    %4125 = vmatprep.subr.bf16.mxu0 0
    %4126 = vmatpush1.bf16.msra.mxu0 %v3771
    %4127 = vmatprep.subr.bf16.mxu0 0
    %4128 = vmatpush1.bf16.msra.mxu0 %v3770
    %4129 = vmatprep.subr.bf16.mxu0 0
    %4130 = vmatpush1.bf16.msra.mxu0 %v3769
    %4131 = vmatprep.subr.bf16.mxu0 0
    %4132 = vmatpush1.bf16.msra.mxu0 %v3768
    %4133 = vmatprep.subr.bf16.mxu0 0
    %4134 = vmatpush1.bf16.msra.mxu0 %v3767
    %4135 = vmatprep.subr.bf16.mxu0 0
    %4136 = vmatpush2.bf16.msra.mxu0 %v3782
    %4137 = vmatprep.subr.bf16.mxu0 0
    %4138 = vmatpush2.bf16.msra.mxu0 %v3781
    %4139 = vmatprep.subr.bf16.mxu0 0
    %4140 = vmatpush2.bf16.msra.mxu0 %v3780
    %4141 = vmatprep.subr.bf16.mxu0 0
    %4142 = vmatpush2.bf16.msra.mxu0 %v3779
    %4143 = vmatprep.subr.bf16.mxu0 0
    %4144 = vmatpush2.bf16.msra.mxu0 %v3778
    %4145 = vmatprep.subr.bf16.mxu0 0
    %4146 = vmatpush2.bf16.msra.mxu0 %v3777
    %4147 = vmatprep.subr.bf16.mxu0 0
    %4148 = vmatpush2.bf16.msra.mxu0 %v3776
    %4149 = vmatprep.subr.bf16.mxu0 0
    %4150 = vmatpush2.bf16.msra.mxu0 %v3775
    %4151 = vmatprep.mubr.bf16.mxu0 %v3163
    %4152 = vmatmul.mubr.bf16.gmra.mxu0 %v3149
    %v4153 = vpop.f32.mrf.mxu0
    %v4154 = vadd.f32 %v4114, %v4153
    %v4155 = vpop.f32.mrf.mxu0
    %v4156 = vpop.f32.mrf.mxu0
    %v4157 = vpop.f32.mrf.mxu0
    %4158 = vdwg.mxu0
    %4159 = vmatprep.subr.bf16.mxu0 0
    %4160 = vmatpush1.bf16.msra.mxu0 %v3790
    %4161 = vmatprep.subr.bf16.mxu0 0
    %4162 = vmatpush1.bf16.msra.mxu0 %v3789
    %4163 = vmatprep.subr.bf16.mxu0 0
    %4164 = vmatpush1.bf16.msra.mxu0 %v3788
    %4165 = vmatprep.subr.bf16.mxu0 0
    %4166 = vmatpush1.bf16.msra.mxu0 %v3787
    %4167 = vmatprep.subr.bf16.mxu0 0
    %4168 = vmatpush1.bf16.msra.mxu0 %v3786
    %4169 = vmatprep.subr.bf16.mxu0 0
    %4170 = vmatpush1.bf16.msra.mxu0 %v3785
    %4171 = vmatprep.subr.bf16.mxu0 0
    %4172 = vmatpush1.bf16.msra.mxu0 %v3784
    %4173 = vmatprep.subr.bf16.mxu0 0
    %4174 = vmatpush1.bf16.msra.mxu0 %v3783
    %4175 = vmatprep.subr.bf16.mxu0 0
    %4176 = vmatpush2.bf16.msra.mxu0 %v3798
    %4177 = vmatprep.subr.bf16.mxu0 0
    %4178 = vmatpush2.bf16.msra.mxu0 %v3797
    %4179 = vmatprep.subr.bf16.mxu0 0
    %4180 = vmatpush2.bf16.msra.mxu0 %v3796
    %4181 = vmatprep.subr.bf16.mxu0 0
    %4182 = vmatpush2.bf16.msra.mxu0 %v3795
    %4183 = vmatprep.subr.bf16.mxu0 0
    %4184 = vmatpush2.bf16.msra.mxu0 %v3794
    %4185 = vmatprep.subr.bf16.mxu0 0
    %4186 = vmatpush2.bf16.msra.mxu0 %v3793
    %4187 = vmatprep.subr.bf16.mxu0 0
    %4188 = vmatpush2.bf16.msra.mxu0 %v3792
    %4189 = vmatprep.subr.bf16.mxu0 0
    %4190 = vmatpush2.bf16.msra.mxu0 %v3791
    %4191 = vmatprep.mubr.bf16.mxu0 %v3173
    %4192 = vmatmul.mubr.bf16.gmra.mxu0 %v3171
    %v4193 = vpop.f32.mrf.mxu0
    %v4194 = vadd.f32 %v4154, %v4193
    %v4195 = vpop.f32.mrf.mxu0
    %v4196 = vpop.f32.mrf.mxu0
    %v4197 = vpop.f32.mrf.mxu0
    %4198 = vdwg.mxu0
    %4199 = vmatprep.subr.bf16.mxu0 0
    %4200 = vmatpush1.bf16.msra.mxu0 %v3806
    %4201 = vmatprep.subr.bf16.mxu0 0
    %4202 = vmatpush1.bf16.msra.mxu0 %v3805
    %4203 = vmatprep.subr.bf16.mxu0 0
    %4204 = vmatpush1.bf16.msra.mxu0 %v3804
    %4205 = vmatprep.subr.bf16.mxu0 0
    %4206 = vmatpush1.bf16.msra.mxu0 %v3803
    %4207 = vmatprep.subr.bf16.mxu0 0
    %4208 = vmatpush1.bf16.msra.mxu0 %v3802
    %4209 = vmatprep.subr.bf16.mxu0 0
    %4210 = vmatpush1.bf16.msra.mxu0 %v3801
    %4211 = vmatprep.subr.bf16.mxu0 0
    %4212 = vmatpush1.bf16.msra.mxu0 %v3800
    %4213 = vmatprep.subr.bf16.mxu0 0
    %4214 = vmatpush1.bf16.msra.mxu0 %v3799
    %4215 = vmatprep.subr.bf16.mxu0 0
    %4216 = vmatpush2.bf16.msra.mxu0 %v3814
    %4217 = vmatprep.subr.bf16.mxu0 0
    %4218 = vmatpush2.bf16.msra.mxu0 %v3813
    %4219 = vmatprep.subr.bf16.mxu0 0
    %4220 = vmatpush2.bf16.msra.mxu0 %v3812
    %4221 = vmatprep.subr.bf16.mxu0 0
    %4222 = vmatpush2.bf16.msra.mxu0 %v3811
    %4223 = vmatprep.subr.bf16.mxu0 0
    %4224 = vmatpush2.bf16.msra.mxu0 %v3810
    %4225 = vmatprep.subr.bf16.mxu0 0
    %4226 = vmatpush2.bf16.msra.mxu0 %v3809
    %4227 = vmatprep.subr.bf16.mxu0 0
    %4228 = vmatpush2.bf16.msra.mxu0 %v3808
    %4229 = vmatprep.subr.bf16.mxu0 0
    %4230 = vmatpush2.bf16.msra.mxu0 %v3807
    %4231 = vmatprep.mubr.bf16.mxu0 %v3170
    %4232 = vmatmul.mubr.bf16.gmra.mxu0 %v3156
    %v4233 = vpop.f32.mrf.mxu0
    %v4234 = vadd.f32 %v4194, %v4233
    %v4235 = vpop.f32.mrf.mxu0
    %v4236 = vpop.f32.mrf.mxu0
    %v4237 = vpop.f32.mrf.mxu0
    %4238 = vdwg.mxu0
    %4239 = vmatprep.subr.bf16.mxu0 0
    %4240 = vmatpush1.bf16.msra.mxu0 %v3822
    %4241 = vmatprep.subr.bf16.mxu0 0
    %4242 = vmatpush1.bf16.msra.mxu0 %v3821
    %4243 = vmatprep.subr.bf16.mxu0 0
    %4244 = vmatpush1.bf16.msra.mxu0 %v3820
    %4245 = vmatprep.subr.bf16.mxu0 0
    %4246 = vmatpush1.bf16.msra.mxu0 %v3819
    %4247 = vmatprep.subr.bf16.mxu0 0
    %4248 = vmatpush1.bf16.msra.mxu0 %v3818
    %4249 = vmatprep.subr.bf16.mxu0 0
    %4250 = vmatpush1.bf16.msra.mxu0 %v3817
    %4251 = vmatprep.subr.bf16.mxu0 0
    %4252 = vmatpush1.bf16.msra.mxu0 %v3816
    %4253 = vmatprep.subr.bf16.mxu0 0
    %4254 = vmatpush1.bf16.msra.mxu0 %v3815
    %4255 = vmatprep.subr.bf16.mxu0 0
    %4256 = vmatpush2.bf16.msra.mxu0 %v3830
    %4257 = vmatprep.subr.bf16.mxu0 0
    %4258 = vmatpush2.bf16.msra.mxu0 %v3829
    %4259 = vmatprep.subr.bf16.mxu0 0
    %4260 = vmatpush2.bf16.msra.mxu0 %v3828
    %4261 = vmatprep.subr.bf16.mxu0 0
    %4262 = vmatpush2.bf16.msra.mxu0 %v3827
    %4263 = vmatprep.subr.bf16.mxu0 0
    %4264 = vmatpush2.bf16.msra.mxu0 %v3826
    %4265 = vmatprep.subr.bf16.mxu0 0
    %4266 = vmatpush2.bf16.msra.mxu0 %v3825
    %4267 = vmatprep.subr.bf16.mxu0 0
    %4268 = vmatpush2.bf16.msra.mxu0 %v3824
    %4269 = vmatprep.subr.bf16.mxu0 0
    %4270 = vmatpush2.bf16.msra.mxu0 %v3823
    %4271 = vmatprep.mubr.bf16.mxu0 %v3174
    %4272 = vmatmul.mubr.bf16.gmra.mxu0 %v3172
    %v4273 = vpop.f32.mrf.mxu0
    %v4274 = vadd.f32 %v4234, %v4273
    %v4275 = vpop.f32.mrf.mxu0
    %v4276 = vpop.f32.mrf.mxu0
    %v4277 = vpop.f32.mrf.mxu0
    %4278 = vdwg.mxu0
    %v4279 = vmax.f32 %v4274, 0.0
    %v4280 = vpack.c.bf16 %v4279, %v4279
    %v4281 = vld [vmem:[%s10] sm:$0xf]
    %v4282 = vld [vmem:[%s10 + $0x4] sm:$0xf]
    %v4283 = vld [vmem:[%s10 + $0x8] sm:$0xf]
    %v4284 = vld [vmem:[%s10 + $0xc] sm:$0xf]
    %v4285 = vld [vmem:[%s11] sm:$0x1]
    %v4287 = vlaneseq
    %v4288 = vshrl.u32 %v4287, 7
    %v4289 = vsub.s32 0, %v4288
    %v4290 = vrot.slane %v4285, %v4289
    %v4296 = vunpack.c.l.b16 %v4281
    %v4297 = vunpack.c.l.b16 %v4282
    %v4298 = vunpack.c.l.b16 %v4283
    %v4299 = vunpack.c.l.b16 %v4284
    %v4300 = vpack.c.b16 %v4297, %v4296
    %v4301 = vpack.c.b16 %v4299, %v4298
    %v4305 = vsel %vm2690, %v4280, 0
    %4307 = vmatprep.subr.bf16.mxu0 0
    %4308 = vmatpush1.bf16.msra.mxu0 0
    %4309 = vmatprep.subr.bf16.mxu0 0
    %4310 = vmatpush1.bf16.msra.mxu0 0
    %4311 = vmatprep.subr.bf16.mxu0 0
    %4312 = vmatpush1.bf16.msra.mxu0 0
    %4313 = vmatprep.subr.bf16.mxu0 0
    %4314 = vmatpush1.bf16.msra.mxu0 0
    %4315 = vmatprep.subr.bf16.mxu0 0
    %4316 = vmatpush1.bf16.msra.mxu0 0
    %4317 = vmatprep.subr.bf16.mxu0 0
    %4318 = vmatpush1.bf16.msra.mxu0 0
    %4319 = vmatprep.subr.bf16.mxu0 0
    %4320 = vmatpush1.bf16.msra.mxu0 %v4301
    %4321 = vmatprep.subr.bf16.mxu0 0
    %4322 = vmatpush1.bf16.msra.mxu0 %v4300
    %4323 = vmatprep.subr.bf16.mxu0 0
    %4324 = vmatpush2.bf16.msra.mxu0 0
    %4325 = vmatprep.subr.bf16.mxu0 0
    %4326 = vmatpush2.bf16.msra.mxu0 0
    %4327 = vmatprep.subr.bf16.mxu0 0
    %4328 = vmatpush2.bf16.msra.mxu0 0
    %4329 = vmatprep.subr.bf16.mxu0 0
    %4330 = vmatpush2.bf16.msra.mxu0 0
    %4331 = vmatprep.subr.bf16.mxu0 0
    %4332 = vmatpush2.bf16.msra.mxu0 0
    %4333 = vmatprep.subr.bf16.mxu0 0
    %4334 = vmatpush2.bf16.msra.mxu0 0
    %4335 = vmatprep.subr.bf16.mxu0 0
    %4336 = vmatpush2.bf16.msra.mxu0 0
    %4337 = vmatprep.subr.bf16.mxu0 0
    %4338 = vmatpush2.bf16.msra.mxu0 0
    %4339 = vmatprep.mubr.bf16.mxu0 0
    %4340 = vmatmul.mubr.bf16.gmra.mxu0 %v4305
    %v4341 = vpop.f32.mrf.mxu0
    %v4342 = vadd.f32 %v4290, %v4341
    %v4343 = vpop.f32.mrf.mxu0
    %v4344 = vpop.f32.mrf.mxu0
    %v4345 = vpop.f32.mrf.mxu0
    %4346 = vdwg.mxu0
    %vm4347 = vcmask 74752
    %4348 = vst.msk [vmem:[#allocation5] sm:$0x3] %vm4347, %v4342
    // Predicated region
    $region54: #{model_forward.1} parent=1 // pred_check
      _
    $region55: #{model_forward.1} parent=1 // pred_check_branch
      %4350 = sbr.rel (0) target = $region57
    $region56: #{model_forward.1} parent=1 // pred_region
      %s4352 = ssub.s32 32, 32
      %4353 = vsyncadd [#allocation4], %s4352
      %s4355 = sshll.u32 [#allocation5], 4
      %s4356 = int_to_ptr.vmem [resolvable:$true] %s4355
      %4358 = dma.vmem_to_hbm [thread:$0]  %s4356, 32, %s12, [#allocation4]
    $region57: #{model_forward.1} parent=1 // pred_fallthru
      _
    // Predicated region
    $region58: #{model_forward.1} parent=1 // pred_check
      _
    $region59: #{model_forward.1} parent=1 // pred_check_branch
      %4360 = sbr.rel (0) target = $region61
    $region60: #{model_forward.1} parent=1 // pred_region
      %4361 = dma.done [#allocation4], 32
    $region61: #{model_forward.1} parent=1 // pred_fallthru
      _
    %4362 = vsyncpa [#allocation3], 1
    %4363 = vsyncpa [#allocation4], 1

</llo_original>
